<compile_context>
chip_gen: v7x
topology: tpu7x:2x2x1
jax: 0.10.0
libtpu: 0.0.40
codegen_flags: <defaults>
</compile_context>

<pallas_src>
import functools
import math

import jax
import jax.numpy as jnp
from jax.experimental import pallas as pl
from jax.experimental.pallas import tpu as pltpu

LOG2PI = math.log(2.0 * math.pi)


def _softplus(x):
    # numerically-stable softplus with a single exp + log1p (EUP-friendly)
    return jnp.maximum(x, 0.0) + jnp.log1p(jnp.exp(-jnp.abs(x)))


def _mm(a, w_ref):
    # MXU matmul: cast the activation to the weight dtype (bf16), accumulate f32.
    return jnp.dot(a.astype(w_ref.dtype), w_ref[...],
                   preferred_element_type=jnp.float32)


# ---------------------------------------------------------------------------
# Fused kernel: whole sequence in one invocation.
# ---------------------------------------------------------------------------
def _fused_kernel(delta_ref, obs_ref, u_ref, eps_x_ref, eps_xh_ref, mask_ref,
                  We1, be1, Wmu, bmu, Wls, bls,
                  A, B, C,
                  Wx1a, Wx1b, bx1, Wxm, bxm, Wxs, bxs,
                  Wd1, bd1, Wd2, bd2,
                  E_ref, Ell_ref, Ekl_ref,
                  x_scr, qmu_scr, qstd_scr,
                  *, T, N, N_pad):
    M_pad = (T - 1) * N_pad
    inv_N = 1.0 / N
    inv_T = 1.0 / T

    # ---- encoder q(x_t | I_t) for ALL timesteps, one batched matmul --------
    I_all = obs_ref[...]                                       # (T*N_pad, pix) f32
    h = jnp.maximum(_mm(I_all, We1) + be1[...], 0.0)
    q_mu = _mm(h, Wmu) + bmu[...]
    q_std = _softplus(_mm(h, Wls) + bls[...]) + 1e-6
    x_all = q_mu + q_std * eps_x_ref[...]                      # rsample

    x_scr[...] = x_all
    qmu_scr[...] = q_mu
    qstd_scr[...] = q_std

    # ---- p(xhat_t | x_{t-1}, u_{t-1}) for t = 1..T-1, batched --------------
    x_prev = x_scr[pl.ds(0, M_pad), :]                         # x_{t-1}
    u_prev = u_ref[pl.ds(0, M_pad), :]                         # u_{t-1}
    h2 = jnp.maximum(_mm(x_prev, Wx1a) + _mm(u_prev, Wx1b) + bx1[...], 0.0)
    xh_mu = _mm(h2, Wxm) + bxm[...]
    xh_std = _softplus(_mm(h2, Wxs) + bxs[...]) + 1e-6
    xhat = xh_mu + xh_std * eps_xh_ref[...]                    # rsample

    # ---- decoder log p(I_t | xhat_t), t = 1..T-1, batched ------------------
    hd = jnp.maximum(_mm(xhat, Wd1) + bd1[...], 0.0)
    I_dec = _mm(hd, Wd2) + bd2[...]                            # (M_pad, pix) f32
    I_tgt = obs_ref[pl.ds(N_pad, M_pad), :]                    # I_t, t >= 1
    mask_tgt = mask_ref[pl.ds(N_pad, M_pad), :]                # 1 for real rows
    ll = (-0.5 * ((I_tgt - I_dec) ** 2 + LOG2PI)) * mask_tgt
    # sum over pixels, mean over batch, summed over t  == sum(ll)/N
    E_ll_sum = jnp.sum(jnp.sum(ll, axis=-1, keepdims=True),
                       axis=0, keepdims=True) * inv_N          # (1,1)

    # ---- velocity recurrence + KL: tiny sequential elementwise part --------
    A_v, B_v, C_v = A[...], B[...], C[...]
    mask_n = mask_ref[pl.ds(0, N_pad), :]                      # (N_pad, 1)
    v = jnp.zeros((N_pad, x_scr.shape[1]), jnp.float32)        # v_0 = 0
    E_kl_sum = jnp.zeros((1, 1), jnp.float32)
    for t in range(1, T):                                      # T is static
        dt = delta_ref[t]                                      # SMEM scalar
        x_tm1 = x_scr[pl.ds((t - 1) * N_pad, N_pad), :]
        u_tm1 = u_ref[pl.ds((t - 1) * N_pad, N_pad), :]
        q_mu_t = qmu_scr[pl.ds(t * N_pad, N_pad), :]
        q_std_t = qstd_scr[pl.ds(t * N_pad, N_pad), :]
        v = v + dt * (A_v * x_tm1 + B_v * v + C_v * u_tm1)
        p_mu = x_tm1 + dt * v                                  # prior N(p_mu, 1)
        kl = (-jnp.log(q_std_t)
              + 0.5 * (q_std_t * q_std_t + (q_mu_t - p_mu) ** 2) - 0.5) * mask_n
        E_kl_sum = E_kl_sum + jnp.sum(
            jnp.sum(kl, axis=-1, keepdims=True), axis=0, keepdims=True) * inv_N

    E_ll_out = E_ll_sum * inv_T
    E_kl_out = E_kl_sum * inv_T
    Ell_ref[...] = E_ll_out
    Ekl_ref[...] = E_kl_out
    E_ref[...] = E_ll_out - E_kl_out


# ---------------------------------------------------------------------------
# Wrapper
# ---------------------------------------------------------------------------
_VMEM = pl.BlockSpec(memory_space=pltpu.MemorySpace.VMEM)
_SMEM = pl.BlockSpec(memory_space=pltpu.MemorySpace.SMEM)

_WEIGHT_ORDER = ("We1", "be1", "Wmu", "bmu", "Wls", "bls",
                 "A", "B", "C",
                 "Wx1a", "Wx1b", "bx1", "Wxm", "bxm", "Wxs", "bxs",
                 "Wd1", "bd1", "Wd2", "bd2")


def newtonian_vae_derivation_forward(action, observation, delta, params, noise_key):
    """action: (T,N,D), observation: (T,N,C,H,W) NCHW, delta: (T,).
    Returns (E, E_ll, E_kl) scalars (sum over t, divided by T)."""
    T, N, D = action.shape
    dim_xhat = params["Wxm"].shape[1]
    pix = params["We1"].shape[0]
    N_pad = ((N + 7) // 8) * 8                    # sublane-aligned batch

    obs = observation.reshape(T, N, pix).astype(jnp.float32)
    obs_p = jnp.pad(obs, ((0, 0), (0, N_pad - N), (0, 0))).reshape(T * N_pad, pix)
    u = action.astype(jnp.float32)
    u_p = jnp.pad(u, ((0, 0), (0, N_pad - N), (0, 0))).reshape(T * N_pad, D)

    k1, k2 = jax.random.split(noise_key)
    eps_x = jax.random.normal(k1, (T * N_pad, D), dtype=jnp.float32)
    eps_xh = jax.random.normal(k2, ((T - 1) * N_pad, dim_xhat), dtype=jnp.float32)

    # 1.0 on real batch rows, 0.0 on padding rows
    mask = (jnp.arange(T * N_pad) % N_pad < N).astype(jnp.float32).reshape(T * N_pad, 1)
    delta_f = delta.astype(jnp.float32)

    weights = [params[k] for k in _WEIGHT_ORDER]
    kern = functools.partial(_fused_kernel, T=T, N=N, N_pad=N_pad)

    E, E_ll, E_kl = pl.pallas_call(
        kern,
        out_shape=(jax.ShapeDtypeStruct((1, 1), jnp.float32),) * 3,
        in_specs=[_SMEM] + [_VMEM] * (5 + len(weights)),
        out_specs=(_VMEM,) * 3,
        scratch_shapes=[pltpu.VMEM((T * N_pad, D), jnp.float32) for _ in range(3)],
    )(delta_f, obs_p, u_p, eps_x, eps_xh, mask, *weights)

    return E[0, 0], E_ll[0, 0], E_kl[0, 0]


# ---------------------------------------------------------------------------
# Deterministic parameter initialization (synthetic weights, no checkpoint)
# ---------------------------------------------------------------------------
def init_params(key, dim_x, dim_xhat, pix, hidden):
    ks = jax.random.split(key, 12)
    s = 0.05
    f32, bf16 = jnp.float32, jnp.bfloat16

    def w(k, shape):  # matmul weights in bf16 for native-rate MXU
        return (jax.random.normal(k, shape, f32) * s).astype(bf16)

    return {
        # encoder q(x|I)
        "We1": w(ks[0], (pix, hidden)), "be1": jnp.zeros((1, hidden), f32),
        "Wmu": w(ks[1], (hidden, dim_x)), "bmu": jnp.zeros((1, dim_x), f32),
        "Wls": w(ks[2], (hidden, dim_x)), "bls": jnp.zeros((1, dim_x), f32),
        # diagonal dynamics A, B, C (f32 elementwise path)
        "A": jax.random.normal(ks[3], (1, dim_x), f32) * s,
        "B": -jnp.abs(jax.random.normal(ks[4], (1, dim_x), f32)) * s,
        "C": jax.random.normal(ks[5], (1, dim_x), f32) * s + 1.0,
        # p(xhat | x, u)
        "Wx1a": w(ks[6], (dim_x, hidden)), "Wx1b": w(ks[7], (dim_x, hidden)),
        "bx1": jnp.zeros((1, hidden), f32),
        "Wxm": w(ks[8], (hidden, dim_xhat)), "bxm": jnp.zeros((1, dim_xhat), f32),
        "Wxs": w(ks[9], (hidden, dim_xhat)), "bxs": jnp.zeros((1, dim_xhat), f32),
        # decoder p(I | xhat)
        "Wd1": w(ks[10], (dim_xhat, hidden)), "bd1": jnp.zeros((1, hidden), f32),
        "Wd2": w(ks[11], (hidden, pix)), "bd2": jnp.zeros((1, pix), f32),
    }


if __name__ == "__main__":
    # small shapes consistent with forward: action (T,N,D), observation (T,N,C,H,W)
    T, N, D = 8, 2, 4          # dim_x == dim(u) == D
    C, H, W = 3, 16, 16
    dim_xhat = 4
    hidden = 32
    pix = C * H * W

    key = jax.random.PRNGKey(0)
    k_act, k_obs, k_par, k_noise = jax.random.split(key, 4)

    action = jax.random.normal(k_act, (T, N, D), dtype=jnp.float32)
    observation = jax.random.normal(k_obs, (T, N, C, H, W), dtype=jnp.float32)
    delta = jnp.full((T,), 0.1, dtype=jnp.float32)
    params = init_params(k_par, D, dim_xhat, pix, hidden)

    fwd = jax.jit(newtonian_vae_derivation_forward)
    E, E_ll, E_kl = fwd(action, observation, delta, params, k_noise)
    jax.block_until_ready((E, E_ll, E_kl))
    assert E.shape == () and E_ll.shape == () and E_kl.shape == ()
    assert bool(jnp.isfinite(E)) and bool(jnp.isfinite(E_ll)) and bool(jnp.isfinite(E_kl))
    print("KERNEL_OK")
</pallas_src>

<mosaic_0001>
module attributes {stable_mosaic.version = 11 : i64} {
  func.func @_fused_kernel(%arg0: memref<8xf32, #tpu.memory_space<smem>>, %arg1: memref<64x768xf32, #tpu.memory_space<vmem>>, %arg2: memref<64x4xf32, #tpu.memory_space<vmem>>, %arg3: memref<64x4xf32, #tpu.memory_space<vmem>>, %arg4: memref<56x4xf32, #tpu.memory_space<vmem>>, %arg5: memref<64x1xf32, #tpu.memory_space<vmem>>, %arg6: memref<768x32xbf16, #tpu.memory_space<vmem>>, %arg7: memref<1x32xf32, #tpu.memory_space<vmem>>, %arg8: memref<32x4xbf16, #tpu.memory_space<vmem>>, %arg9: memref<1x4xf32, #tpu.memory_space<vmem>>, %arg10: memref<32x4xbf16, #tpu.memory_space<vmem>>, %arg11: memref<1x4xf32, #tpu.memory_space<vmem>>, %arg12: memref<1x4xf32, #tpu.memory_space<vmem>>, %arg13: memref<1x4xf32, #tpu.memory_space<vmem>>, %arg14: memref<1x4xf32, #tpu.memory_space<vmem>>, %arg15: memref<4x32xbf16, #tpu.memory_space<vmem>>, %arg16: memref<4x32xbf16, #tpu.memory_space<vmem>>, %arg17: memref<1x32xf32, #tpu.memory_space<vmem>>, %arg18: memref<32x4xbf16, #tpu.memory_space<vmem>>, %arg19: memref<1x4xf32, #tpu.memory_space<vmem>>, %arg20: memref<32x4xbf16, #tpu.memory_space<vmem>>, %arg21: memref<1x4xf32, #tpu.memory_space<vmem>>, %arg22: memref<4x32xbf16, #tpu.memory_space<vmem>>, %arg23: memref<1x32xf32, #tpu.memory_space<vmem>>, %arg24: memref<32x768xbf16, #tpu.memory_space<vmem>>, %arg25: memref<1x768xf32, #tpu.memory_space<vmem>>, %arg26: memref<1x1xf32, #tpu.memory_space<vmem>>, %arg27: memref<1x1xf32, #tpu.memory_space<vmem>>, %arg28: memref<1x1xf32, #tpu.memory_space<vmem>>, %arg29: memref<64x4xf32, #tpu.memory_space<vmem>>, %arg30: memref<64x4xf32, #tpu.memory_space<vmem>>, %arg31: memref<64x4xf32, #tpu.memory_space<vmem>>) attributes {dimension_semantics = [], scalar_prefetch = 0 : i64, scratch_operands = 3 : i64, tpu.core_type = #tpu.core_type<tc>} {
    %c0 = arith.constant 0 : index
    %c0_0 = arith.constant 0 : index
    %0 = vector.load %arg1[%c0, %c0_0] : memref<64x768xf32, #tpu.memory_space<vmem>>, vector<64x768xf32>
    %1 = arith.truncf %0 : vector<64x768xf32> to vector<64x768xbf16>
    %c0_1 = arith.constant 0 : index
    %c0_2 = arith.constant 0 : index
    %2 = vector.load %arg6[%c0_1, %c0_2] : memref<768x32xbf16, #tpu.memory_space<vmem>>, vector<768x32xbf16>
    %cst = arith.constant dense<0.000000e+00> : vector<64x32xf32>
    %3 = tpu.matmul %1, %2, %cst {dimension_numbers = #tpu.dot_dimension_numbers<[1], [0], [0], [1], [0, 0, 1, 1], [], []>} : vector<64x768xbf16>, vector<768x32xbf16>, vector<64x32xf32> -> vector<64x32xf32>
    %c0_3 = arith.constant 0 : index
    %c0_4 = arith.constant 0 : index
    %4 = vector.load %arg7[%c0_3, %c0_4] : memref<1x32xf32, #tpu.memory_space<vmem>>, vector<1x32xf32>
    %5 = vector.broadcast %4 : vector<1x32xf32> to vector<64x32xf32>
    %6 = arith.addf %3, %5 : vector<64x32xf32>
    %cst_5 = arith.constant 0.000000e+00 : f32
    %7 = vector.broadcast %cst_5 : f32 to vector<64x32xf32>
    %8 = arith.maximumf %6, %7 : vector<64x32xf32>
    %9 = arith.truncf %8 : vector<64x32xf32> to vector<64x32xbf16>
    %c0_6 = arith.constant 0 : index
    %c0_7 = arith.constant 0 : index
    %10 = vector.load %arg8[%c0_6, %c0_7] : memref<32x4xbf16, #tpu.memory_space<vmem>>, vector<32x4xbf16>
    %cst_8 = arith.constant dense<0.000000e+00> : vector<64x4xf32>
    %11 = tpu.matmul %9, %10, %cst_8 {dimension_numbers = #tpu.dot_dimension_numbers<[1], [0], [0], [1], [0, 0, 1, 1], [], []>} : vector<64x32xbf16>, vector<32x4xbf16>, vector<64x4xf32> -> vector<64x4xf32>
    %c0_9 = arith.constant 0 : index
    %c0_10 = arith.constant 0 : index
    %12 = vector.load %arg9[%c0_9, %c0_10] : memref<1x4xf32, #tpu.memory_space<vmem>>, vector<1x4xf32>
    %13 = vector.broadcast %12 : vector<1x4xf32> to vector<64x4xf32>
    %14 = arith.addf %11, %13 : vector<64x4xf32>
    %15 = arith.truncf %8 : vector<64x32xf32> to vector<64x32xbf16>
    %c0_11 = arith.constant 0 : index
    %c0_12 = arith.constant 0 : index
    %16 = vector.load %arg10[%c0_11, %c0_12] : memref<32x4xbf16, #tpu.memory_space<vmem>>, vector<32x4xbf16>
    %cst_13 = arith.constant dense<0.000000e+00> : vector<64x4xf32>
    %17 = tpu.matmul %15, %16, %cst_13 {dimension_numbers = #tpu.dot_dimension_numbers<[1], [0], [0], [1], [0, 0, 1, 1], [], []>} : vector<64x32xbf16>, vector<32x4xbf16>, vector<64x4xf32> -> vector<64x4xf32>
    %c0_14 = arith.constant 0 : index
    %c0_15 = arith.constant 0 : index
    %18 = vector.load %arg11[%c0_14, %c0_15] : memref<1x4xf32, #tpu.memory_space<vmem>>, vector<1x4xf32>
    %19 = vector.broadcast %18 : vector<1x4xf32> to vector<64x4xf32>
    %20 = arith.addf %17, %19 : vector<64x4xf32>
    %cst_16 = arith.constant 0.000000e+00 : f32
    %21 = vector.broadcast %cst_16 : f32 to vector<64x4xf32>
    %22 = arith.maximumf %20, %21 : vector<64x4xf32>
    %23 = math.absf %20 : vector<64x4xf32>
    %cst_17 = arith.constant 0.000000e+00 : f32
    %24 = vector.broadcast %cst_17 : f32 to vector<64x4xf32>
    %25 = arith.subf %24, %23 : vector<64x4xf32>
    %26 = math.exp %25 : vector<64x4xf32>
    %27 = math.log1p %26 : vector<64x4xf32>
    %28 = arith.addf %22, %27 : vector<64x4xf32>
    %cst_18 = arith.constant 9.99999997E-7 : f32
    %29 = vector.broadcast %cst_18 : f32 to vector<64x4xf32>
    %30 = arith.addf %28, %29 : vector<64x4xf32>
    %c0_19 = arith.constant 0 : index
    %c0_20 = arith.constant 0 : index
    %31 = vector.load %arg3[%c0_19, %c0_20] : memref<64x4xf32, #tpu.memory_space<vmem>>, vector<64x4xf32>
    %32 = arith.mulf %30, %31 : vector<64x4xf32>
    %33 = arith.addf %14, %32 : vector<64x4xf32>
    %c0_21 = arith.constant 0 : index
    %c0_22 = arith.constant 0 : index
    %34 = vector.load %arg29[%c0_21, %c0_22] : memref<64x4xf32, #tpu.memory_space<vmem>>, vector<64x4xf32>
    tpu.vector_store %arg29[%c0_21, %c0_22], %33 {strides = array<i32>} : memref<64x4xf32, #tpu.memory_space<vmem>>, vector<64x4xf32>,
    %c0_23 = arith.constant 0 : index
    %c0_24 = arith.constant 0 : index
    %35 = vector.load %arg30[%c0_23, %c0_24] : memref<64x4xf32, #tpu.memory_space<vmem>>, vector<64x4xf32>
    tpu.vector_store %arg30[%c0_23, %c0_24], %14 {strides = array<i32>} : memref<64x4xf32, #tpu.memory_space<vmem>>, vector<64x4xf32>,
    %c0_25 = arith.constant 0 : index
    %c0_26 = arith.constant 0 : index
    %36 = vector.load %arg31[%c0_25, %c0_26] : memref<64x4xf32, #tpu.memory_space<vmem>>, vector<64x4xf32>
    tpu.vector_store %arg31[%c0_25, %c0_26], %30 {strides = array<i32>} : memref<64x4xf32, #tpu.memory_space<vmem>>, vector<64x4xf32>,
    %c0_27 = arith.constant 0 : index
    %c0_28 = arith.constant 0 : index
    %37 = vector.load %arg29[%c0_27, %c0_28] : memref<64x4xf32, #tpu.memory_space<vmem>>, vector<56x4xf32>
    %c0_29 = arith.constant 0 : index
    %c0_30 = arith.constant 0 : index
    %38 = vector.load %arg2[%c0_29, %c0_30] : memref<64x4xf32, #tpu.memory_space<vmem>>, vector<56x4xf32>
    %39 = arith.truncf %37 : vector<56x4xf32> to vector<56x4xbf16>
    %c0_31 = arith.constant 0 : index
    %c0_32 = arith.constant 0 : index
    %40 = vector.load %arg15[%c0_31, %c0_32] : memref<4x32xbf16, #tpu.memory_space<vmem>>, vector<4x32xbf16>
    %cst_33 = arith.constant dense<0.000000e+00> : vector<56x32xf32>
    %41 = tpu.matmul %39, %40, %cst_33 {dimension_numbers = #tpu.dot_dimension_numbers<[1], [0], [0], [1], [0, 0, 1, 1], [], []>} : vector<56x4xbf16>, vector<4x32xbf16>, vector<56x32xf32> -> vector<56x32xf32>
    %42 = arith.truncf %38 : vector<56x4xf32> to vector<56x4xbf16>
    %c0_34 = arith.constant 0 : index
    %c0_35 = arith.constant 0 : index
    %43 = vector.load %arg16[%c0_34, %c0_35] : memref<4x32xbf16, #tpu.memory_space<vmem>>, vector<4x32xbf16>
    %cst_36 = arith.constant dense<0.000000e+00> : vector<56x32xf32>
    %44 = tpu.matmul %42, %43, %cst_36 {dimension_numbers = #tpu.dot_dimension_numbers<[1], [0], [0], [1], [0, 0, 1, 1], [], []>} : vector<56x4xbf16>, vector<4x32xbf16>, vector<56x32xf32> -> vector<56x32xf32>
    %45 = arith.addf %41, %44 : vector<56x32xf32>
    %c0_37 = arith.constant 0 : index
    %c0_38 = arith.constant 0 : index
    %46 = vector.load %arg17[%c0_37, %c0_38] : memref<1x32xf32, #tpu.memory_space<vmem>>, vector<1x32xf32>
    %47 = vector.broadcast %46 : vector<1x32xf32> to vector<56x32xf32>
    %48 = arith.addf %45, %47 : vector<56x32xf32>
    %cst_39 = arith.constant 0.000000e+00 : f32
    %49 = vector.broadcast %cst_39 : f32 to vector<56x32xf32>
    %50 = arith.maximumf %48, %49 : vector<56x32xf32>
    %51 = arith.truncf %50 : vector<56x32xf32> to vector<56x32xbf16>
    %c0_40 = arith.constant 0 : index
    %c0_41 = arith.constant 0 : index
    %52 = vector.load %arg18[%c0_40, %c0_41] : memref<32x4xbf16, #tpu.memory_space<vmem>>, vector<32x4xbf16>
    %cst_42 = arith.constant dense<0.000000e+00> : vector<56x4xf32>
    %53 = tpu.matmul %51, %52, %cst_42 {dimension_numbers = #tpu.dot_dimension_numbers<[1], [0], [0], [1], [0, 0, 1, 1], [], []>} : vector<56x32xbf16>, vector<32x4xbf16>, vector<56x4xf32> -> vector<56x4xf32>
    %c0_43 = arith.constant 0 : index
    %c0_44 = arith.constant 0 : index
    %54 = vector.load %arg19[%c0_43, %c0_44] : memref<1x4xf32, #tpu.memory_space<vmem>>, vector<1x4xf32>
    %55 = vector.broadcast %54 : vector<1x4xf32> to vector<56x4xf32>
    %56 = arith.addf %53, %55 : vector<56x4xf32>
    %57 = arith.truncf %50 : vector<56x32xf32> to vector<56x32xbf16>
    %c0_45 = arith.constant 0 : index
    %c0_46 = arith.constant 0 : index
    %58 = vector.load %arg20[%c0_45, %c0_46] : memref<32x4xbf16, #tpu.memory_space<vmem>>, vector<32x4xbf16>
    %cst_47 = arith.constant dense<0.000000e+00> : vector<56x4xf32>
    %59 = tpu.matmul %57, %58, %cst_47 {dimension_numbers = #tpu.dot_dimension_numbers<[1], [0], [0], [1], [0, 0, 1, 1], [], []>} : vector<56x32xbf16>, vector<32x4xbf16>, vector<56x4xf32> -> vector<56x4xf32>
    %c0_48 = arith.constant 0 : index
    %c0_49 = arith.constant 0 : index
    %60 = vector.load %arg21[%c0_48, %c0_49] : memref<1x4xf32, #tpu.memory_space<vmem>>, vector<1x4xf32>
    %61 = vector.broadcast %60 : vector<1x4xf32> to vector<56x4xf32>
    %62 = arith.addf %59, %61 : vector<56x4xf32>
    %cst_50 = arith.constant 0.000000e+00 : f32
    %63 = vector.broadcast %cst_50 : f32 to vector<56x4xf32>
    %64 = arith.maximumf %62, %63 : vector<56x4xf32>
    %65 = math.absf %62 : vector<56x4xf32>
    %cst_51 = arith.constant 0.000000e+00 : f32
    %66 = vector.broadcast %cst_51 : f32 to vector<56x4xf32>
    %67 = arith.subf %66, %65 : vector<56x4xf32>
    %68 = math.exp %67 : vector<56x4xf32>
    %69 = math.log1p %68 : vector<56x4xf32>
    %70 = arith.addf %64, %69 : vector<56x4xf32>
    %cst_52 = arith.constant 9.99999997E-7 : f32
    %71 = vector.broadcast %cst_52 : f32 to vector<56x4xf32>
    %72 = arith.addf %70, %71 : vector<56x4xf32>
    %c0_53 = arith.constant 0 : index
    %c0_54 = arith.constant 0 : index
    %73 = vector.load %arg4[%c0_53, %c0_54] : memref<56x4xf32, #tpu.memory_space<vmem>>, vector<56x4xf32>
    %74 = arith.mulf %72, %73 : vector<56x4xf32>
    %75 = arith.addf %56, %74 : vector<56x4xf32>
    %76 = arith.truncf %75 : vector<56x4xf32> to vector<56x4xbf16>
    %c0_55 = arith.constant 0 : index
    %c0_56 = arith.constant 0 : index
    %77 = vector.load %arg22[%c0_55, %c0_56] : memref<4x32xbf16, #tpu.memory_space<vmem>>, vector<4x32xbf16>
    %cst_57 = arith.constant dense<0.000000e+00> : vector<56x32xf32>
    %78 = tpu.matmul %76, %77, %cst_57 {dimension_numbers = #tpu.dot_dimension_numbers<[1], [0], [0], [1], [0, 0, 1, 1], [], []>} : vector<56x4xbf16>, vector<4x32xbf16>, vector<56x32xf32> -> vector<56x32xf32>
    %c0_58 = arith.constant 0 : index
    %c0_59 = arith.constant 0 : index
    %79 = vector.load %arg23[%c0_58, %c0_59] : memref<1x32xf32, #tpu.memory_space<vmem>>, vector<1x32xf32>
    %80 = vector.broadcast %79 : vector<1x32xf32> to vector<56x32xf32>
    %81 = arith.addf %78, %80 : vector<56x32xf32>
    %cst_60 = arith.constant 0.000000e+00 : f32
    %82 = vector.broadcast %cst_60 : f32 to vector<56x32xf32>
    %83 = arith.maximumf %81, %82 : vector<56x32xf32>
    %84 = arith.truncf %83 : vector<56x32xf32> to vector<56x32xbf16>
    %c0_61 = arith.constant 0 : index
    %c0_62 = arith.constant 0 : index
    %85 = vector.load %arg24[%c0_61, %c0_62] : memref<32x768xbf16, #tpu.memory_space<vmem>>, vector<32x768xbf16>
    %cst_63 = arith.constant dense<0.000000e+00> : vector<56x768xf32>
    %86 = tpu.matmul %84, %85, %cst_63 {dimension_numbers = #tpu.dot_dimension_numbers<[1], [0], [0], [1], [0, 0, 1, 1], [], []>} : vector<56x32xbf16>, vector<32x768xbf16>, vector<56x768xf32> -> vector<56x768xf32>
    %c0_64 = arith.constant 0 : index
    %c0_65 = arith.constant 0 : index
    %87 = vector.load %arg25[%c0_64, %c0_65] : memref<1x768xf32, #tpu.memory_space<vmem>>, vector<1x768xf32>
    %88 = vector.broadcast %87 : vector<1x768xf32> to vector<56x768xf32>
    %89 = arith.addf %86, %88 : vector<56x768xf32>
    %c8 = arith.constant 8 : index
    %c0_66 = arith.constant 0 : index
    %90 = vector.load %arg1[%c8, %c0_66] : memref<64x768xf32, #tpu.memory_space<vmem>>, vector<56x768xf32>
    %c8_67 = arith.constant 8 : index
    %c0_68 = arith.constant 0 : index
    %91 = vector.load %arg5[%c8_67, %c0_68] : memref<64x1xf32, #tpu.memory_space<vmem>>, vector<56x1xf32>
    %92 = arith.subf %90, %89 : vector<56x768xf32>
    %93 = arith.mulf %92, %92 : vector<56x768xf32>
    %cst_69 = arith.constant 1.83787704 : f32
    %94 = vector.broadcast %cst_69 : f32 to vector<56x768xf32>
    %95 = arith.addf %93, %94 : vector<56x768xf32>
    %cst_70 = arith.constant -5.000000e-01 : f32
    %96 = vector.broadcast %cst_70 : f32 to vector<56x768xf32>
    %97 = arith.mulf %96, %95 : vector<56x768xf32>
    %98 = vector.broadcast %91 : vector<56x1xf32> to vector<56x768xf32>
    %99 = arith.mulf %97, %98 : vector<56x768xf32>
    %cst_71 = arith.constant dense<0.000000e+00> : vector<56xf32>
    %100 = vector.multi_reduction <add>, %99, %cst_71 [1] : vector<56x768xf32> to vector<56xf32>
    %101 = vector.shape_cast %100 : vector<56xf32> to vector<56x1xf32>
    %cst_72 = arith.constant dense<0.000000e+00> : vector<1xf32>
    %102 = vector.multi_reduction <add>, %101, %cst_72 [0] : vector<56x1xf32> to vector<1xf32>
    %103 = vector.shape_cast %102 : vector<1xf32> to vector<1x1xf32>
    %cst_73 = arith.constant 5.000000e-01 : f32
    %104 = vector.broadcast %cst_73 : f32 to vector<1x1xf32>
    %105 = arith.mulf %103, %104 : vector<1x1xf32>
    %c0_74 = arith.constant 0 : index
    %c0_75 = arith.constant 0 : index
    %106 = vector.load %arg12[%c0_74, %c0_75] : memref<1x4xf32, #tpu.memory_space<vmem>>, vector<1x4xf32>
    %c0_76 = arith.constant 0 : index
    %c0_77 = arith.constant 0 : index
    %107 = vector.load %arg13[%c0_76, %c0_77] : memref<1x4xf32, #tpu.memory_space<vmem>>, vector<1x4xf32>
    %c0_78 = arith.constant 0 : index
    %c0_79 = arith.constant 0 : index
    %108 = vector.load %arg14[%c0_78, %c0_79] : memref<1x4xf32, #tpu.memory_space<vmem>>, vector<1x4xf32>
    %c0_80 = arith.constant 0 : index
    %c0_81 = arith.constant 0 : index
    %109 = vector.load %arg5[%c0_80, %c0_81] : memref<64x1xf32, #tpu.memory_space<vmem>>, vector<8x1xf32>
    %cst_82 = arith.constant 0.000000e+00 : f32
    %110 = vector.broadcast %cst_82 : f32 to vector<8x4xf32>
    %cst_83 = arith.constant 0.000000e+00 : f32
    %111 = vector.broadcast %cst_83 : f32 to vector<1x1xf32>
    %c1 = arith.constant 1 : index
    %112 = memref.load %arg0[%c1] : memref<8xf32, #tpu.memory_space<smem>>
    %c0_84 = arith.constant 0 : index
    %c0_85 = arith.constant 0 : index
    %113 = vector.load %arg29[%c0_84, %c0_85] : memref<64x4xf32, #tpu.memory_space<vmem>>, vector<8x4xf32>
    %c0_86 = arith.constant 0 : index
    %c0_87 = arith.constant 0 : index
    %114 = vector.load %arg2[%c0_86, %c0_87] : memref<64x4xf32, #tpu.memory_space<vmem>>, vector<8x4xf32>
    %c8_88 = arith.constant 8 : index
    %c0_89 = arith.constant 0 : index
    %115 = vector.load %arg30[%c8_88, %c0_89] : memref<64x4xf32, #tpu.memory_space<vmem>>, vector<8x4xf32>
    %c8_90 = arith.constant 8 : index
    %c0_91 = arith.constant 0 : index
    %116 = vector.load %arg31[%c8_90, %c0_91] : memref<64x4xf32, #tpu.memory_space<vmem>>, vector<8x4xf32>
    %117 = vector.broadcast %106 : vector<1x4xf32> to vector<8x4xf32>
    %118 = arith.mulf %117, %113 : vector<8x4xf32>
    %119 = vector.broadcast %107 : vector<1x4xf32> to vector<8x4xf32>
    %120 = arith.mulf %119, %110 : vector<8x4xf32>
    %121 = arith.addf %118, %120 : vector<8x4xf32>
    %122 = vector.broadcast %108 : vector<1x4xf32> to vector<8x4xf32>
    %123 = arith.mulf %122, %114 : vector<8x4xf32>
    %124 = arith.addf %121, %123 : vector<8x4xf32>
    %125 = vector.broadcast %112 : f32 to vector<8x4xf32>
    %126 = arith.mulf %125, %124 : vector<8x4xf32>
    %127 = arith.addf %110, %126 : vector<8x4xf32>
    %128 = vector.broadcast %112 : f32 to vector<8x4xf32>
    %129 = arith.mulf %128, %127 : vector<8x4xf32>
    %130 = arith.addf %113, %129 : vector<8x4xf32>
    %131 = math.log %116 : vector<8x4xf32>
    %cst_92 = arith.constant 0.000000e+00 : f32
    %132 = vector.broadcast %cst_92 : f32 to vector<8x4xf32>
    %133 = arith.subf %132, %131 : vector<8x4xf32>
    %134 = arith.mulf %116, %116 : vector<8x4xf32>
    %135 = arith.subf %115, %130 : vector<8x4xf32>
    %136 = arith.mulf %135, %135 : vector<8x4xf32>
    %137 = arith.addf %134, %136 : vector<8x4xf32>
    %cst_93 = arith.constant 5.000000e-01 : f32
    %138 = vector.broadcast %cst_93 : f32 to vector<8x4xf32>
    %139 = arith.mulf %138, %137 : vector<8x4xf32>
    %140 = arith.addf %133, %139 : vector<8x4xf32>
    %cst_94 = arith.constant 5.000000e-01 : f32
    %141 = vector.broadcast %cst_94 : f32 to vector<8x4xf32>
    %142 = arith.subf %140, %141 : vector<8x4xf32>
    %143 = vector.broadcast %109 : vector<8x1xf32> to vector<8x4xf32>
    %144 = arith.mulf %142, %143 : vector<8x4xf32>
    %cst_95 = arith.constant dense<0.000000e+00> : vector<8xf32>
    %145 = vector.multi_reduction <add>, %144, %cst_95 [1] : vector<8x4xf32> to vector<8xf32>
    %146 = vector.shape_cast %145 : vector<8xf32> to vector<8x1xf32>
    %cst_96 = arith.constant dense<0.000000e+00> : vector<1xf32>
    %147 = vector.multi_reduction <add>, %146, %cst_96 [0] : vector<8x1xf32> to vector<1xf32>
    %148 = vector.shape_cast %147 : vector<1xf32> to vector<1x1xf32>
    %cst_97 = arith.constant 5.000000e-01 : f32
    %149 = vector.broadcast %cst_97 : f32 to vector<1x1xf32>
    %150 = arith.mulf %148, %149 : vector<1x1xf32>
    %151 = arith.addf %111, %150 : vector<1x1xf32>
    %c2 = arith.constant 2 : index
    %152 = memref.load %arg0[%c2] : memref<8xf32, #tpu.memory_space<smem>>
    %c8_98 = arith.constant 8 : index
    %c0_99 = arith.constant 0 : index
    %153 = vector.load %arg29[%c8_98, %c0_99] : memref<64x4xf32, #tpu.memory_space<vmem>>, vector<8x4xf32>
    %c8_100 = arith.constant 8 : index
    %c0_101 = arith.constant 0 : index
    %154 = vector.load %arg2[%c8_100, %c0_101] : memref<64x4xf32, #tpu.memory_space<vmem>>, vector<8x4xf32>
    %c16 = arith.constant 16 : index
    %c0_102 = arith.constant 0 : index
    %155 = vector.load %arg30[%c16, %c0_102] : memref<64x4xf32, #tpu.memory_space<vmem>>, vector<8x4xf32>
    %c16_103 = arith.constant 16 : index
    %c0_104 = arith.constant 0 : index
    %156 = vector.load %arg31[%c16_103, %c0_104] : memref<64x4xf32, #tpu.memory_space<vmem>>, vector<8x4xf32>
    %157 = vector.broadcast %106 : vector<1x4xf32> to vector<8x4xf32>
    %158 = arith.mulf %157, %153 : vector<8x4xf32>
    %159 = vector.broadcast %107 : vector<1x4xf32> to vector<8x4xf32>
    %160 = arith.mulf %159, %127 : vector<8x4xf32>
    %161 = arith.addf %158, %160 : vector<8x4xf32>
    %162 = vector.broadcast %108 : vector<1x4xf32> to vector<8x4xf32>
    %163 = arith.mulf %162, %154 : vector<8x4xf32>
    %164 = arith.addf %161, %163 : vector<8x4xf32>
    %165 = vector.broadcast %152 : f32 to vector<8x4xf32>
    %166 = arith.mulf %165, %164 : vector<8x4xf32>
    %167 = arith.addf %127, %166 : vector<8x4xf32>
    %168 = vector.broadcast %152 : f32 to vector<8x4xf32>
    %169 = arith.mulf %168, %167 : vector<8x4xf32>
    %170 = arith.addf %153, %169 : vector<8x4xf32>
    %171 = math.log %156 : vector<8x4xf32>
    %cst_105 = arith.constant 0.000000e+00 : f32
    %172 = vector.broadcast %cst_105 : f32 to vector<8x4xf32>
    %173 = arith.subf %172, %171 : vector<8x4xf32>
    %174 = arith.mulf %156, %156 : vector<8x4xf32>
    %175 = arith.subf %155, %170 : vector<8x4xf32>
    %176 = arith.mulf %175, %175 : vector<8x4xf32>
    %177 = arith.addf %174, %176 : vector<8x4xf32>
    %cst_106 = arith.constant 5.000000e-01 : f32
    %178 = vector.broadcast %cst_106 : f32 to vector<8x4xf32>
    %179 = arith.mulf %178, %177 : vector<8x4xf32>
    %180 = arith.addf %173, %179 : vector<8x4xf32>
    %cst_107 = arith.constant 5.000000e-01 : f32
    %181 = vector.broadcast %cst_107 : f32 to vector<8x4xf32>
    %182 = arith.subf %180, %181 : vector<8x4xf32>
    %183 = vector.broadcast %109 : vector<8x1xf32> to vector<8x4xf32>
    %184 = arith.mulf %182, %183 : vector<8x4xf32>
    %cst_108 = arith.constant dense<0.000000e+00> : vector<8xf32>
    %185 = vector.multi_reduction <add>, %184, %cst_108 [1] : vector<8x4xf32> to vector<8xf32>
    %186 = vector.shape_cast %185 : vector<8xf32> to vector<8x1xf32>
    %cst_109 = arith.constant dense<0.000000e+00> : vector<1xf32>
    %187 = vector.multi_reduction <add>, %186, %cst_109 [0] : vector<8x1xf32> to vector<1xf32>
    %188 = vector.shape_cast %187 : vector<1xf32> to vector<1x1xf32>
    %cst_110 = arith.constant 5.000000e-01 : f32
    %189 = vector.broadcast %cst_110 : f32 to vector<1x1xf32>
    %190 = arith.mulf %188, %189 : vector<1x1xf32>
    %191 = arith.addf %151, %190 : vector<1x1xf32>
    %c3 = arith.constant 3 : index
    %192 = memref.load %arg0[%c3] : memref<8xf32, #tpu.memory_space<smem>>
    %c16_111 = arith.constant 16 : index
    %c0_112 = arith.constant 0 : index
    %193 = vector.load %arg29[%c16_111, %c0_112] : memref<64x4xf32, #tpu.memory_space<vmem>>, vector<8x4xf32>
    %c16_113 = arith.constant 16 : index
    %c0_114 = arith.constant 0 : index
    %194 = vector.load %arg2[%c16_113, %c0_114] : memref<64x4xf32, #tpu.memory_space<vmem>>, vector<8x4xf32>
    %c24 = arith.constant 24 : index
    %c0_115 = arith.constant 0 : index
    %195 = vector.load %arg30[%c24, %c0_115] : memref<64x4xf32, #tpu.memory_space<vmem>>, vector<8x4xf32>
    %c24_116 = arith.constant 24 : index
    %c0_117 = arith.constant 0 : index
    %196 = vector.load %arg31[%c24_116, %c0_117] : memref<64x4xf32, #tpu.memory_space<vmem>>, vector<8x4xf32>
    %197 = vector.broadcast %106 : vector<1x4xf32> to vector<8x4xf32>
    %198 = arith.mulf %197, %193 : vector<8x4xf32>
    %199 = vector.broadcast %107 : vector<1x4xf32> to vector<8x4xf32>
    %200 = arith.mulf %199, %167 : vector<8x4xf32>
    %201 = arith.addf %198, %200 : vector<8x4xf32>
    %202 = vector.broadcast %108 : vector<1x4xf32> to vector<8x4xf32>
    %203 = arith.mulf %202, %194 : vector<8x4xf32>
    %204 = arith.addf %201, %203 : vector<8x4xf32>
    %205 = vector.broadcast %192 : f32 to vector<8x4xf32>
    %206 = arith.mulf %205, %204 : vector<8x4xf32>
    %207 = arith.addf %167, %206 : vector<8x4xf32>
    %208 = vector.broadcast %192 : f32 to vector<8x4xf32>
    %209 = arith.mulf %208, %207 : vector<8x4xf32>
    %210 = arith.addf %193, %209 : vector<8x4xf32>
    %211 = math.log %196 : vector<8x4xf32>
    %cst_118 = arith.constant 0.000000e+00 : f32
    %212 = vector.broadcast %cst_118 : f32 to vector<8x4xf32>
    %213 = arith.subf %212, %211 : vector<8x4xf32>
    %214 = arith.mulf %196, %196 : vector<8x4xf32>
    %215 = arith.subf %195, %210 : vector<8x4xf32>
    %216 = arith.mulf %215, %215 : vector<8x4xf32>
    %217 = arith.addf %214, %216 : vector<8x4xf32>
    %cst_119 = arith.constant 5.000000e-01 : f32
    %218 = vector.broadcast %cst_119 : f32 to vector<8x4xf32>
    %219 = arith.mulf %218, %217 : vector<8x4xf32>
    %220 = arith.addf %213, %219 : vector<8x4xf32>
    %cst_120 = arith.constant 5.000000e-01 : f32
    %221 = vector.broadcast %cst_120 : f32 to vector<8x4xf32>
    %222 = arith.subf %220, %221 : vector<8x4xf32>
    %223 = vector.broadcast %109 : vector<8x1xf32> to vector<8x4xf32>
    %224 = arith.mulf %222, %223 : vector<8x4xf32>
    %cst_121 = arith.constant dense<0.000000e+00> : vector<8xf32>
    %225 = vector.multi_reduction <add>, %224, %cst_121 [1] : vector<8x4xf32> to vector<8xf32>
    %226 = vector.shape_cast %225 : vector<8xf32> to vector<8x1xf32>
    %cst_122 = arith.constant dense<0.000000e+00> : vector<1xf32>
    %227 = vector.multi_reduction <add>, %226, %cst_122 [0] : vector<8x1xf32> to vector<1xf32>
    %228 = vector.shape_cast %227 : vector<1xf32> to vector<1x1xf32>
    %cst_123 = arith.constant 5.000000e-01 : f32
    %229 = vector.broadcast %cst_123 : f32 to vector<1x1xf32>
    %230 = arith.mulf %228, %229 : vector<1x1xf32>
    %231 = arith.addf %191, %230 : vector<1x1xf32>
    %c4 = arith.constant 4 : index
    %232 = memref.load %arg0[%c4] : memref<8xf32, #tpu.memory_space<smem>>
    %c24_124 = arith.constant 24 : index
    %c0_125 = arith.constant 0 : index
    %233 = vector.load %arg29[%c24_124, %c0_125] : memref<64x4xf32, #tpu.memory_space<vmem>>, vector<8x4xf32>
    %c24_126 = arith.constant 24 : index
    %c0_127 = arith.constant 0 : index
    %234 = vector.load %arg2[%c24_126, %c0_127] : memref<64x4xf32, #tpu.memory_space<vmem>>, vector<8x4xf32>
    %c32 = arith.constant 32 : index
    %c0_128 = arith.constant 0 : index
    %235 = vector.load %arg30[%c32, %c0_128] : memref<64x4xf32, #tpu.memory_space<vmem>>, vector<8x4xf32>
    %c32_129 = arith.constant 32 : index
    %c0_130 = arith.constant 0 : index
    %236 = vector.load %arg31[%c32_129, %c0_130] : memref<64x4xf32, #tpu.memory_space<vmem>>, vector<8x4xf32>
    %237 = vector.broadcast %106 : vector<1x4xf32> to vector<8x4xf32>
    %238 = arith.mulf %237, %233 : vector<8x4xf32>
    %239 = vector.broadcast %107 : vector<1x4xf32> to vector<8x4xf32>
    %240 = arith.mulf %239, %207 : vector<8x4xf32>
    %241 = arith.addf %238, %240 : vector<8x4xf32>
    %242 = vector.broadcast %108 : vector<1x4xf32> to vector<8x4xf32>
    %243 = arith.mulf %242, %234 : vector<8x4xf32>
    %244 = arith.addf %241, %243 : vector<8x4xf32>
    %245 = vector.broadcast %232 : f32 to vector<8x4xf32>
    %246 = arith.mulf %245, %244 : vector<8x4xf32>
    %247 = arith.addf %207, %246 : vector<8x4xf32>
    %248 = vector.broadcast %232 : f32 to vector<8x4xf32>
    %249 = arith.mulf %248, %247 : vector<8x4xf32>
    %250 = arith.addf %233, %249 : vector<8x4xf32>
    %251 = math.log %236 : vector<8x4xf32>
    %cst_131 = arith.constant 0.000000e+00 : f32
    %252 = vector.broadcast %cst_131 : f32 to vector<8x4xf32>
    %253 = arith.subf %252, %251 : vector<8x4xf32>
    %254 = arith.mulf %236, %236 : vector<8x4xf32>
    %255 = arith.subf %235, %250 : vector<8x4xf32>
    %256 = arith.mulf %255, %255 : vector<8x4xf32>
    %257 = arith.addf %254, %256 : vector<8x4xf32>
    %cst_132 = arith.constant 5.000000e-01 : f32
    %258 = vector.broadcast %cst_132 : f32 to vector<8x4xf32>
    %259 = arith.mulf %258, %257 : vector<8x4xf32>
    %260 = arith.addf %253, %259 : vector<8x4xf32>
    %cst_133 = arith.constant 5.000000e-01 : f32
    %261 = vector.broadcast %cst_133 : f32 to vector<8x4xf32>
    %262 = arith.subf %260, %261 : vector<8x4xf32>
    %263 = vector.broadcast %109 : vector<8x1xf32> to vector<8x4xf32>
    %264 = arith.mulf %262, %263 : vector<8x4xf32>
    %cst_134 = arith.constant dense<0.000000e+00> : vector<8xf32>
    %265 = vector.multi_reduction <add>, %264, %cst_134 [1] : vector<8x4xf32> to vector<8xf32>
    %266 = vector.shape_cast %265 : vector<8xf32> to vector<8x1xf32>
    %cst_135 = arith.constant dense<0.000000e+00> : vector<1xf32>
    %267 = vector.multi_reduction <add>, %266, %cst_135 [0] : vector<8x1xf32> to vector<1xf32>
    %268 = vector.shape_cast %267 : vector<1xf32> to vector<1x1xf32>
    %cst_136 = arith.constant 5.000000e-01 : f32
    %269 = vector.broadcast %cst_136 : f32 to vector<1x1xf32>
    %270 = arith.mulf %268, %269 : vector<1x1xf32>
    %271 = arith.addf %231, %270 : vector<1x1xf32>
    %c5 = arith.constant 5 : index
    %272 = memref.load %arg0[%c5] : memref<8xf32, #tpu.memory_space<smem>>
    %c32_137 = arith.constant 32 : index
    %c0_138 = arith.constant 0 : index
    %273 = vector.load %arg29[%c32_137, %c0_138] : memref<64x4xf32, #tpu.memory_space<vmem>>, vector<8x4xf32>
    %c32_139 = arith.constant 32 : index
    %c0_140 = arith.constant 0 : index
    %274 = vector.load %arg2[%c32_139, %c0_140] : memref<64x4xf32, #tpu.memory_space<vmem>>, vector<8x4xf32>
    %c40 = arith.constant 40 : index
    %c0_141 = arith.constant 0 : index
    %275 = vector.load %arg30[%c40, %c0_141] : memref<64x4xf32, #tpu.memory_space<vmem>>, vector<8x4xf32>
    %c40_142 = arith.constant 40 : index
    %c0_143 = arith.constant 0 : index
    %276 = vector.load %arg31[%c40_142, %c0_143] : memref<64x4xf32, #tpu.memory_space<vmem>>, vector<8x4xf32>
    %277 = vector.broadcast %106 : vector<1x4xf32> to vector<8x4xf32>
    %278 = arith.mulf %277, %273 : vector<8x4xf32>
    %279 = vector.broadcast %107 : vector<1x4xf32> to vector<8x4xf32>
    %280 = arith.mulf %279, %247 : vector<8x4xf32>
    %281 = arith.addf %278, %280 : vector<8x4xf32>
    %282 = vector.broadcast %108 : vector<1x4xf32> to vector<8x4xf32>
    %283 = arith.mulf %282, %274 : vector<8x4xf32>
    %284 = arith.addf %281, %283 : vector<8x4xf32>
    %285 = vector.broadcast %272 : f32 to vector<8x4xf32>
    %286 = arith.mulf %285, %284 : vector<8x4xf32>
    %287 = arith.addf %247, %286 : vector<8x4xf32>
    %288 = vector.broadcast %272 : f32 to vector<8x4xf32>
    %289 = arith.mulf %288, %287 : vector<8x4xf32>
    %290 = arith.addf %273, %289 : vector<8x4xf32>
    %291 = math.log %276 : vector<8x4xf32>
    %cst_144 = arith.constant 0.000000e+00 : f32
    %292 = vector.broadcast %cst_144 : f32 to vector<8x4xf32>
    %293 = arith.subf %292, %291 : vector<8x4xf32>
    %294 = arith.mulf %276, %276 : vector<8x4xf32>
    %295 = arith.subf %275, %290 : vector<8x4xf32>
    %296 = arith.mulf %295, %295 : vector<8x4xf32>
    %297 = arith.addf %294, %296 : vector<8x4xf32>
    %cst_145 = arith.constant 5.000000e-01 : f32
    %298 = vector.broadcast %cst_145 : f32 to vector<8x4xf32>
    %299 = arith.mulf %298, %297 : vector<8x4xf32>
    %300 = arith.addf %293, %299 : vector<8x4xf32>
    %cst_146 = arith.constant 5.000000e-01 : f32
    %301 = vector.broadcast %cst_146 : f32 to vector<8x4xf32>
    %302 = arith.subf %300, %301 : vector<8x4xf32>
    %303 = vector.broadcast %109 : vector<8x1xf32> to vector<8x4xf32>
    %304 = arith.mulf %302, %303 : vector<8x4xf32>
    %cst_147 = arith.constant dense<0.000000e+00> : vector<8xf32>
    %305 = vector.multi_reduction <add>, %304, %cst_147 [1] : vector<8x4xf32> to vector<8xf32>
    %306 = vector.shape_cast %305 : vector<8xf32> to vector<8x1xf32>
    %cst_148 = arith.constant dense<0.000000e+00> : vector<1xf32>
    %307 = vector.multi_reduction <add>, %306, %cst_148 [0] : vector<8x1xf32> to vector<1xf32>
    %308 = vector.shape_cast %307 : vector<1xf32> to vector<1x1xf32>
    %cst_149 = arith.constant 5.000000e-01 : f32
    %309 = vector.broadcast %cst_149 : f32 to vector<1x1xf32>
    %310 = arith.mulf %308, %309 : vector<1x1xf32>
    %311 = arith.addf %271, %310 : vector<1x1xf32>
    %c6 = arith.constant 6 : index
    %312 = memref.load %arg0[%c6] : memref<8xf32, #tpu.memory_space<smem>>
    %c40_150 = arith.constant 40 : index
    %c0_151 = arith.constant 0 : index
    %313 = vector.load %arg29[%c40_150, %c0_151] : memref<64x4xf32, #tpu.memory_space<vmem>>, vector<8x4xf32>
    %c40_152 = arith.constant 40 : index
    %c0_153 = arith.constant 0 : index
    %314 = vector.load %arg2[%c40_152, %c0_153] : memref<64x4xf32, #tpu.memory_space<vmem>>, vector<8x4xf32>
    %c48 = arith.constant 48 : index
    %c0_154 = arith.constant 0 : index
    %315 = vector.load %arg30[%c48, %c0_154] : memref<64x4xf32, #tpu.memory_space<vmem>>, vector<8x4xf32>
    %c48_155 = arith.constant 48 : index
    %c0_156 = arith.constant 0 : index
    %316 = vector.load %arg31[%c48_155, %c0_156] : memref<64x4xf32, #tpu.memory_space<vmem>>, vector<8x4xf32>
    %317 = vector.broadcast %106 : vector<1x4xf32> to vector<8x4xf32>
    %318 = arith.mulf %317, %313 : vector<8x4xf32>
    %319 = vector.broadcast %107 : vector<1x4xf32> to vector<8x4xf32>
    %320 = arith.mulf %319, %287 : vector<8x4xf32>
    %321 = arith.addf %318, %320 : vector<8x4xf32>
    %322 = vector.broadcast %108 : vector<1x4xf32> to vector<8x4xf32>
    %323 = arith.mulf %322, %314 : vector<8x4xf32>
    %324 = arith.addf %321, %323 : vector<8x4xf32>
    %325 = vector.broadcast %312 : f32 to vector<8x4xf32>
    %326 = arith.mulf %325, %324 : vector<8x4xf32>
    %327 = arith.addf %287, %326 : vector<8x4xf32>
    %328 = vector.broadcast %312 : f32 to vector<8x4xf32>
    %329 = arith.mulf %328, %327 : vector<8x4xf32>
    %330 = arith.addf %313, %329 : vector<8x4xf32>
    %331 = math.log %316 : vector<8x4xf32>
    %cst_157 = arith.constant 0.000000e+00 : f32
    %332 = vector.broadcast %cst_157 : f32 to vector<8x4xf32>
    %333 = arith.subf %332, %331 : vector<8x4xf32>
    %334 = arith.mulf %316, %316 : vector<8x4xf32>
    %335 = arith.subf %315, %330 : vector<8x4xf32>
    %336 = arith.mulf %335, %335 : vector<8x4xf32>
    %337 = arith.addf %334, %336 : vector<8x4xf32>
    %cst_158 = arith.constant 5.000000e-01 : f32
    %338 = vector.broadcast %cst_158 : f32 to vector<8x4xf32>
    %339 = arith.mulf %338, %337 : vector<8x4xf32>
    %340 = arith.addf %333, %339 : vector<8x4xf32>
    %cst_159 = arith.constant 5.000000e-01 : f32
    %341 = vector.broadcast %cst_159 : f32 to vector<8x4xf32>
    %342 = arith.subf %340, %341 : vector<8x4xf32>
    %343 = vector.broadcast %109 : vector<8x1xf32> to vector<8x4xf32>
    %344 = arith.mulf %342, %343 : vector<8x4xf32>
    %cst_160 = arith.constant dense<0.000000e+00> : vector<8xf32>
    %345 = vector.multi_reduction <add>, %344, %cst_160 [1] : vector<8x4xf32> to vector<8xf32>
    %346 = vector.shape_cast %345 : vector<8xf32> to vector<8x1xf32>
    %cst_161 = arith.constant dense<0.000000e+00> : vector<1xf32>
    %347 = vector.multi_reduction <add>, %346, %cst_161 [0] : vector<8x1xf32> to vector<1xf32>
    %348 = vector.shape_cast %347 : vector<1xf32> to vector<1x1xf32>
    %cst_162 = arith.constant 5.000000e-01 : f32
    %349 = vector.broadcast %cst_162 : f32 to vector<1x1xf32>
    %350 = arith.mulf %348, %349 : vector<1x1xf32>
    %351 = arith.addf %311, %350 : vector<1x1xf32>
    %c7 = arith.constant 7 : index
    %352 = memref.load %arg0[%c7] : memref<8xf32, #tpu.memory_space<smem>>
    %c48_163 = arith.constant 48 : index
    %c0_164 = arith.constant 0 : index
    %353 = vector.load %arg29[%c48_163, %c0_164] : memref<64x4xf32, #tpu.memory_space<vmem>>, vector<8x4xf32>
    %c48_165 = arith.constant 48 : index
    %c0_166 = arith.constant 0 : index
    %354 = vector.load %arg2[%c48_165, %c0_166] : memref<64x4xf32, #tpu.memory_space<vmem>>, vector<8x4xf32>
    %c56 = arith.constant 56 : index
    %c0_167 = arith.constant 0 : index
    %355 = vector.load %arg30[%c56, %c0_167] : memref<64x4xf32, #tpu.memory_space<vmem>>, vector<8x4xf32>
    %c56_168 = arith.constant 56 : index
    %c0_169 = arith.constant 0 : index
    %356 = vector.load %arg31[%c56_168, %c0_169] : memref<64x4xf32, #tpu.memory_space<vmem>>, vector<8x4xf32>
    %357 = vector.broadcast %106 : vector<1x4xf32> to vector<8x4xf32>
    %358 = arith.mulf %357, %353 : vector<8x4xf32>
    %359 = vector.broadcast %107 : vector<1x4xf32> to vector<8x4xf32>
    %360 = arith.mulf %359, %327 : vector<8x4xf32>
    %361 = arith.addf %358, %360 : vector<8x4xf32>
    %362 = vector.broadcast %108 : vector<1x4xf32> to vector<8x4xf32>
    %363 = arith.mulf %362, %354 : vector<8x4xf32>
    %364 = arith.addf %361, %363 : vector<8x4xf32>
    %365 = vector.broadcast %352 : f32 to vector<8x4xf32>
    %366 = arith.mulf %365, %364 : vector<8x4xf32>
    %367 = arith.addf %327, %366 : vector<8x4xf32>
    %368 = vector.broadcast %352 : f32 to vector<8x4xf32>
    %369 = arith.mulf %368, %367 : vector<8x4xf32>
    %370 = arith.addf %353, %369 : vector<8x4xf32>
    %371 = math.log %356 : vector<8x4xf32>
    %cst_170 = arith.constant 0.000000e+00 : f32
    %372 = vector.broadcast %cst_170 : f32 to vector<8x4xf32>
    %373 = arith.subf %372, %371 : vector<8x4xf32>
    %374 = arith.mulf %356, %356 : vector<8x4xf32>
    %375 = arith.subf %355, %370 : vector<8x4xf32>
    %376 = arith.mulf %375, %375 : vector<8x4xf32>
    %377 = arith.addf %374, %376 : vector<8x4xf32>
    %cst_171 = arith.constant 5.000000e-01 : f32
    %378 = vector.broadcast %cst_171 : f32 to vector<8x4xf32>
    %379 = arith.mulf %378, %377 : vector<8x4xf32>
    %380 = arith.addf %373, %379 : vector<8x4xf32>
    %cst_172 = arith.constant 5.000000e-01 : f32
    %381 = vector.broadcast %cst_172 : f32 to vector<8x4xf32>
    %382 = arith.subf %380, %381 : vector<8x4xf32>
    %383 = vector.broadcast %109 : vector<8x1xf32> to vector<8x4xf32>
    %384 = arith.mulf %382, %383 : vector<8x4xf32>
    %cst_173 = arith.constant dense<0.000000e+00> : vector<8xf32>
    %385 = vector.multi_reduction <add>, %384, %cst_173 [1] : vector<8x4xf32> to vector<8xf32>
    %386 = vector.shape_cast %385 : vector<8xf32> to vector<8x1xf32>
    %cst_174 = arith.constant dense<0.000000e+00> : vector<1xf32>
    %387 = vector.multi_reduction <add>, %386, %cst_174 [0] : vector<8x1xf32> to vector<1xf32>
    %388 = vector.shape_cast %387 : vector<1xf32> to vector<1x1xf32>
    %cst_175 = arith.constant 5.000000e-01 : f32
    %389 = vector.broadcast %cst_175 : f32 to vector<1x1xf32>
    %390 = arith.mulf %388, %389 : vector<1x1xf32>
    %391 = arith.addf %351, %390 : vector<1x1xf32>
    %cst_176 = arith.constant 1.250000e-01 : f32
    %392 = vector.broadcast %cst_176 : f32 to vector<1x1xf32>
    %393 = arith.mulf %105, %392 : vector<1x1xf32>
    %cst_177 = arith.constant 1.250000e-01 : f32
    %394 = vector.broadcast %cst_177 : f32 to vector<1x1xf32>
    %395 = arith.mulf %391, %394 : vector<1x1xf32>
    %c0_178 = arith.constant 0 : index
    %c0_179 = arith.constant 0 : index
    %396 = vector.load %arg27[%c0_178, %c0_179] : memref<1x1xf32, #tpu.memory_space<vmem>>, vector<1x1xf32>
    tpu.vector_store %arg27[%c0_178, %c0_179], %393 {strides = array<i32>} : memref<1x1xf32, #tpu.memory_space<vmem>>, vector<1x1xf32>,
    %c0_180 = arith.constant 0 : index
    %c0_181 = arith.constant 0 : index
    %397 = vector.load %arg28[%c0_180, %c0_181] : memref<1x1xf32, #tpu.memory_space<vmem>>, vector<1x1xf32>
    tpu.vector_store %arg28[%c0_180, %c0_181], %395 {strides = array<i32>} : memref<1x1xf32, #tpu.memory_space<vmem>>, vector<1x1xf32>,
    %398 = arith.subf %393, %395 : vector<1x1xf32>
    %c0_182 = arith.constant 0 : index
    %c0_183 = arith.constant 0 : index
    %399 = vector.load %arg26[%c0_182, %c0_183] : memref<1x1xf32, #tpu.memory_space<vmem>>, vector<1x1xf32>
    tpu.vector_store %arg26[%c0_182, %c0_183], %398 {strides = array<i32>} : memref<1x1xf32, #tpu.memory_space<vmem>>, vector<1x1xf32>,
    return
  }
}

</mosaic_0001>

<llo_original>
// kernel: newtonian_vae_derivation_forward.3
$region0: #{newtonian_vae_derivation_forward.3}
  #allocation0 [shape = 'u32[]', space=smem, size = 0x4, offset = 0x4, fixed_abs, tag = 'smem constant byte address 0x4 - core index']
  #allocation1 [shape = 'u32[144,128]{1,0:T(1,128)}', space=vmem, size = 0x12000, scoped, tag = 'internal scratch']
  #allocation2 [shape = 'f32[64,4]{1,0:T(8,128)}', space=vmem, size = 0x8000, scoped, tag = 'scratch operand']
  #allocation3 [shape = 'f32[64,4]{1,0:T(8,128)}', space=vmem, size = 0x8000, scoped, tag = 'scratch operand']
  #allocation4 [shape = 'f32[64,4]{1,0:T(8,128)}', space=vmem, size = 0x8000, scoped, tag = 'scratch operand']
  %s0 = inlined_call_operand.vmem [shape: f32[8], index: 0, kind: input, shape index: {}]
  %s1 = inlined_call_operand.vmem [shape: f32[64,768], index: 1, kind: input, shape index: {}]
  %s2 = inlined_call_operand.vmem [shape: f32[64,4], index: 2, kind: input, shape index: {}]
  %s3 = inlined_call_operand.vmem [shape: f32[64,4], index: 3, kind: input, shape index: {}]
  %s4 = inlined_call_operand.vmem [shape: f32[56,4], index: 4, kind: input, shape index: {}]
  %s5 = inlined_call_operand.vmem [shape: f32[64,1], index: 5, kind: input, shape index: {}]
  %s6 = inlined_call_operand.vmem [shape: bf16[768,32], index: 6, kind: input, shape index: {}]
  %s7 = inlined_call_operand.vmem [shape: f32[1,32], index: 7, kind: input, shape index: {}]
  %s8 = inlined_call_operand.vmem [shape: bf16[32,4], index: 8, kind: input, shape index: {}]
  %s9 = inlined_call_operand.vmem [shape: f32[1,4], index: 9, kind: input, shape index: {}]
  %s10 = inlined_call_operand.vmem [shape: bf16[32,4], index: 10, kind: input, shape index: {}]
  %s11 = inlined_call_operand.vmem [shape: f32[1,4], index: 11, kind: input, shape index: {}]
  %s12 = inlined_call_operand.vmem [shape: f32[1,4], index: 12, kind: input, shape index: {}]
  %s13 = inlined_call_operand.vmem [shape: f32[1,4], index: 13, kind: input, shape index: {}]
  %s14 = inlined_call_operand.vmem [shape: f32[1,4], index: 14, kind: input, shape index: {}]
  %s15 = inlined_call_operand.vmem [shape: bf16[4,32], index: 15, kind: input, shape index: {}]
  %s16 = inlined_call_operand.vmem [shape: bf16[4,32], index: 16, kind: input, shape index: {}]
  %s17 = inlined_call_operand.vmem [shape: f32[1,32], index: 17, kind: input, shape index: {}]
  %s18 = inlined_call_operand.vmem [shape: bf16[32,4], index: 18, kind: input, shape index: {}]
  %s19 = inlined_call_operand.vmem [shape: f32[1,4], index: 19, kind: input, shape index: {}]
  %s20 = inlined_call_operand.vmem [shape: bf16[32,4], index: 20, kind: input, shape index: {}]
  %s21 = inlined_call_operand.vmem [shape: f32[1,4], index: 21, kind: input, shape index: {}]
  %s22 = inlined_call_operand.vmem [shape: bf16[4,32], index: 22, kind: input, shape index: {}]
  %s23 = inlined_call_operand.vmem [shape: f32[1,32], index: 23, kind: input, shape index: {}]
  %s24 = inlined_call_operand.vmem [shape: bf16[32,768], index: 24, kind: input, shape index: {}]
  %s25 = inlined_call_operand.vmem [shape: f32[1,768], index: 25, kind: input, shape index: {}]
  %s26 = inlined_call_operand.hbm [shape: f32[1,1], index: 26, kind: output, shape index: {0}]
  %s27 = inlined_call_operand.hbm [shape: f32[1,1], index: 27, kind: output, shape index: {1}]
  %s28 = inlined_call_operand.hbm [shape: f32[1,1], index: 28, kind: output, shape index: {2}]
  %29 = xla_tuple %s26, %s27, %s28
  %s30 = sld [smem:[#allocation0]]
  $region134: #{newtonian_vae_derivation_forward.3} parent=0
    _
  %s32 = ssub.s32 1, %s30
  %s33 = scalar_select 0, %s32, %s30
  $region1: #{newtonian_vae_derivation_forward.3} parent=0
    #allocation5 [shape = 'u8[512]{0}', space=smem, size = 0x200, scoped, tag = 'input window, operand 0, single buffered']
    #allocation6 [shape = 's32[1]{0}', space=sflag, size = 0x4, scoped, tag = 'scoped memory for newtonian_vae_derivation_forward.3']
    #allocation7 [shape = 's32[1]{0}', space=sflag, size = 0x4, scoped, tag = 'scoped memory for newtonian_vae_derivation_forward.3']
    #allocation8 [shape = 'u8[512]{0}', space=vmem, size = 0x400, scoped, tag = 'output window, operand 0, single buffered']
    #allocation9 [shape = 'u8[512]{0}', space=vmem, size = 0x400, scoped, tag = 'output window, operand 1, single buffered']
    #allocation10 [shape = 's32[1]{0}', space=sflag, size = 0x4, scoped, tag = 'scoped memory for newtonian_vae_derivation_forward.3']
    #allocation11 [shape = 'u8[512]{0}', space=vmem, size = 0x400, scoped, tag = 'output window, operand 2, single buffered']
    %34 = vsyncpa [#allocation7], 0
    %35 = vsyncpa [#allocation6], 0
    %36 = vsyncpa [#allocation10], 0
    // Predicated region
    $region2: #{newtonian_vae_derivation_forward.3} parent=1 // pred_check
      _
    $region3: #{newtonian_vae_derivation_forward.3} parent=1 // pred_check_branch
      %38 = sbr.rel (0) target = $region5
    $region4: #{newtonian_vae_derivation_forward.3} parent=1 // pred_region
      %s40 = ssub.s32 16, 16
      %41 = vsyncadd [#allocation7], %s40
      %s43 = sshll.u32 %s0, 4
      %s44 = int_to_ptr.vmem [resolvable:$true] %s43
      %46 = dma.vmem_to_smem %s44, 16, [#allocation5], [#allocation7]
    $region5: #{newtonian_vae_derivation_forward.3} parent=1 // pred_fallthru
      _
    // Predicated region
    $region6: #{newtonian_vae_derivation_forward.3} parent=1 // pred_check
      _
    $region7: #{newtonian_vae_derivation_forward.3} parent=1 // pred_check_branch
      %48 = sbr.rel (0) target = $region9
    $region8: #{newtonian_vae_derivation_forward.3} parent=1 // pred_region
      _
    $region9: #{newtonian_vae_derivation_forward.3} parent=1 // pred_fallthru
      _
    // Predicated region
    $region10: #{newtonian_vae_derivation_forward.3} parent=1 // pred_check
      _
    $region11: #{newtonian_vae_derivation_forward.3} parent=1 // pred_check_branch
      %50 = sbr.rel (0) target = $region13
    $region12: #{newtonian_vae_derivation_forward.3} parent=1 // pred_region
      _
    $region13: #{newtonian_vae_derivation_forward.3} parent=1 // pred_fallthru
      _
    // Predicated region
    $region14: #{newtonian_vae_derivation_forward.3} parent=1 // pred_check
      _
    $region15: #{newtonian_vae_derivation_forward.3} parent=1 // pred_check_branch
      %52 = sbr.rel (0) target = $region17
    $region16: #{newtonian_vae_derivation_forward.3} parent=1 // pred_region
      _
    $region17: #{newtonian_vae_derivation_forward.3} parent=1 // pred_fallthru
      _
    // Predicated region
    $region18: #{newtonian_vae_derivation_forward.3} parent=1 // pred_check
      _
    $region19: #{newtonian_vae_derivation_forward.3} parent=1 // pred_check_branch
      %54 = sbr.rel (0) target = $region21
    $region20: #{newtonian_vae_derivation_forward.3} parent=1 // pred_region
      _
    $region21: #{newtonian_vae_derivation_forward.3} parent=1 // pred_fallthru
      _
    // Predicated region
    $region22: #{newtonian_vae_derivation_forward.3} parent=1 // pred_check
      _
    $region23: #{newtonian_vae_derivation_forward.3} parent=1 // pred_check_branch
      %56 = sbr.rel (0) target = $region25
    $region24: #{newtonian_vae_derivation_forward.3} parent=1 // pred_region
      _
    $region25: #{newtonian_vae_derivation_forward.3} parent=1 // pred_fallthru
      _
    // Predicated region
    $region26: #{newtonian_vae_derivation_forward.3} parent=1 // pred_check
      _
    $region27: #{newtonian_vae_derivation_forward.3} parent=1 // pred_check_branch
      %58 = sbr.rel (0) target = $region29
    $region28: #{newtonian_vae_derivation_forward.3} parent=1 // pred_region
      _
    $region29: #{newtonian_vae_derivation_forward.3} parent=1 // pred_fallthru
      _
    // Predicated region
    $region30: #{newtonian_vae_derivation_forward.3} parent=1 // pred_check
      _
    $region31: #{newtonian_vae_derivation_forward.3} parent=1 // pred_check_branch
      %60 = sbr.rel (0) target = $region33
    $region32: #{newtonian_vae_derivation_forward.3} parent=1 // pred_region
      _
    $region33: #{newtonian_vae_derivation_forward.3} parent=1 // pred_fallthru
      _
    // Predicated region
    $region34: #{newtonian_vae_derivation_forward.3} parent=1 // pred_check
      _
    $region35: #{newtonian_vae_derivation_forward.3} parent=1 // pred_check_branch
      %62 = sbr.rel (0) target = $region37
    $region36: #{newtonian_vae_derivation_forward.3} parent=1 // pred_region
      _
    $region37: #{newtonian_vae_derivation_forward.3} parent=1 // pred_fallthru
      _
    // Predicated region
    $region38: #{newtonian_vae_derivation_forward.3} parent=1 // pred_check
      _
    $region39: #{newtonian_vae_derivation_forward.3} parent=1 // pred_check_branch
      %64 = sbr.rel (0) target = $region41
    $region40: #{newtonian_vae_derivation_forward.3} parent=1 // pred_region
      _
    $region41: #{newtonian_vae_derivation_forward.3} parent=1 // pred_fallthru
      _
    // Predicated region
    $region42: #{newtonian_vae_derivation_forward.3} parent=1 // pred_check
      _
    $region43: #{newtonian_vae_derivation_forward.3} parent=1 // pred_check_branch
      %66 = sbr.rel (0) target = $region45
    $region44: #{newtonian_vae_derivation_forward.3} parent=1 // pred_region
      _
    $region45: #{newtonian_vae_derivation_forward.3} parent=1 // pred_fallthru
      _
    // Predicated region
    $region46: #{newtonian_vae_derivation_forward.3} parent=1 // pred_check
      _
    $region47: #{newtonian_vae_derivation_forward.3} parent=1 // pred_check_branch
      %68 = sbr.rel (0) target = $region49
    $region48: #{newtonian_vae_derivation_forward.3} parent=1 // pred_region
      _
    $region49: #{newtonian_vae_derivation_forward.3} parent=1 // pred_fallthru
      _
    // Predicated region
    $region50: #{newtonian_vae_derivation_forward.3} parent=1 // pred_check
      _
    $region51: #{newtonian_vae_derivation_forward.3} parent=1 // pred_check_branch
      %70 = sbr.rel (0) target = $region53
    $region52: #{newtonian_vae_derivation_forward.3} parent=1 // pred_region
      _
    $region53: #{newtonian_vae_derivation_forward.3} parent=1 // pred_fallthru
      _
    // Predicated region
    $region54: #{newtonian_vae_derivation_forward.3} parent=1 // pred_check
      _
    $region55: #{newtonian_vae_derivation_forward.3} parent=1 // pred_check_branch
      %72 = sbr.rel (0) target = $region57
    $region56: #{newtonian_vae_derivation_forward.3} parent=1 // pred_region
      _
    $region57: #{newtonian_vae_derivation_forward.3} parent=1 // pred_fallthru
      _
    // Predicated region
    $region58: #{newtonian_vae_derivation_forward.3} parent=1 // pred_check
      _
    $region59: #{newtonian_vae_derivation_forward.3} parent=1 // pred_check_branch
      %74 = sbr.rel (0) target = $region61
    $region60: #{newtonian_vae_derivation_forward.3} parent=1 // pred_region
      _
    $region61: #{newtonian_vae_derivation_forward.3} parent=1 // pred_fallthru
      _
    // Predicated region
    $region62: #{newtonian_vae_derivation_forward.3} parent=1 // pred_check
      _
    $region63: #{newtonian_vae_derivation_forward.3} parent=1 // pred_check_branch
      %76 = sbr.rel (0) target = $region65
    $region64: #{newtonian_vae_derivation_forward.3} parent=1 // pred_region
      _
    $region65: #{newtonian_vae_derivation_forward.3} parent=1 // pred_fallthru
      _
    // Predicated region
    $region66: #{newtonian_vae_derivation_forward.3} parent=1 // pred_check
      _
    $region67: #{newtonian_vae_derivation_forward.3} parent=1 // pred_check_branch
      %78 = sbr.rel (0) target = $region69
    $region68: #{newtonian_vae_derivation_forward.3} parent=1 // pred_region
      _
    $region69: #{newtonian_vae_derivation_forward.3} parent=1 // pred_fallthru
      _
    // Predicated region
    $region70: #{newtonian_vae_derivation_forward.3} parent=1 // pred_check
      _
    $region71: #{newtonian_vae_derivation_forward.3} parent=1 // pred_check_branch
      %80 = sbr.rel (0) target = $region73
    $region72: #{newtonian_vae_derivation_forward.3} parent=1 // pred_region
      _
    $region73: #{newtonian_vae_derivation_forward.3} parent=1 // pred_fallthru
      _
    // Predicated region
    $region74: #{newtonian_vae_derivation_forward.3} parent=1 // pred_check
      _
    $region75: #{newtonian_vae_derivation_forward.3} parent=1 // pred_check_branch
      %82 = sbr.rel (0) target = $region77
    $region76: #{newtonian_vae_derivation_forward.3} parent=1 // pred_region
      _
    $region77: #{newtonian_vae_derivation_forward.3} parent=1 // pred_fallthru
      _
    // Predicated region
    $region78: #{newtonian_vae_derivation_forward.3} parent=1 // pred_check
      _
    $region79: #{newtonian_vae_derivation_forward.3} parent=1 // pred_check_branch
      %84 = sbr.rel (0) target = $region81
    $region80: #{newtonian_vae_derivation_forward.3} parent=1 // pred_region
      _
    $region81: #{newtonian_vae_derivation_forward.3} parent=1 // pred_fallthru
      _
    // Predicated region
    $region82: #{newtonian_vae_derivation_forward.3} parent=1 // pred_check
      _
    $region83: #{newtonian_vae_derivation_forward.3} parent=1 // pred_check_branch
      %86 = sbr.rel (0) target = $region85
    $region84: #{newtonian_vae_derivation_forward.3} parent=1 // pred_region
      _
    $region85: #{newtonian_vae_derivation_forward.3} parent=1 // pred_fallthru
      _
    // Predicated region
    $region86: #{newtonian_vae_derivation_forward.3} parent=1 // pred_check
      _
    $region87: #{newtonian_vae_derivation_forward.3} parent=1 // pred_check_branch
      %88 = sbr.rel (0) target = $region89
    $region88: #{newtonian_vae_derivation_forward.3} parent=1 // pred_region
      _
    $region89: #{newtonian_vae_derivation_forward.3} parent=1 // pred_fallthru
      _
    // Predicated region
    $region90: #{newtonian_vae_derivation_forward.3} parent=1 // pred_check
      _
    $region91: #{newtonian_vae_derivation_forward.3} parent=1 // pred_check_branch
      %90 = sbr.rel (0) target = $region93
    $region92: #{newtonian_vae_derivation_forward.3} parent=1 // pred_region
      _
    $region93: #{newtonian_vae_derivation_forward.3} parent=1 // pred_fallthru
      _
    // Predicated region
    $region94: #{newtonian_vae_derivation_forward.3} parent=1 // pred_check
      _
    $region95: #{newtonian_vae_derivation_forward.3} parent=1 // pred_check_branch
      %92 = sbr.rel (0) target = $region97
    $region96: #{newtonian_vae_derivation_forward.3} parent=1 // pred_region
      _
    $region97: #{newtonian_vae_derivation_forward.3} parent=1 // pred_fallthru
      _
    // Predicated region
    $region98: #{newtonian_vae_derivation_forward.3} parent=1 // pred_check
      _
    $region99: #{newtonian_vae_derivation_forward.3} parent=1 // pred_check_branch
      %94 = sbr.rel (0) target = $region101
    $region100: #{newtonian_vae_derivation_forward.3} parent=1 // pred_region
      _
    $region101: #{newtonian_vae_derivation_forward.3} parent=1 // pred_fallthru
      _
    // Predicated region
    $region102: #{newtonian_vae_derivation_forward.3} parent=1 // pred_check
      _
    $region103: #{newtonian_vae_derivation_forward.3} parent=1 // pred_check_branch
      %96 = sbr.rel (0) target = $region105
    $region104: #{newtonian_vae_derivation_forward.3} parent=1 // pred_region
      _
    $region105: #{newtonian_vae_derivation_forward.3} parent=1 // pred_fallthru
      _
    // Predicated region
    $region106: #{newtonian_vae_derivation_forward.3} parent=1 // pred_check
      _
    $region107: #{newtonian_vae_derivation_forward.3} parent=1 // pred_check_branch
      %98 = sbr.rel (0) target = $region109
    $region108: #{newtonian_vae_derivation_forward.3} parent=1 // pred_region
      %99 = dma.done [#allocation7], 16
    $region109: #{newtonian_vae_derivation_forward.3} parent=1 // pred_fallthru
      _
    %100 = sfence
    %v102 = vld [vmem:[%s1] sm:$0xff]
    %v103 = vld [vmem:[%s1 + $0x8] sm:$0xff]
    %v104 = vld [vmem:[%s1 + $0x10] sm:$0xff]
    %v105 = vld [vmem:[%s1 + $0x18] sm:$0xff]
    %v106 = vld [vmem:[%s1 + $0x20] sm:$0xff]
    %v107 = vld [vmem:[%s1 + $0x28] sm:$0xff]
    %v108 = vld [vmem:[%s1 + $0x30] sm:$0xff]
    %v109 = vld [vmem:[%s1 + $0x38] sm:$0xff]
    %v110 = vld [vmem:[%s1 + $0x40] sm:$0xff]
    %v111 = vld [vmem:[%s1 + $0x48] sm:$0xff]
    %v112 = vld [vmem:[%s1 + $0x50] sm:$0xff]
    %v113 = vld [vmem:[%s1 + $0x58] sm:$0xff]
    %v114 = vld [vmem:[%s1 + $0x60] sm:$0xff]
    %v115 = vld [vmem:[%s1 + $0x68] sm:$0xff]
    %v116 = vld [vmem:[%s1 + $0x70] sm:$0xff]
    %v117 = vld [vmem:[%s1 + $0x78] sm:$0xff]
    %v118 = vld [vmem:[%s1 + $0x80] sm:$0xff]
    %v119 = vld [vmem:[%s1 + $0x88] sm:$0xff]
    %v120 = vld [vmem:[%s1 + $0x90] sm:$0xff]
    %v121 = vld [vmem:[%s1 + $0x98] sm:$0xff]
    %v122 = vld [vmem:[%s1 + $0xa0] sm:$0xff]
    %v123 = vld [vmem:[%s1 + $0xa8] sm:$0xff]
    %v124 = vld [vmem:[%s1 + $0xb0] sm:$0xff]
    %v125 = vld [vmem:[%s1 + $0xb8] sm:$0xff]
    %v126 = vld [vmem:[%s1 + $0xc0] sm:$0xff]
    %v127 = vld [vmem:[%s1 + $0xc8] sm:$0xff]
    %v128 = vld [vmem:[%s1 + $0xd0] sm:$0xff]
    %v129 = vld [vmem:[%s1 + $0xd8] sm:$0xff]
    %v130 = vld [vmem:[%s1 + $0xe0] sm:$0xff]
    %v131 = vld [vmem:[%s1 + $0xe8] sm:$0xff]
    %v132 = vld [vmem:[%s1 + $0xf0] sm:$0xff]
    %v133 = vld [vmem:[%s1 + $0xf8] sm:$0xff]
    %v134 = vld [vmem:[%s1 + $0x100] sm:$0xff]
    %v135 = vld [vmem:[%s1 + $0x108] sm:$0xff]
    %v136 = vld [vmem:[%s1 + $0x110] sm:$0xff]
    %v137 = vld [vmem:[%s1 + $0x118] sm:$0xff]
    %v138 = vld [vmem:[%s1 + $0x120] sm:$0xff]
    %v139 = vld [vmem:[%s1 + $0x128] sm:$0xff]
    %v140 = vld [vmem:[%s1 + $0x130] sm:$0xff]
    %v141 = vld [vmem:[%s1 + $0x138] sm:$0xff]
    %v142 = vld [vmem:[%s1 + $0x140] sm:$0xff]
    %v143 = vld [vmem:[%s1 + $0x148] sm:$0xff]
    %v144 = vld [vmem:[%s1 + $0x150] sm:$0xff]
    %v145 = vld [vmem:[%s1 + $0x158] sm:$0xff]
    %v146 = vld [vmem:[%s1 + $0x160] sm:$0xff]
    %v147 = vld [vmem:[%s1 + $0x168] sm:$0xff]
    %v148 = vld [vmem:[%s1 + $0x170] sm:$0xff]
    %v149 = vld [vmem:[%s1 + $0x178] sm:$0xff]
    %v150 = vpack.c.bf16 %v108, %v102
    %v151 = vpack.c.bf16 %v109, %v103
    %v152 = vpack.c.bf16 %v110, %v104
    %v153 = vpack.c.bf16 %v111, %v105
    %v154 = vpack.c.bf16 %v112, %v106
    %v155 = vpack.c.bf16 %v113, %v107
    %v156 = vpack.c.bf16 %v120, %v114
    %v157 = vpack.c.bf16 %v121, %v115
    %v158 = vpack.c.bf16 %v122, %v116
    %v159 = vpack.c.bf16 %v123, %v117
    %v160 = vpack.c.bf16 %v124, %v118
    %v161 = vpack.c.bf16 %v125, %v119
    %v162 = vpack.c.bf16 %v132, %v126
    %v163 = vpack.c.bf16 %v133, %v127
    %v164 = vpack.c.bf16 %v134, %v128
    %v165 = vpack.c.bf16 %v135, %v129
    %v166 = vpack.c.bf16 %v136, %v130
    %v167 = vpack.c.bf16 %v137, %v131
    %v168 = vpack.c.bf16 %v144, %v138
    %v169 = vpack.c.bf16 %v145, %v139
    %v170 = vpack.c.bf16 %v146, %v140
    %v171 = vpack.c.bf16 %v147, %v141
    %v172 = vpack.c.bf16 %v148, %v142
    %v173 = vpack.c.bf16 %v149, %v143
    %v174 = vld [vmem:[%s6] sm:$0xf]
    %v175 = vld [vmem:[%s6 + $0x4] sm:$0xf]
    %v176 = vld [vmem:[%s6 + $0x8] sm:$0xf]
    %v177 = vld [vmem:[%s6 + $0xc] sm:$0xf]
    %v178 = vld [vmem:[%s6 + $0x10] sm:$0xf]
    %v179 = vld [vmem:[%s6 + $0x14] sm:$0xf]
    %v180 = vld [vmem:[%s6 + $0x18] sm:$0xf]
    %v181 = vld [vmem:[%s6 + $0x1c] sm:$0xf]
    %v182 = vld [vmem:[%s6 + $0x20] sm:$0xf]
    %v183 = vld [vmem:[%s6 + $0x24] sm:$0xf]
    %v184 = vld [vmem:[%s6 + $0x28] sm:$0xf]
    %v185 = vld [vmem:[%s6 + $0x2c] sm:$0xf]
    %v186 = vld [vmem:[%s6 + $0x30] sm:$0xf]
    %v187 = vld [vmem:[%s6 + $0x34] sm:$0xf]
    %v188 = vld [vmem:[%s6 + $0x38] sm:$0xf]
    %v189 = vld [vmem:[%s6 + $0x3c] sm:$0xf]
    %v190 = vld [vmem:[%s6 + $0x40] sm:$0xf]
    %v191 = vld [vmem:[%s6 + $0x44] sm:$0xf]
    %v192 = vld [vmem:[%s6 + $0x48] sm:$0xf]
    %v193 = vld [vmem:[%s6 + $0x4c] sm:$0xf]
    %v194 = vld [vmem:[%s6 + $0x50] sm:$0xf]
    %v195 = vld [vmem:[%s6 + $0x54] sm:$0xf]
    %v196 = vld [vmem:[%s6 + $0x58] sm:$0xf]
    %v197 = vld [vmem:[%s6 + $0x5c] sm:$0xf]
    %v198 = vld [vmem:[%s6 + $0x60] sm:$0xf]
    %v199 = vld [vmem:[%s6 + $0x64] sm:$0xf]
    %v200 = vld [vmem:[%s6 + $0x68] sm:$0xf]
    %v201 = vld [vmem:[%s6 + $0x6c] sm:$0xf]
    %v202 = vld [vmem:[%s6 + $0x70] sm:$0xf]
    %v203 = vld [vmem:[%s6 + $0x74] sm:$0xf]
    %v204 = vld [vmem:[%s6 + $0x78] sm:$0xf]
    %v205 = vld [vmem:[%s6 + $0x7c] sm:$0xf]
    %v206 = vld [vmem:[%s6 + $0x80] sm:$0xf]
    %v207 = vld [vmem:[%s6 + $0x84] sm:$0xf]
    %v208 = vld [vmem:[%s6 + $0x88] sm:$0xf]
    %v209 = vld [vmem:[%s6 + $0x8c] sm:$0xf]
    %v210 = vld [vmem:[%s6 + $0x90] sm:$0xf]
    %v211 = vld [vmem:[%s6 + $0x94] sm:$0xf]
    %v212 = vld [vmem:[%s6 + $0x98] sm:$0xf]
    %v213 = vld [vmem:[%s6 + $0x9c] sm:$0xf]
    %v214 = vld [vmem:[%s6 + $0xa0] sm:$0xf]
    %v215 = vld [vmem:[%s6 + $0xa4] sm:$0xf]
    %v216 = vld [vmem:[%s6 + $0xa8] sm:$0xf]
    %v217 = vld [vmem:[%s6 + $0xac] sm:$0xf]
    %v218 = vld [vmem:[%s6 + $0xb0] sm:$0xf]
    %v219 = vld [vmem:[%s6 + $0xb4] sm:$0xf]
    %v220 = vld [vmem:[%s6 + $0xb8] sm:$0xf]
    %v221 = vld [vmem:[%s6 + $0xbc] sm:$0xf]
    %v222 = vld [vmem:[%s6 + $0xc0] sm:$0xf]
    %v223 = vld [vmem:[%s6 + $0xc4] sm:$0xf]
    %v224 = vld [vmem:[%s6 + $0xc8] sm:$0xf]
    %v225 = vld [vmem:[%s6 + $0xcc] sm:$0xf]
    %v226 = vld [vmem:[%s6 + $0xd0] sm:$0xf]
    %v227 = vld [vmem:[%s6 + $0xd4] sm:$0xf]
    %v228 = vld [vmem:[%s6 + $0xd8] sm:$0xf]
    %v229 = vld [vmem:[%s6 + $0xdc] sm:$0xf]
    %v230 = vld [vmem:[%s6 + $0xe0] sm:$0xf]
    %v231 = vld [vmem:[%s6 + $0xe4] sm:$0xf]
    %v232 = vld [vmem:[%s6 + $0xe8] sm:$0xf]
    %v233 = vld [vmem:[%s6 + $0xec] sm:$0xf]
    %v234 = vld [vmem:[%s6 + $0xf0] sm:$0xf]
    %v235 = vld [vmem:[%s6 + $0xf4] sm:$0xf]
    %v236 = vld [vmem:[%s6 + $0xf8] sm:$0xf]
    %v237 = vld [vmem:[%s6 + $0xfc] sm:$0xf]
    %v238 = vld [vmem:[%s6 + $0x100] sm:$0xf]
    %v239 = vld [vmem:[%s6 + $0x104] sm:$0xf]
    %v240 = vld [vmem:[%s6 + $0x108] sm:$0xf]
    %v241 = vld [vmem:[%s6 + $0x10c] sm:$0xf]
    %v242 = vld [vmem:[%s6 + $0x110] sm:$0xf]
    %v243 = vld [vmem:[%s6 + $0x114] sm:$0xf]
    %v244 = vld [vmem:[%s6 + $0x118] sm:$0xf]
    %v245 = vld [vmem:[%s6 + $0x11c] sm:$0xf]
    %v246 = vld [vmem:[%s6 + $0x120] sm:$0xf]
    %v247 = vld [vmem:[%s6 + $0x124] sm:$0xf]
    %v248 = vld [vmem:[%s6 + $0x128] sm:$0xf]
    %v249 = vld [vmem:[%s6 + $0x12c] sm:$0xf]
    %v250 = vld [vmem:[%s6 + $0x130] sm:$0xf]
    %v251 = vld [vmem:[%s6 + $0x134] sm:$0xf]
    %v252 = vld [vmem:[%s6 + $0x138] sm:$0xf]
    %v253 = vld [vmem:[%s6 + $0x13c] sm:$0xf]
    %v254 = vld [vmem:[%s6 + $0x140] sm:$0xf]
    %v255 = vld [vmem:[%s6 + $0x144] sm:$0xf]
    %v256 = vld [vmem:[%s6 + $0x148] sm:$0xf]
    %v257 = vld [vmem:[%s6 + $0x14c] sm:$0xf]
    %v258 = vld [vmem:[%s6 + $0x150] sm:$0xf]
    %v259 = vld [vmem:[%s6 + $0x154] sm:$0xf]
    %v260 = vld [vmem:[%s6 + $0x158] sm:$0xf]
    %v261 = vld [vmem:[%s6 + $0x15c] sm:$0xf]
    %v262 = vld [vmem:[%s6 + $0x160] sm:$0xf]
    %v263 = vld [vmem:[%s6 + $0x164] sm:$0xf]
    %v264 = vld [vmem:[%s6 + $0x168] sm:$0xf]
    %v265 = vld [vmem:[%s6 + $0x16c] sm:$0xf]
    %v266 = vld [vmem:[%s6 + $0x170] sm:$0xf]
    %v267 = vld [vmem:[%s6 + $0x174] sm:$0xf]
    %v268 = vld [vmem:[%s6 + $0x178] sm:$0xf]
    %v269 = vld [vmem:[%s6 + $0x17c] sm:$0xf]
    %v270 = vld [vmem:[%s7] sm:$0x1]
    %v272 = vlaneseq
    %v273 = vshrl.u32 %v272, 7
    %v274 = vsub.s32 0, %v273
    %v275 = vrot.slane %v270, %v274
    %v373 = vunpack.c.l.b16 %v174
    %v374 = vunpack.c.l.b16 %v175
    %v375 = vunpack.c.l.b16 %v176
    %v376 = vunpack.c.l.b16 %v177
    %v377 = vunpack.c.l.b16 %v178
    %v378 = vunpack.c.l.b16 %v179
    %v379 = vunpack.c.l.b16 %v180
    %v380 = vunpack.c.l.b16 %v181
    %v381 = vunpack.c.l.b16 %v182
    %v382 = vunpack.c.l.b16 %v183
    %v383 = vunpack.c.l.b16 %v184
    %v384 = vunpack.c.l.b16 %v185
    %v385 = vunpack.c.l.b16 %v186
    %v386 = vunpack.c.l.b16 %v187
    %v387 = vunpack.c.l.b16 %v188
    %v388 = vunpack.c.l.b16 %v189
    %v389 = vunpack.c.l.b16 %v190
    %v390 = vunpack.c.l.b16 %v191
    %v391 = vunpack.c.l.b16 %v192
    %v392 = vunpack.c.l.b16 %v193
    %v393 = vunpack.c.l.b16 %v194
    %v394 = vunpack.c.l.b16 %v195
    %v395 = vunpack.c.l.b16 %v196
    %v396 = vunpack.c.l.b16 %v197
    %v397 = vunpack.c.l.b16 %v198
    %v398 = vunpack.c.l.b16 %v199
    %v399 = vunpack.c.l.b16 %v200
    %v400 = vunpack.c.l.b16 %v201
    %v401 = vunpack.c.l.b16 %v202
    %v402 = vunpack.c.l.b16 %v203
    %v403 = vunpack.c.l.b16 %v204
    %v404 = vunpack.c.l.b16 %v205
    %v405 = vunpack.c.l.b16 %v206
    %v406 = vunpack.c.l.b16 %v207
    %v407 = vunpack.c.l.b16 %v208
    %v408 = vunpack.c.l.b16 %v209
    %v409 = vunpack.c.l.b16 %v210
    %v410 = vunpack.c.l.b16 %v211
    %v411 = vunpack.c.l.b16 %v212
    %v412 = vunpack.c.l.b16 %v213
    %v413 = vunpack.c.l.b16 %v214
    %v414 = vunpack.c.l.b16 %v215
    %v415 = vunpack.c.l.b16 %v216
    %v416 = vunpack.c.l.b16 %v217
    %v417 = vunpack.c.l.b16 %v218
    %v418 = vunpack.c.l.b16 %v219
    %v419 = vunpack.c.l.b16 %v220
    %v420 = vunpack.c.l.b16 %v221
    %v421 = vunpack.c.l.b16 %v222
    %v422 = vunpack.c.l.b16 %v223
    %v423 = vunpack.c.l.b16 %v224
    %v424 = vunpack.c.l.b16 %v225
    %v425 = vunpack.c.l.b16 %v226
    %v426 = vunpack.c.l.b16 %v227
    %v427 = vunpack.c.l.b16 %v228
    %v428 = vunpack.c.l.b16 %v229
    %v429 = vunpack.c.l.b16 %v230
    %v430 = vunpack.c.l.b16 %v231
    %v431 = vunpack.c.l.b16 %v232
    %v432 = vunpack.c.l.b16 %v233
    %v433 = vunpack.c.l.b16 %v234
    %v434 = vunpack.c.l.b16 %v235
    %v435 = vunpack.c.l.b16 %v236
    %v436 = vunpack.c.l.b16 %v237
    %v437 = vunpack.c.l.b16 %v238
    %v438 = vunpack.c.l.b16 %v239
    %v439 = vunpack.c.l.b16 %v240
    %v440 = vunpack.c.l.b16 %v241
    %v441 = vunpack.c.l.b16 %v242
    %v442 = vunpack.c.l.b16 %v243
    %v443 = vunpack.c.l.b16 %v244
    %v444 = vunpack.c.l.b16 %v245
    %v445 = vunpack.c.l.b16 %v246
    %v446 = vunpack.c.l.b16 %v247
    %v447 = vunpack.c.l.b16 %v248
    %v448 = vunpack.c.l.b16 %v249
    %v449 = vunpack.c.l.b16 %v250
    %v450 = vunpack.c.l.b16 %v251
    %v451 = vunpack.c.l.b16 %v252
    %v452 = vunpack.c.l.b16 %v253
    %v453 = vunpack.c.l.b16 %v254
    %v454 = vunpack.c.l.b16 %v255
    %v455 = vunpack.c.l.b16 %v256
    %v456 = vunpack.c.l.b16 %v257
    %v457 = vunpack.c.l.b16 %v258
    %v458 = vunpack.c.l.b16 %v259
    %v459 = vunpack.c.l.b16 %v260
    %v460 = vunpack.c.l.b16 %v261
    %v461 = vunpack.c.l.b16 %v262
    %v462 = vunpack.c.l.b16 %v263
    %v463 = vunpack.c.l.b16 %v264
    %v464 = vunpack.c.l.b16 %v265
    %v465 = vunpack.c.l.b16 %v266
    %v466 = vunpack.c.l.b16 %v267
    %v467 = vunpack.c.l.b16 %v268
    %v468 = vunpack.c.l.b16 %v269
    %v469 = vpack.c.b16 %v374, %v373
    %v470 = vpack.c.b16 %v376, %v375
    %v471 = vpack.c.b16 %v378, %v377
    %v472 = vpack.c.b16 %v380, %v379
    %v473 = vpack.c.b16 %v382, %v381
    %v474 = vpack.c.b16 %v384, %v383
    %v475 = vpack.c.b16 %v386, %v385
    %v476 = vpack.c.b16 %v388, %v387
    %v477 = vpack.c.b16 %v390, %v389
    %v478 = vpack.c.b16 %v392, %v391
    %v479 = vpack.c.b16 %v394, %v393
    %v480 = vpack.c.b16 %v396, %v395
    %v481 = vpack.c.b16 %v398, %v397
    %v482 = vpack.c.b16 %v400, %v399
    %v483 = vpack.c.b16 %v402, %v401
    %v484 = vpack.c.b16 %v404, %v403
    %v485 = vpack.c.b16 %v406, %v405
    %v486 = vpack.c.b16 %v408, %v407
    %v487 = vpack.c.b16 %v410, %v409
    %v488 = vpack.c.b16 %v412, %v411
    %v489 = vpack.c.b16 %v414, %v413
    %v490 = vpack.c.b16 %v416, %v415
    %v491 = vpack.c.b16 %v418, %v417
    %v492 = vpack.c.b16 %v420, %v419
    %v493 = vpack.c.b16 %v422, %v421
    %v494 = vpack.c.b16 %v424, %v423
    %v495 = vpack.c.b16 %v426, %v425
    %v496 = vpack.c.b16 %v428, %v427
    %v497 = vpack.c.b16 %v430, %v429
    %v498 = vpack.c.b16 %v432, %v431
    %v499 = vpack.c.b16 %v434, %v433
    %v500 = vpack.c.b16 %v436, %v435
    %v501 = vpack.c.b16 %v438, %v437
    %v502 = vpack.c.b16 %v440, %v439
    %v503 = vpack.c.b16 %v442, %v441
    %v504 = vpack.c.b16 %v444, %v443
    %v505 = vpack.c.b16 %v446, %v445
    %v506 = vpack.c.b16 %v448, %v447
    %v507 = vpack.c.b16 %v450, %v449
    %v508 = vpack.c.b16 %v452, %v451
    %v509 = vpack.c.b16 %v454, %v453
    %v510 = vpack.c.b16 %v456, %v455
    %v511 = vpack.c.b16 %v458, %v457
    %v512 = vpack.c.b16 %v460, %v459
    %v513 = vpack.c.b16 %v462, %v461
    %v514 = vpack.c.b16 %v464, %v463
    %v515 = vpack.c.b16 %v466, %v465
    %v516 = vpack.c.b16 %v468, %v467
    %565 = vmatprep.subr.bf16.mxu0 0
    %566 = vmatpush1.bf16.msra.mxu0 %v469
    %567 = vmatprep.subr.bf16.mxu0 0
    %568 = vmatpush1.bf16.msra.mxu0 %v470
    %569 = vmatprep.subr.bf16.mxu0 0
    %570 = vmatpush1.bf16.msra.mxu0 %v471
    %571 = vmatprep.subr.bf16.mxu0 0
    %572 = vmatpush1.bf16.msra.mxu0 %v472
    %573 = vmatprep.subr.bf16.mxu0 0
    %574 = vmatpush1.bf16.msra.mxu0 %v473
    %575 = vmatprep.subr.bf16.mxu0 0
    %576 = vmatpush1.bf16.msra.mxu0 %v474
    %577 = vmatprep.subr.bf16.mxu0 0
    %578 = vmatpush1.bf16.msra.mxu0 %v475
    %579 = vmatprep.subr.bf16.mxu0 0
    %580 = vmatpush1.bf16.msra.mxu0 %v476
    %581 = vmatprep.subr.bf16.mxu0 0
    %582 = vmatpush1.bf16.msra.mxu0 %v477
    %583 = vmatprep.subr.bf16.mxu0 0
    %584 = vmatpush1.bf16.msra.mxu0 %v478
    %585 = vmatprep.subr.bf16.mxu0 0
    %586 = vmatpush1.bf16.msra.mxu0 %v479
    %587 = vmatprep.subr.bf16.mxu0 0
    %588 = vmatpush1.bf16.msra.mxu0 %v480
    %589 = vmatprep.subr.bf16.mxu0 0
    %590 = vmatpush1.bf16.msra.mxu0 %v481
    %591 = vmatprep.subr.bf16.mxu0 0
    %592 = vmatpush1.bf16.msra.mxu0 %v482
    %593 = vmatprep.subr.bf16.mxu0 0
    %594 = vmatpush1.bf16.msra.mxu0 %v483
    %595 = vmatprep.subr.bf16.mxu0 0
    %596 = vmatpush1.bf16.msra.mxu0 %v484
    %597 = vmatprep.mubr.bf16.mxu0 %v151
    %598 = vmatmul.mubr.bf16.gmra.mrb[0].mxu0 %v150
    %v599 = vpop.f32.mrb[0].mxu0
    %v600 = vadd.f32 %v275, %v599
    %v601 = vpop.f32.mrb[0].mxu0
    %v602 = vpop.f32.mrb[0].mxu0
    %v603 = vadd.f32 %v275, %v602
    %v604 = vpop.f32.mrb[0].mxu0
    %605 = vmatprep.mubr.bf16.mxu0 %v157
    %606 = vmatmul.mubr.bf16.gmra.mrb[0].mxu0 %v156
    %v607 = vpop.f32.mrb[0].mxu0
    %v608 = vadd.f32 %v275, %v607
    %v609 = vpop.f32.mrb[0].mxu0
    %v610 = vpop.f32.mrb[0].mxu0
    %v611 = vadd.f32 %v275, %v610
    %v612 = vpop.f32.mrb[0].mxu0
    %613 = vmatprep.mubr.bf16.mxu0 %v163
    %614 = vmatmul.mubr.bf16.gmra.mrb[0].mxu0 %v162
    %v615 = vpop.f32.mrb[0].mxu0
    %v616 = vadd.f32 %v275, %v615
    %v617 = vpop.f32.mrb[0].mxu0
    %v618 = vpop.f32.mrb[0].mxu0
    %v619 = vadd.f32 %v275, %v618
    %v620 = vpop.f32.mrb[0].mxu0
    %621 = vmatprep.mubr.bf16.mxu0 %v169
    %622 = vmatmul.mubr.bf16.gmra.mrb[0].mxu0 %v168
    %v623 = vpop.f32.mrb[0].mxu0
    %v624 = vadd.f32 %v275, %v623
    %v625 = vpop.f32.mrb[0].mxu0
    %v626 = vpop.f32.mrb[0].mxu0
    %v627 = vadd.f32 %v275, %v626
    %v628 = vpop.f32.mrb[0].mxu0
    %629 = vdwg.mxu0
    %630 = vmatprep.subr.bf16.mxu0 0
    %631 = vmatpush1.bf16.msra.mxu0 %v485
    %632 = vmatprep.subr.bf16.mxu0 0
    %633 = vmatpush1.bf16.msra.mxu0 %v486
    %634 = vmatprep.subr.bf16.mxu0 0
    %635 = vmatpush1.bf16.msra.mxu0 %v487
    %636 = vmatprep.subr.bf16.mxu0 0
    %637 = vmatpush1.bf16.msra.mxu0 %v488
    %638 = vmatprep.subr.bf16.mxu0 0
    %639 = vmatpush1.bf16.msra.mxu0 %v489
    %640 = vmatprep.subr.bf16.mxu0 0
    %641 = vmatpush1.bf16.msra.mxu0 %v490
    %642 = vmatprep.subr.bf16.mxu0 0
    %643 = vmatpush1.bf16.msra.mxu0 %v491
    %644 = vmatprep.subr.bf16.mxu0 0
    %645 = vmatpush1.bf16.msra.mxu0 %v492
    %646 = vmatprep.subr.bf16.mxu0 0
    %647 = vmatpush1.bf16.msra.mxu0 %v493
    %648 = vmatprep.subr.bf16.mxu0 0
    %649 = vmatpush1.bf16.msra.mxu0 %v494
    %650 = vmatprep.subr.bf16.mxu0 0
    %651 = vmatpush1.bf16.msra.mxu0 %v495
    %652 = vmatprep.subr.bf16.mxu0 0
    %653 = vmatpush1.bf16.msra.mxu0 %v496
    %654 = vmatprep.subr.bf16.mxu0 0
    %655 = vmatpush1.bf16.msra.mxu0 %v497
    %656 = vmatprep.subr.bf16.mxu0 0
    %657 = vmatpush1.bf16.msra.mxu0 %v498
    %658 = vmatprep.subr.bf16.mxu0 0
    %659 = vmatpush1.bf16.msra.mxu0 %v499
    %660 = vmatprep.subr.bf16.mxu0 0
    %661 = vmatpush1.bf16.msra.mxu0 %v500
    %662 = vmatprep.mubr.bf16.mxu0 %v153
    %663 = vmatmul.mubr.bf16.gmra.mrb[0].mxu0 %v152
    %v664 = vpop.f32.mrb[0].mxu0
    %v665 = vadd.f32 %v600, %v664
    %v666 = vpop.f32.mrb[0].mxu0
    %v667 = vpop.f32.mrb[0].mxu0
    %v668 = vadd.f32 %v603, %v667
    %v669 = vpop.f32.mrb[0].mxu0
    %670 = vmatprep.mubr.bf16.mxu0 %v159
    %671 = vmatmul.mubr.bf16.gmra.mrb[0].mxu0 %v158
    %v672 = vpop.f32.mrb[0].mxu0
    %v673 = vadd.f32 %v608, %v672
    %v674 = vpop.f32.mrb[0].mxu0
    %v675 = vpop.f32.mrb[0].mxu0
    %v676 = vadd.f32 %v611, %v675
    %v677 = vpop.f32.mrb[0].mxu0
    %678 = vmatprep.mubr.bf16.mxu0 %v165
    %679 = vmatmul.mubr.bf16.gmra.mrb[0].mxu0 %v164
    %v680 = vpop.f32.mrb[0].mxu0
    %v681 = vadd.f32 %v616, %v680
    %v682 = vpop.f32.mrb[0].mxu0
    %v683 = vpop.f32.mrb[0].mxu0
    %v684 = vadd.f32 %v619, %v683
    %v685 = vpop.f32.mrb[0].mxu0
    %686 = vmatprep.mubr.bf16.mxu0 %v171
    %687 = vmatmul.mubr.bf16.gmra.mrb[0].mxu0 %v170
    %v688 = vpop.f32.mrb[0].mxu0
    %v689 = vadd.f32 %v624, %v688
    %v690 = vpop.f32.mrb[0].mxu0
    %v691 = vpop.f32.mrb[0].mxu0
    %v692 = vadd.f32 %v627, %v691
    %v693 = vpop.f32.mrb[0].mxu0
    %694 = vdwg.mxu0
    %695 = vmatprep.subr.bf16.mxu0 0
    %696 = vmatpush1.bf16.msra.mxu0 %v501
    %697 = vmatprep.subr.bf16.mxu0 0
    %698 = vmatpush1.bf16.msra.mxu0 %v502
    %699 = vmatprep.subr.bf16.mxu0 0
    %700 = vmatpush1.bf16.msra.mxu0 %v503
    %701 = vmatprep.subr.bf16.mxu0 0
    %702 = vmatpush1.bf16.msra.mxu0 %v504
    %703 = vmatprep.subr.bf16.mxu0 0
    %704 = vmatpush1.bf16.msra.mxu0 %v505
    %705 = vmatprep.subr.bf16.mxu0 0
    %706 = vmatpush1.bf16.msra.mxu0 %v506
    %707 = vmatprep.subr.bf16.mxu0 0
    %708 = vmatpush1.bf16.msra.mxu0 %v507
    %709 = vmatprep.subr.bf16.mxu0 0
    %710 = vmatpush1.bf16.msra.mxu0 %v508
    %711 = vmatprep.subr.bf16.mxu0 0
    %712 = vmatpush1.bf16.msra.mxu0 %v509
    %713 = vmatprep.subr.bf16.mxu0 0
    %714 = vmatpush1.bf16.msra.mxu0 %v510
    %715 = vmatprep.subr.bf16.mxu0 0
    %716 = vmatpush1.bf16.msra.mxu0 %v511
    %717 = vmatprep.subr.bf16.mxu0 0
    %718 = vmatpush1.bf16.msra.mxu0 %v512
    %719 = vmatprep.subr.bf16.mxu0 0
    %720 = vmatpush1.bf16.msra.mxu0 %v513
    %721 = vmatprep.subr.bf16.mxu0 0
    %722 = vmatpush1.bf16.msra.mxu0 %v514
    %723 = vmatprep.subr.bf16.mxu0 0
    %724 = vmatpush1.bf16.msra.mxu0 %v515
    %725 = vmatprep.subr.bf16.mxu0 0
    %726 = vmatpush1.bf16.msra.mxu0 %v516
    %727 = vmatprep.mubr.bf16.mxu0 %v155
    %728 = vmatmul.mubr.bf16.gmra.mrb[0].mxu0 %v154
    %v729 = vpop.f32.mrb[0].mxu0
    %v730 = vadd.f32 %v665, %v729
    %v731 = vpop.f32.mrb[0].mxu0
    %v732 = vpop.f32.mrb[0].mxu0
    %v733 = vadd.f32 %v668, %v732
    %v734 = vpop.f32.mrb[0].mxu0
    %735 = vmatprep.mubr.bf16.mxu0 %v161
    %736 = vmatmul.mubr.bf16.gmra.mrb[0].mxu0 %v160
    %v737 = vpop.f32.mrb[0].mxu0
    %v738 = vadd.f32 %v673, %v737
    %v739 = vpop.f32.mrb[0].mxu0
    %v740 = vpop.f32.mrb[0].mxu0
    %v741 = vadd.f32 %v676, %v740
    %v742 = vpop.f32.mrb[0].mxu0
    %743 = vmatprep.mubr.bf16.mxu0 %v167
    %744 = vmatmul.mubr.bf16.gmra.mrb[0].mxu0 %v166
    %v745 = vpop.f32.mrb[0].mxu0
    %v746 = vadd.f32 %v681, %v745
    %v747 = vpop.f32.mrb[0].mxu0
    %v748 = vpop.f32.mrb[0].mxu0
    %v749 = vadd.f32 %v684, %v748
    %v750 = vpop.f32.mrb[0].mxu0
    %751 = vmatprep.mubr.bf16.mxu0 %v173
    %752 = vmatmul.mubr.bf16.gmra.mrb[0].mxu0 %v172
    %v753 = vpop.f32.mrb[0].mxu0
    %v754 = vadd.f32 %v689, %v753
    %v755 = vpop.f32.mrb[0].mxu0
    %v756 = vpop.f32.mrb[0].mxu0
    %v757 = vadd.f32 %v692, %v756
    %v758 = vpop.f32.mrb[0].mxu0
    %759 = vdwg.mxu0
    %v760 = vmax.f32 %v730, 0.0
    %v761 = vmax.f32 %v733, 0.0
    %v762 = vmax.f32 %v738, 0.0
    %v763 = vmax.f32 %v741, 0.0
    %v764 = vmax.f32 %v746, 0.0
    %v765 = vmax.f32 %v749, 0.0
    %v766 = vmax.f32 %v754, 0.0
    %v767 = vmax.f32 %v757, 0.0
    %v768 = vpack.c.bf16 %v761, %v760
    %v769 = vpack.c.bf16 %v763, %v762
    %v770 = vpack.c.bf16 %v765, %v764
    %v771 = vpack.c.bf16 %v767, %v766
    %v772 = vld [vmem:[%s8] sm:$0xf]
    %v773 = vld [vmem:[%s8 + $0x4] sm:$0xf]
    %v774 = vld [vmem:[%s8 + $0x8] sm:$0xf]
    %v775 = vld [vmem:[%s8 + $0xc] sm:$0xf]
    %v776 = vld [vmem:[%s9] sm:$0x1]
    %v778 = vlaneseq
    %v779 = vshrl.u32 %v778, 7
    %v780 = vsub.s32 0, %v779
    %v781 = vrot.slane %v776, %v780
    %v787 = vunpack.c.l.b16 %v772
    %v788 = vunpack.c.l.b16 %v773
    %v789 = vunpack.c.l.b16 %v774
    %v790 = vunpack.c.l.b16 %v775
    %v791 = vpack.c.b16 %v788, %v787
    %v792 = vpack.c.b16 %v790, %v789
    %vm795 = vcmask 261120
    %v797 = vsel %vm795, %v768, 0
    %v800 = vsel %vm795, %v769, 0
    %v803 = vsel %vm795, %v770, 0
    %v806 = vsel %vm795, %v771, 0
    %808 = vmatprep.subr.bf16.mxu0 0
    %809 = vmatpush1.bf16.msra.mxu0 %v791
    %810 = vmatprep.subr.bf16.mxu0 0
    %811 = vmatpush1.bf16.msra.mxu0 %v792
    %812 = vmatprep.subr.bf16.mxu0 0
    %813 = vmatpush1.bf16.msra.mxu0 0
    %814 = vmatprep.subr.bf16.mxu0 0
    %815 = vmatpush1.bf16.msra.mxu0 0
    %816 = vmatprep.subr.bf16.mxu0 0
    %817 = vmatpush1.bf16.msra.mxu0 0
    %818 = vmatprep.subr.bf16.mxu0 0
    %819 = vmatpush1.bf16.msra.mxu0 0
    %820 = vmatprep.subr.bf16.mxu0 0
    %821 = vmatpush1.bf16.msra.mxu0 0
    %822 = vmatprep.subr.bf16.mxu0 0
    %823 = vmatpush1.bf16.msra.mxu0 0
    %824 = vmatprep.subr.bf16.mxu0 0
    %825 = vmatpush1.bf16.msra.mxu0 0
    %826 = vmatprep.subr.bf16.mxu0 0
    %827 = vmatpush1.bf16.msra.mxu0 0
    %828 = vmatprep.subr.bf16.mxu0 0
    %829 = vmatpush1.bf16.msra.mxu0 0
    %830 = vmatprep.subr.bf16.mxu0 0
    %831 = vmatpush1.bf16.msra.mxu0 0
    %832 = vmatprep.subr.bf16.mxu0 0
    %833 = vmatpush1.bf16.msra.mxu0 0
    %834 = vmatprep.subr.bf16.mxu0 0
    %835 = vmatpush1.bf16.msra.mxu0 0
    %836 = vmatprep.subr.bf16.mxu0 0
    %837 = vmatpush1.bf16.msra.mxu0 0
    %838 = vmatprep.subr.bf16.mxu0 0
    %839 = vmatpush1.bf16.msra.mxu0 0
    %840 = vmatprep.mubr.bf16.mxu0 0
    %841 = vmatmul.mubr.bf16.gmra.mrb[0].mxu0 %v797
    %v842 = vpop.f32.mrb[0].mxu0
    %v843 = vadd.f32 %v781, %v842
    %v844 = vpop.f32.mrb[0].mxu0
    %v845 = vpop.f32.mrb[0].mxu0
    %v846 = vadd.f32 %v781, %v845
    %v847 = vpop.f32.mrb[0].mxu0
    %848 = vmatprep.mubr.bf16.mxu0 0
    %849 = vmatmul.mubr.bf16.gmra.mrb[0].mxu0 %v800
    %v850 = vpop.f32.mrb[0].mxu0
    %v851 = vadd.f32 %v781, %v850
    %v852 = vpop.f32.mrb[0].mxu0
    %v853 = vpop.f32.mrb[0].mxu0
    %v854 = vadd.f32 %v781, %v853
    %v855 = vpop.f32.mrb[0].mxu0
    %856 = vmatprep.mubr.bf16.mxu0 0
    %857 = vmatmul.mubr.bf16.gmra.mrb[0].mxu0 %v803
    %v858 = vpop.f32.mrb[0].mxu0
    %v859 = vadd.f32 %v781, %v858
    %v860 = vpop.f32.mrb[0].mxu0
    %v861 = vpop.f32.mrb[0].mxu0
    %v862 = vadd.f32 %v781, %v861
    %v863 = vpop.f32.mrb[0].mxu0
    %864 = vmatprep.mubr.bf16.mxu0 0
    %865 = vmatmul.mubr.bf16.gmra.mrb[0].mxu0 %v806
    %v866 = vpop.f32.mrb[0].mxu0
    %v867 = vadd.f32 %v781, %v866
    %v868 = vpop.f32.mrb[0].mxu0
    %v869 = vpop.f32.mrb[0].mxu0
    %v870 = vadd.f32 %v781, %v869
    %v871 = vpop.f32.mrb[0].mxu0
    %872 = vdwg.mxu0
    %v873 = vld [vmem:[%s10] sm:$0xf]
    %v874 = vld [vmem:[%s10 + $0x4] sm:$0xf]
    %v875 = vld [vmem:[%s10 + $0x8] sm:$0xf]
    %v876 = vld [vmem:[%s10 + $0xc] sm:$0xf]
    %v877 = vld [vmem:[%s11] sm:$0x1]
    %v879 = vlaneseq
    %v880 = vshrl.u32 %v879, 7
    %v881 = vsub.s32 0, %v880
    %v882 = vrot.slane %v877, %v881
    %v888 = vunpack.c.l.b16 %v873
    %v889 = vunpack.c.l.b16 %v874
    %v890 = vunpack.c.l.b16 %v875
    %v891 = vunpack.c.l.b16 %v876
    %v892 = vpack.c.b16 %v889, %v888
    %v893 = vpack.c.b16 %v891, %v890
    %896 = vmatprep.subr.bf16.mxu0 0
    %897 = vmatpush1.bf16.msra.mxu0 %v892
    %898 = vmatprep.subr.bf16.mxu0 0
    %899 = vmatpush1.bf16.msra.mxu0 %v893
    %900 = vmatprep.subr.bf16.mxu0 0
    %901 = vmatpush1.bf16.msra.mxu0 0
    %902 = vmatprep.subr.bf16.mxu0 0
    %903 = vmatpush1.bf16.msra.mxu0 0
    %904 = vmatprep.subr.bf16.mxu0 0
    %905 = vmatpush1.bf16.msra.mxu0 0
    %906 = vmatprep.subr.bf16.mxu0 0
    %907 = vmatpush1.bf16.msra.mxu0 0
    %908 = vmatprep.subr.bf16.mxu0 0
    %909 = vmatpush1.bf16.msra.mxu0 0
    %910 = vmatprep.subr.bf16.mxu0 0
    %911 = vmatpush1.bf16.msra.mxu0 0
    %912 = vmatprep.subr.bf16.mxu0 0
    %913 = vmatpush1.bf16.msra.mxu0 0
    %914 = vmatprep.subr.bf16.mxu0 0
    %915 = vmatpush1.bf16.msra.mxu0 0
    %916 = vmatprep.subr.bf16.mxu0 0
    %917 = vmatpush1.bf16.msra.mxu0 0
    %918 = vmatprep.subr.bf16.mxu0 0
    %919 = vmatpush1.bf16.msra.mxu0 0
    %920 = vmatprep.subr.bf16.mxu0 0
    %921 = vmatpush1.bf16.msra.mxu0 0
    %922 = vmatprep.subr.bf16.mxu0 0
    %923 = vmatpush1.bf16.msra.mxu0 0
    %924 = vmatprep.subr.bf16.mxu0 0
    %925 = vmatpush1.bf16.msra.mxu0 0
    %926 = vmatprep.subr.bf16.mxu0 0
    %927 = vmatpush1.bf16.msra.mxu0 0
    %928 = vmatprep.mubr.bf16.mxu0 0
    %929 = vmatmul.mubr.bf16.gmra.mrb[0].mxu0 %v797
    %v930 = vpop.f32.mrb[0].mxu0
    %v931 = vadd.f32 %v882, %v930
    %v932 = vpop.f32.mrb[0].mxu0
    %v933 = vpop.f32.mrb[0].mxu0
    %v934 = vadd.f32 %v882, %v933
    %v935 = vpop.f32.mrb[0].mxu0
    %936 = vmatprep.mubr.bf16.mxu0 0
    %937 = vmatmul.mubr.bf16.gmra.mrb[0].mxu0 %v800
    %v938 = vpop.f32.mrb[0].mxu0
    %v939 = vadd.f32 %v882, %v938
    %v940 = vpop.f32.mrb[0].mxu0
    %v941 = vpop.f32.mrb[0].mxu0
    %v942 = vadd.f32 %v882, %v941
    %v943 = vpop.f32.mrb[0].mxu0
    %944 = vmatprep.mubr.bf16.mxu0 0
    %945 = vmatmul.mubr.bf16.gmra.mrb[0].mxu0 %v803
    %v946 = vpop.f32.mrb[0].mxu0
    %v947 = vadd.f32 %v882, %v946
    %v948 = vpop.f32.mrb[0].mxu0
    %v949 = vpop.f32.mrb[0].mxu0
    %v950 = vadd.f32 %v882, %v949
    %v951 = vpop.f32.mrb[0].mxu0
    %952 = vmatprep.mubr.bf16.mxu0 0
    %953 = vmatmul.mubr.bf16.gmra.mrb[0].mxu0 %v806
    %v954 = vpop.f32.mrb[0].mxu0
    %v955 = vadd.f32 %v882, %v954
    %v956 = vpop.f32.mrb[0].mxu0
    %v957 = vpop.f32.mrb[0].mxu0
    %v958 = vadd.f32 %v882, %v957
    %v959 = vpop.f32.mrb[0].mxu0
    %960 = vdwg.mxu0
    %v961 = vmax.f32 %v931, 0.0
    %v962 = vmax.f32 %v934, 0.0
    %v963 = vmax.f32 %v939, 0.0
    %v964 = vmax.f32 %v942, 0.0
    %v965 = vmax.f32 %v947, 0.0
    %v966 = vmax.f32 %v950, 0.0
    %v967 = vmax.f32 %v955, 0.0
    %v968 = vmax.f32 %v958, 0.0
    %v969 = vand.u32 2147483647, %v931
    %v970 = vand.u32 2147483647, %v934
    %v971 = vand.u32 2147483647, %v939
    %v972 = vand.u32 2147483647, %v942
    %v973 = vand.u32 2147483647, %v947
    %v974 = vand.u32 2147483647, %v950
    %v975 = vand.u32 2147483647, %v955
    %v976 = vand.u32 2147483647, %v958
    %v977 = vsub.f32 0.0, %v969
    %v978 = vsub.f32 0.0, %v970
    %v979 = vsub.f32 0.0, %v971
    %v980 = vsub.f32 0.0, %v972
    %v981 = vsub.f32 0.0, %v973
    %v982 = vsub.f32 0.0, %v974
    %v983 = vsub.f32 0.0, %v975
    %v984 = vsub.f32 0.0, %v976
    %v985 = vmul.f32 %v977, 1.442695
    %v986 = vpow.pop %v985
    %v987 = vmul.f32 %v978, 1.442695
    %v988 = vpow.pop %v987
    %v989 = vmul.f32 %v979, 1.442695
    %v990 = vpow.pop %v989
    %v991 = vmul.f32 %v980, 1.442695
    %v992 = vpow.pop %v991
    %v993 = vmul.f32 %v981, 1.442695
    %v994 = vpow.pop %v993
    %v995 = vmul.f32 %v982, 1.442695
    %v996 = vpow.pop %v995
    %v997 = vmul.f32 %v983, 1.442695
    %v998 = vpow.pop %v997
    %v999 = vmul.f32 %v984, 1.442695
    %v1000 = vpow.pop %v999
    %v1001 = vadd.f32 %v986, 1.0
    %v1002 = vlog2.pop %v1001
    %v1003 = vmul.f32 %v1002, 0.6931472
    %v1004 = vmul.f32 -0.5, %v986
    %v1005 = vadd.f32 %v1004, 1.0
    %v1006 = vmul.f32 %v1005, %v986
    %v1007 = vand.u32 2147483647, %v986
    %vm1008 = vcmp.lt.f32.partialorder %v1007, 0.0004427343
    %v1009 = vsel %vm1008, %v1006, %v1003
    %v1010 = vadd.f32 %v988, 1.0
    %v1011 = vlog2.pop %v1010
    %v1012 = vmul.f32 %v1011, 0.6931472
    %v1013 = vmul.f32 -0.5, %v988
    %v1014 = vadd.f32 %v1013, 1.0
    %v1015 = vmul.f32 %v1014, %v988
    %v1016 = vand.u32 2147483647, %v988
    %vm1017 = vcmp.lt.f32.partialorder %v1016, 0.0004427343
    %v1018 = vsel %vm1017, %v1015, %v1012
    %v1019 = vadd.f32 %v990, 1.0
    %v1020 = vlog2.pop %v1019
    %v1021 = vmul.f32 %v1020, 0.6931472
    %v1022 = vmul.f32 -0.5, %v990
    %v1023 = vadd.f32 %v1022, 1.0
    %v1024 = vmul.f32 %v1023, %v990
    %v1025 = vand.u32 2147483647, %v990
    %vm1026 = vcmp.lt.f32.partialorder %v1025, 0.0004427343
    %v1027 = vsel %vm1026, %v1024, %v1021
    %v1028 = vadd.f32 %v992, 1.0
    %v1029 = vlog2.pop %v1028
    %v1030 = vmul.f32 %v1029, 0.6931472
    %v1031 = vmul.f32 -0.5, %v992
    %v1032 = vadd.f32 %v1031, 1.0
    %v1033 = vmul.f32 %v1032, %v992
    %v1034 = vand.u32 2147483647, %v992
    %vm1035 = vcmp.lt.f32.partialorder %v1034, 0.0004427343
    %v1036 = vsel %vm1035, %v1033, %v1030
    %v1037 = vadd.f32 %v994, 1.0
    %v1038 = vlog2.pop %v1037
    %v1039 = vmul.f32 %v1038, 0.6931472
    %v1040 = vmul.f32 -0.5, %v994
    %v1041 = vadd.f32 %v1040, 1.0
    %v1042 = vmul.f32 %v1041, %v994
    %v1043 = vand.u32 2147483647, %v994
    %vm1044 = vcmp.lt.f32.partialorder %v1043, 0.0004427343
    %v1045 = vsel %vm1044, %v1042, %v1039
    %v1046 = vadd.f32 %v996, 1.0
    %v1047 = vlog2.pop %v1046
    %v1048 = vmul.f32 %v1047, 0.6931472
    %v1049 = vmul.f32 -0.5, %v996
    %v1050 = vadd.f32 %v1049, 1.0
    %v1051 = vmul.f32 %v1050, %v996
    %v1052 = vand.u32 2147483647, %v996
    %vm1053 = vcmp.lt.f32.partialorder %v1052, 0.0004427343
    %v1054 = vsel %vm1053, %v1051, %v1048
    %v1055 = vadd.f32 %v998, 1.0
    %v1056 = vlog2.pop %v1055
    %v1057 = vmul.f32 %v1056, 0.6931472
    %v1058 = vmul.f32 -0.5, %v998
    %v1059 = vadd.f32 %v1058, 1.0
    %v1060 = vmul.f32 %v1059, %v998
    %v1061 = vand.u32 2147483647, %v998
    %vm1062 = vcmp.lt.f32.partialorder %v1061, 0.0004427343
    %v1063 = vsel %vm1062, %v1060, %v1057
    %v1064 = vadd.f32 %v1000, 1.0
    %v1065 = vlog2.pop %v1064
    %v1066 = vmul.f32 %v1065, 0.6931472
    %v1067 = vmul.f32 -0.5, %v1000
    %v1068 = vadd.f32 %v1067, 1.0
    %v1069 = vmul.f32 %v1068, %v1000
    %v1070 = vand.u32 2147483647, %v1000
    %vm1071 = vcmp.lt.f32.partialorder %v1070, 0.0004427343
    %v1072 = vsel %vm1071, %v1069, %v1066
    %v1073 = vadd.f32 %v961, %v1009
    %v1074 = vadd.f32 %v962, %v1018
    %v1075 = vadd.f32 %v963, %v1027
    %v1076 = vadd.f32 %v964, %v1036
    %v1077 = vadd.f32 %v965, %v1045
    %v1078 = vadd.f32 %v966, %v1054
    %v1079 = vadd.f32 %v967, %v1063
    %v1080 = vadd.f32 %v968, %v1072
    %v1081 = vadd.f32 %v1073, 1e-06
    %v1082 = vadd.f32 %v1074, 1e-06
    %v1083 = vadd.f32 %v1075, 1e-06
    %v1084 = vadd.f32 %v1076, 1e-06
    %v1085 = vadd.f32 %v1077, 1e-06
    %v1086 = vadd.f32 %v1078, 1e-06
    %v1087 = vadd.f32 %v1079, 1e-06
    %v1088 = vadd.f32 %v1080, 1e-06
    %v1089 = vld [vmem:[%s3] sm:$0xff]
    %v1090 = vld [vmem:[%s3 + $0x8] sm:$0xff]
    %v1091 = vld [vmem:[%s3 + $0x10] sm:$0xff]
    %v1092 = vld [vmem:[%s3 + $0x18] sm:$0xff]
    %v1093 = vld [vmem:[%s3 + $0x20] sm:$0xff]
    %v1094 = vld [vmem:[%s3 + $0x28] sm:$0xff]
    %v1095 = vld [vmem:[%s3 + $0x30] sm:$0xff]
    %v1096 = vld [vmem:[%s3 + $0x38] sm:$0xff]
    %v1097 = vmul.f32 %v1081, %v1089
    %v1098 = vmul.f32 %v1082, %v1090
    %v1099 = vmul.f32 %v1083, %v1091
    %v1100 = vmul.f32 %v1084, %v1092
    %v1101 = vmul.f32 %v1085, %v1093
    %v1102 = vmul.f32 %v1086, %v1094
    %v1103 = vmul.f32 %v1087, %v1095
    %v1104 = vmul.f32 %v1088, %v1096
    %v1105 = vadd.f32 %v843, %v1097
    %v1106 = vadd.f32 %v846, %v1098
    %v1107 = vadd.f32 %v851, %v1099
    %v1108 = vadd.f32 %v854, %v1100
    %v1109 = vadd.f32 %v859, %v1101
    %v1110 = vadd.f32 %v862, %v1102
    %v1111 = vadd.f32 %v867, %v1103
    %v1112 = vadd.f32 %v870, %v1104
    %vm1113 = vcmask 31744
    %1114 = vst.msk [vmem:[#allocation2] sm:$0xff] %vm1113, %v1105
    %1115 = vst.msk [vmem:[#allocation2 + $0x8] sm:$0xff] %vm1113, %v1106
    %1116 = vst.msk [vmem:[#allocation2 + $0x10] sm:$0xff] %vm1113, %v1107
    %1117 = vst.msk [vmem:[#allocation2 + $0x18] sm:$0xff] %vm1113, %v1108
    %1118 = vst.msk [vmem:[#allocation2 + $0x20] sm:$0xff] %vm1113, %v1109
    %1119 = vst.msk [vmem:[#allocation2 + $0x28] sm:$0xff] %vm1113, %v1110
    %1120 = vst.msk [vmem:[#allocation2 + $0x30] sm:$0xff] %vm1113, %v1111
    %1121 = vst.msk [vmem:[#allocation2 + $0x38] sm:$0xff] %vm1113, %v1112
    %1122 = vst.msk [vmem:[#allocation3] sm:$0xff] %vm1113, %v843
    %1123 = vst.msk [vmem:[#allocation3 + $0x8] sm:$0xff] %vm1113, %v846
    %1124 = vst.msk [vmem:[#allocation3 + $0x10] sm:$0xff] %vm1113, %v851
    %1125 = vst.msk [vmem:[#allocation3 + $0x18] sm:$0xff] %vm1113, %v854
    %1126 = vst.msk [vmem:[#allocation3 + $0x20] sm:$0xff] %vm1113, %v859
    %1127 = vst.msk [vmem:[#allocation3 + $0x28] sm:$0xff] %vm1113, %v862
    %1128 = vst.msk [vmem:[#allocation3 + $0x30] sm:$0xff] %vm1113, %v867
    %1129 = vst.msk [vmem:[#allocation3 + $0x38] sm:$0xff] %vm1113, %v870
    %1130 = vst.msk [vmem:[#allocation4] sm:$0xff] %vm1113, %v1081
    %1131 = vst.msk [vmem:[#allocation4 + $0x8] sm:$0xff] %vm1113, %v1082
    %1132 = vst.msk [vmem:[#allocation4 + $0x10] sm:$0xff] %vm1113, %v1083
    %1133 = vst.msk [vmem:[#allocation4 + $0x18] sm:$0xff] %vm1113, %v1084
    %1134 = vst.msk [vmem:[#allocation4 + $0x20] sm:$0xff] %vm1113, %v1085
    %1135 = vst.msk [vmem:[#allocation4 + $0x28] sm:$0xff] %vm1113, %v1086
    %1136 = vst.msk [vmem:[#allocation4 + $0x30] sm:$0xff] %vm1113, %v1087
    %1137 = vst.msk [vmem:[#allocation4 + $0x38] sm:$0xff] %vm1113, %v1088
    %v1138 = vld [vmem:[#allocation2] sm:$0xff]
    %v1139 = vld [vmem:[#allocation2 + $0x8] sm:$0xff]
    %v1140 = vld [vmem:[#allocation2 + $0x10] sm:$0xff]
    %v1141 = vld [vmem:[#allocation2 + $0x18] sm:$0xff]
    %v1142 = vld [vmem:[#allocation2 + $0x20] sm:$0xff]
    %v1143 = vld [vmem:[#allocation2 + $0x28] sm:$0xff]
    %v1144 = vld [vmem:[#allocation2 + $0x30] sm:$0xff]
    %v1145 = vld [vmem:[%s2] sm:$0xff]
    %v1146 = vld [vmem:[%s2 + $0x8] sm:$0xff]
    %v1147 = vld [vmem:[%s2 + $0x10] sm:$0xff]
    %v1148 = vld [vmem:[%s2 + $0x18] sm:$0xff]
    %v1149 = vld [vmem:[%s2 + $0x20] sm:$0xff]
    %v1150 = vld [vmem:[%s2 + $0x28] sm:$0xff]
    %v1151 = vld [vmem:[%s2 + $0x30] sm:$0xff]
    %v1152 = vpack.c.bf16 %v1139, %v1138
    %v1153 = vpack.c.bf16 %v1141, %v1140
    %v1154 = vpack.c.bf16 %v1143, %v1142
    %v1155 = vpack.c.bf16 %v1144, %v1144
    %v1156 = vld [vmem:[%s15] sm:$0x3]
    %v1157 = vpack.c.bf16 %v1146, %v1145
    %v1158 = vpack.c.bf16 %v1148, %v1147
    %v1159 = vpack.c.bf16 %v1150, %v1149
    %v1160 = vpack.c.bf16 %v1151, %v1151
    %v1161 = vld [vmem:[%s16] sm:$0x3]
    %v1163 = vsel %vm1113, %v1157, 0
    %v1166 = vsel %vm1113, %v1158, 0
    %v1169 = vsel %vm1113, %v1159, 0
    %v1172 = vsel %vm1113, %v1160, 0
    %vm1174 = vcmask 1041408
    %v1176 = vsel %vm1174, %v1161, 0
    %1178 = vmatprep.subr.bf16.mxu0 0
    %1179 = vmatpush1.bf16.msra.mxu0 %v1176
    %1180 = vmatprep.subr.bf16.mxu0 0
    %1181 = vmatpush1.bf16.msra.mxu0 0
    %1182 = vmatprep.subr.bf16.mxu0 0
    %1183 = vmatpush1.bf16.msra.mxu0 0
    %1184 = vmatprep.subr.bf16.mxu0 0
    %1185 = vmatpush1.bf16.msra.mxu0 0
    %1186 = vmatprep.subr.bf16.mxu0 0
    %1187 = vmatpush1.bf16.msra.mxu0 0
    %1188 = vmatprep.subr.bf16.mxu0 0
    %1189 = vmatpush1.bf16.msra.mxu0 0
    %1190 = vmatprep.subr.bf16.mxu0 0
    %1191 = vmatpush1.bf16.msra.mxu0 0
    %1192 = vmatprep.subr.bf16.mxu0 0
    %1193 = vmatpush1.bf16.msra.mxu0 0
    %1194 = vmatprep.subr.bf16.mxu0 0
    %1195 = vmatpush1.bf16.msra.mxu0 0
    %1196 = vmatprep.subr.bf16.mxu0 0
    %1197 = vmatpush1.bf16.msra.mxu0 0
    %1198 = vmatprep.subr.bf16.mxu0 0
    %1199 = vmatpush1.bf16.msra.mxu0 0
    %1200 = vmatprep.subr.bf16.mxu0 0
    %1201 = vmatpush1.bf16.msra.mxu0 0
    %1202 = vmatprep.subr.bf16.mxu0 0
    %1203 = vmatpush1.bf16.msra.mxu0 0
    %1204 = vmatprep.subr.bf16.mxu0 0
    %1205 = vmatpush1.bf16.msra.mxu0 0
    %1206 = vmatprep.subr.bf16.mxu0 0
    %1207 = vmatpush1.bf16.msra.mxu0 0
    %1208 = vmatprep.subr.bf16.mxu0 0
    %1209 = vmatpush1.bf16.msra.mxu0 0
    %1210 = vmatprep.mubr.bf16.mxu0 0
    %1211 = vmatmul.mubr.bf16.gmra.mrb[0].mxu0 %v1163
    %v1212 = vpop.f32.mrb[0].mxu0
    %v1213 = vadd.f32 0.0, %v1212
    %v1214 = vpop.f32.mrb[0].mxu0
    %v1215 = vpop.f32.mrb[0].mxu0
    %v1216 = vadd.f32 0.0, %v1215
    %v1217 = vpop.f32.mrb[0].mxu0
    %1218 = vmatprep.mubr.bf16.mxu0 0
    %1219 = vmatmul.mubr.bf16.gmra.mrb[0].mxu0 %v1166
    %v1220 = vpop.f32.mrb[0].mxu0
    %v1221 = vadd.f32 0.0, %v1220
    %v1222 = vpop.f32.mrb[0].mxu0
    %v1223 = vpop.f32.mrb[0].mxu0
    %v1224 = vadd.f32 0.0, %v1223
    %v1225 = vpop.f32.mrb[0].mxu0
    %1226 = vmatprep.mubr.bf16.mxu0 0
    %1227 = vmatmul.mubr.bf16.gmra.mrb[0].mxu0 %v1169
    %v1228 = vpop.f32.mrb[0].mxu0
    %v1229 = vadd.f32 0.0, %v1228
    %v1230 = vpop.f32.mrb[0].mxu0
    %v1231 = vpop.f32.mrb[0].mxu0
    %v1232 = vadd.f32 0.0, %v1231
    %v1233 = vpop.f32.mrb[0].mxu0
    %1234 = vmatprep.mubr.bf16.mxu0 0
    %1235 = vmatmul.mubr.bf16.gmra.mrb[0].mxu0 %v1172
    %v1236 = vpop.f32.mrb[0].mxu0
    %v1237 = vadd.f32 0.0, %v1236
    %v1238 = vpop.f32.mrb[0].mxu0
    %v1239 = vpop.f32.mrb[0].mxu0
    %v1240 = vpop.f32.mrb[0].mxu0
    %1241 = vdwg.mxu0
    %v1243 = vsel %vm1113, %v1152, 0
    %v1246 = vsel %vm1113, %v1153, 0
    %v1249 = vsel %vm1113, %v1154, 0
    %v1252 = vsel %vm1113, %v1155, 0
    %v1255 = vsel %vm1174, %v1156, 0
    %1257 = vmatprep.subr.bf16.mxu0 0
    %1258 = vmatpush1.bf16.msra.mxu0 %v1255
    %1259 = vmatprep.subr.bf16.mxu0 0
    %1260 = vmatpush1.bf16.msra.mxu0 0
    %1261 = vmatprep.subr.bf16.mxu0 0
    %1262 = vmatpush1.bf16.msra.mxu0 0
    %1263 = vmatprep.subr.bf16.mxu0 0
    %1264 = vmatpush1.bf16.msra.mxu0 0
    %1265 = vmatprep.subr.bf16.mxu0 0
    %1266 = vmatpush1.bf16.msra.mxu0 0
    %1267 = vmatprep.subr.bf16.mxu0 0
    %1268 = vmatpush1.bf16.msra.mxu0 0
    %1269 = vmatprep.subr.bf16.mxu0 0
    %1270 = vmatpush1.bf16.msra.mxu0 0
    %1271 = vmatprep.subr.bf16.mxu0 0
    %1272 = vmatpush1.bf16.msra.mxu0 0
    %1273 = vmatprep.subr.bf16.mxu0 0
    %1274 = vmatpush1.bf16.msra.mxu0 0
    %1275 = vmatprep.subr.bf16.mxu0 0
    %1276 = vmatpush1.bf16.msra.mxu0 0
    %1277 = vmatprep.subr.bf16.mxu0 0
    %1278 = vmatpush1.bf16.msra.mxu0 0
    %1279 = vmatprep.subr.bf16.mxu0 0
    %1280 = vmatpush1.bf16.msra.mxu0 0
    %1281 = vmatprep.subr.bf16.mxu0 0
    %1282 = vmatpush1.bf16.msra.mxu0 0
    %1283 = vmatprep.subr.bf16.mxu0 0
    %1284 = vmatpush1.bf16.msra.mxu0 0
    %1285 = vmatprep.subr.bf16.mxu0 0
    %1286 = vmatpush1.bf16.msra.mxu0 0
    %1287 = vmatprep.subr.bf16.mxu0 0
    %1288 = vmatpush1.bf16.msra.mxu0 0
    %1289 = vmatprep.mubr.bf16.mxu0 0
    %1290 = vmatmul.mubr.bf16.gmra.mrb[0].mxu0 %v1243
    %v1291 = vpop.f32.mrb[0].mxu0
    %v1292 = vadd.f32 %v1213, %v1291
    %v1293 = vpop.f32.mrb[0].mxu0
    %v1294 = vpop.f32.mrb[0].mxu0
    %v1295 = vadd.f32 %v1216, %v1294
    %v1296 = vpop.f32.mrb[0].mxu0
    %1297 = vmatprep.mubr.bf16.mxu0 0
    %1298 = vmatmul.mubr.bf16.gmra.mrb[0].mxu0 %v1246
    %v1299 = vpop.f32.mrb[0].mxu0
    %v1300 = vadd.f32 %v1221, %v1299
    %v1301 = vpop.f32.mrb[0].mxu0
    %v1302 = vpop.f32.mrb[0].mxu0
    %v1303 = vadd.f32 %v1224, %v1302
    %v1304 = vpop.f32.mrb[0].mxu0
    %1305 = vmatprep.mubr.bf16.mxu0 0
    %1306 = vmatmul.mubr.bf16.gmra.mrb[0].mxu0 %v1249
    %v1307 = vpop.f32.mrb[0].mxu0
    %v1308 = vadd.f32 %v1229, %v1307
    %v1309 = vpop.f32.mrb[0].mxu0
    %v1310 = vpop.f32.mrb[0].mxu0
    %v1311 = vadd.f32 %v1232, %v1310
    %v1312 = vpop.f32.mrb[0].mxu0
    %1313 = vmatprep.mubr.bf16.mxu0 0
    %1314 = vmatmul.mubr.bf16.gmra.mrb[0].mxu0 %v1252
    %v1315 = vpop.f32.mrb[0].mxu0
    %v1316 = vadd.f32 %v1237, %v1315
    %v1317 = vpop.f32.mrb[0].mxu0
    %v1318 = vpop.f32.mrb[0].mxu0
    %v1319 = vpop.f32.mrb[0].mxu0
    %1320 = vdwg.mxu0
    %v1321 = vld [vmem:[%s17] sm:$0x1]
    %v1323 = vlaneseq
    %v1324 = vshrl.u32 %v1323, 7
    %v1325 = vsub.s32 0, %v1324
    %v1326 = vrot.slane %v1321, %v1325
    %v1328 = vadd.f32 %v1292, %v1326
    %v1329 = vadd.f32 %v1295, %v1326
    %v1330 = vadd.f32 %v1300, %v1326
    %v1331 = vadd.f32 %v1303, %v1326
    %v1332 = vadd.f32 %v1308, %v1326
    %v1333 = vadd.f32 %v1311, %v1326
    %v1334 = vadd.f32 %v1316, %v1326
    %v1335 = vmax.f32 %v1328, 0.0
    %v1336 = vmax.f32 %v1329, 0.0
    %v1337 = vmax.f32 %v1330, 0.0
    %v1338 = vmax.f32 %v1331, 0.0
    %v1339 = vmax.f32 %v1332, 0.0
    %v1340 = vmax.f32 %v1333, 0.0
    %v1341 = vmax.f32 %v1334, 0.0
    %v1342 = vpack.c.bf16 %v1336, %v1335
    %v1343 = vpack.c.bf16 %v1338, %v1337
    %v1344 = vpack.c.bf16 %v1340, %v1339
    %v1345 = vpack.c.bf16 %v1341, %v1341
    %v1346 = vld [vmem:[%s18] sm:$0xf]
    %v1347 = vld [vmem:[%s18 + $0x4] sm:$0xf]
    %v1348 = vld [vmem:[%s18 + $0x8] sm:$0xf]
    %v1349 = vld [vmem:[%s18 + $0xc] sm:$0xf]
    %v1350 = vld [vmem:[%s19] sm:$0x1]
    %v1352 = vlaneseq
    %v1353 = vshrl.u32 %v1352, 7
    %v1354 = vsub.s32 0, %v1353
    %v1355 = vrot.slane %v1350, %v1354
    %v1361 = vunpack.c.l.b16 %v1346
    %v1362 = vunpack.c.l.b16 %v1347
    %v1363 = vunpack.c.l.b16 %v1348
    %v1364 = vunpack.c.l.b16 %v1349
    %v1365 = vpack.c.b16 %v1362, %v1361
    %v1366 = vpack.c.b16 %v1364, %v1363
    %v1370 = vsel %vm795, %v1342, 0
    %v1373 = vsel %vm795, %v1343, 0
    %v1376 = vsel %vm795, %v1344, 0
    %v1379 = vsel %vm795, %v1345, 0
    %1381 = vmatprep.subr.bf16.mxu0 0
    %1382 = vmatpush1.bf16.msra.mxu0 %v1365
    %1383 = vmatprep.subr.bf16.mxu0 0
    %1384 = vmatpush1.bf16.msra.mxu0 %v1366
    %1385 = vmatprep.subr.bf16.mxu0 0
    %1386 = vmatpush1.bf16.msra.mxu0 0
    %1387 = vmatprep.subr.bf16.mxu0 0
    %1388 = vmatpush1.bf16.msra.mxu0 0
    %1389 = vmatprep.subr.bf16.mxu0 0
    %1390 = vmatpush1.bf16.msra.mxu0 0
    %1391 = vmatprep.subr.bf16.mxu0 0
    %1392 = vmatpush1.bf16.msra.mxu0 0
    %1393 = vmatprep.subr.bf16.mxu0 0
    %1394 = vmatpush1.bf16.msra.mxu0 0
    %1395 = vmatprep.subr.bf16.mxu0 0
    %1396 = vmatpush1.bf16.msra.mxu0 0
    %1397 = vmatprep.subr.bf16.mxu0 0
    %1398 = vmatpush1.bf16.msra.mxu0 0
    %1399 = vmatprep.subr.bf16.mxu0 0
    %1400 = vmatpush1.bf16.msra.mxu0 0
    %1401 = vmatprep.subr.bf16.mxu0 0
    %1402 = vmatpush1.bf16.msra.mxu0 0
    %1403 = vmatprep.subr.bf16.mxu0 0
    %1404 = vmatpush1.bf16.msra.mxu0 0
    %1405 = vmatprep.subr.bf16.mxu0 0
    %1406 = vmatpush1.bf16.msra.mxu0 0
    %1407 = vmatprep.subr.bf16.mxu0 0
    %1408 = vmatpush1.bf16.msra.mxu0 0
    %1409 = vmatprep.subr.bf16.mxu0 0
    %1410 = vmatpush1.bf16.msra.mxu0 0
    %1411 = vmatprep.subr.bf16.mxu0 0
    %1412 = vmatpush1.bf16.msra.mxu0 0
    %1413 = vmatprep.mubr.bf16.mxu0 0
    %1414 = vmatmul.mubr.bf16.gmra.mrb[0].mxu0 %v1370
    %v1415 = vpop.f32.mrb[0].mxu0
    %v1416 = vadd.f32 %v1355, %v1415
    %v1417 = vpop.f32.mrb[0].mxu0
    %v1418 = vpop.f32.mrb[0].mxu0
    %v1419 = vadd.f32 %v1355, %v1418
    %v1420 = vpop.f32.mrb[0].mxu0
    %1421 = vmatprep.mubr.bf16.mxu0 0
    %1422 = vmatmul.mubr.bf16.gmra.mrb[0].mxu0 %v1373
    %v1423 = vpop.f32.mrb[0].mxu0
    %v1424 = vadd.f32 %v1355, %v1423
    %v1425 = vpop.f32.mrb[0].mxu0
    %v1426 = vpop.f32.mrb[0].mxu0
    %v1427 = vadd.f32 %v1355, %v1426
    %v1428 = vpop.f32.mrb[0].mxu0
    %1429 = vmatprep.mubr.bf16.mxu0 0
    %1430 = vmatmul.mubr.bf16.gmra.mrb[0].mxu0 %v1376
    %v1431 = vpop.f32.mrb[0].mxu0
    %v1432 = vadd.f32 %v1355, %v1431
    %v1433 = vpop.f32.mrb[0].mxu0
    %v1434 = vpop.f32.mrb[0].mxu0
    %v1435 = vadd.f32 %v1355, %v1434
    %v1436 = vpop.f32.mrb[0].mxu0
    %1437 = vmatprep.mubr.bf16.mxu0 0
    %1438 = vmatmul.mubr.bf16.gmra.mrb[0].mxu0 %v1379
    %v1439 = vpop.f32.mrb[0].mxu0
    %v1440 = vadd.f32 %v1355, %v1439
    %v1441 = vpop.f32.mrb[0].mxu0
    %v1442 = vpop.f32.mrb[0].mxu0
    %v1443 = vpop.f32.mrb[0].mxu0
    %1444 = vdwg.mxu0
    %v1445 = vld [vmem:[%s20] sm:$0xf]
    %v1446 = vld [vmem:[%s20 + $0x4] sm:$0xf]
    %v1447 = vld [vmem:[%s20 + $0x8] sm:$0xf]
    %v1448 = vld [vmem:[%s20 + $0xc] sm:$0xf]
    %v1449 = vld [vmem:[%s21] sm:$0x1]
    %v1451 = vlaneseq
    %v1452 = vshrl.u32 %v1451, 7
    %v1453 = vsub.s32 0, %v1452
    %v1454 = vrot.slane %v1449, %v1453
    %v1460 = vunpack.c.l.b16 %v1445
    %v1461 = vunpack.c.l.b16 %v1446
    %v1462 = vunpack.c.l.b16 %v1447
    %v1463 = vunpack.c.l.b16 %v1448
    %v1464 = vpack.c.b16 %v1461, %v1460
    %v1465 = vpack.c.b16 %v1463, %v1462
    %1468 = vmatprep.subr.bf16.mxu0 0
    %1469 = vmatpush1.bf16.msra.mxu0 %v1464
    %1470 = vmatprep.subr.bf16.mxu0 0
    %1471 = vmatpush1.bf16.msra.mxu0 %v1465
    %1472 = vmatprep.subr.bf16.mxu0 0
    %1473 = vmatpush1.bf16.msra.mxu0 0
    %1474 = vmatprep.subr.bf16.mxu0 0
    %1475 = vmatpush1.bf16.msra.mxu0 0
    %1476 = vmatprep.subr.bf16.mxu0 0
    %1477 = vmatpush1.bf16.msra.mxu0 0
    %1478 = vmatprep.subr.bf16.mxu0 0
    %1479 = vmatpush1.bf16.msra.mxu0 0
    %1480 = vmatprep.subr.bf16.mxu0 0
    %1481 = vmatpush1.bf16.msra.mxu0 0
    %1482 = vmatprep.subr.bf16.mxu0 0
    %1483 = vmatpush1.bf16.msra.mxu0 0
    %1484 = vmatprep.subr.bf16.mxu0 0
    %1485 = vmatpush1.bf16.msra.mxu0 0
    %1486 = vmatprep.subr.bf16.mxu0 0
    %1487 = vmatpush1.bf16.msra.mxu0 0
    %1488 = vmatprep.subr.bf16.mxu0 0
    %1489 = vmatpush1.bf16.msra.mxu0 0
    %1490 = vmatprep.subr.bf16.mxu0 0
    %1491 = vmatpush1.bf16.msra.mxu0 0
    %1492 = vmatprep.subr.bf16.mxu0 0
    %1493 = vmatpush1.bf16.msra.mxu0 0
    %1494 = vmatprep.subr.bf16.mxu0 0
    %1495 = vmatpush1.bf16.msra.mxu0 0
    %1496 = vmatprep.subr.bf16.mxu0 0
    %1497 = vmatpush1.bf16.msra.mxu0 0
    %1498 = vmatprep.subr.bf16.mxu0 0
    %1499 = vmatpush1.bf16.msra.mxu0 0
    %1500 = vmatprep.mubr.bf16.mxu0 0
    %1501 = vmatmul.mubr.bf16.gmra.mrb[0].mxu0 %v1370
    %v1502 = vpop.f32.mrb[0].mxu0
    %v1503 = vadd.f32 %v1454, %v1502
    %v1504 = vpop.f32.mrb[0].mxu0
    %v1505 = vpop.f32.mrb[0].mxu0
    %v1506 = vadd.f32 %v1454, %v1505
    %v1507 = vpop.f32.mrb[0].mxu0
    %1508 = vmatprep.mubr.bf16.mxu0 0
    %1509 = vmatmul.mubr.bf16.gmra.mrb[0].mxu0 %v1373
    %v1510 = vpop.f32.mrb[0].mxu0
    %v1511 = vadd.f32 %v1454, %v1510
    %v1512 = vpop.f32.mrb[0].mxu0
    %v1513 = vpop.f32.mrb[0].mxu0
    %v1514 = vadd.f32 %v1454, %v1513
    %v1515 = vpop.f32.mrb[0].mxu0
    %1516 = vmatprep.mubr.bf16.mxu0 0
    %1517 = vmatmul.mubr.bf16.gmra.mrb[0].mxu0 %v1376
    %v1518 = vpop.f32.mrb[0].mxu0
    %v1519 = vadd.f32 %v1454, %v1518
    %v1520 = vpop.f32.mrb[0].mxu0
    %v1521 = vpop.f32.mrb[0].mxu0
    %v1522 = vadd.f32 %v1454, %v1521
    %v1523 = vpop.f32.mrb[0].mxu0
    %1524 = vmatprep.mubr.bf16.mxu0 0
    %1525 = vmatmul.mubr.bf16.gmra.mrb[0].mxu0 %v1379
    %v1526 = vpop.f32.mrb[0].mxu0
    %v1527 = vadd.f32 %v1454, %v1526
    %v1528 = vpop.f32.mrb[0].mxu0
    %v1529 = vpop.f32.mrb[0].mxu0
    %v1530 = vpop.f32.mrb[0].mxu0
    %1531 = vdwg.mxu0
    %v1532 = vmax.f32 %v1503, 0.0
    %v1533 = vmax.f32 %v1506, 0.0
    %v1534 = vmax.f32 %v1511, 0.0
    %v1535 = vmax.f32 %v1514, 0.0
    %v1536 = vmax.f32 %v1519, 0.0
    %v1537 = vmax.f32 %v1522, 0.0
    %v1538 = vmax.f32 %v1527, 0.0
    %v1539 = vand.u32 2147483647, %v1503
    %v1540 = vand.u32 2147483647, %v1506
    %v1541 = vand.u32 2147483647, %v1511
    %v1542 = vand.u32 2147483647, %v1514
    %v1543 = vand.u32 2147483647, %v1519
    %v1544 = vand.u32 2147483647, %v1522
    %v1545 = vand.u32 2147483647, %v1527
    %v1546 = vsub.f32 0.0, %v1539
    %v1547 = vsub.f32 0.0, %v1540
    %v1548 = vsub.f32 0.0, %v1541
    %v1549 = vsub.f32 0.0, %v1542
    %v1550 = vsub.f32 0.0, %v1543
    %v1551 = vsub.f32 0.0, %v1544
    %v1552 = vsub.f32 0.0, %v1545
    %v1553 = vmul.f32 %v1546, 1.442695
    %v1554 = vpow.pop %v1553
    %v1555 = vmul.f32 %v1547, 1.442695
    %v1556 = vpow.pop %v1555
    %v1557 = vmul.f32 %v1548, 1.442695
    %v1558 = vpow.pop %v1557
    %v1559 = vmul.f32 %v1549, 1.442695
    %v1560 = vpow.pop %v1559
    %v1561 = vmul.f32 %v1550, 1.442695
    %v1562 = vpow.pop %v1561
    %v1563 = vmul.f32 %v1551, 1.442695
    %v1564 = vpow.pop %v1563
    %v1565 = vmul.f32 %v1552, 1.442695
    %v1566 = vpow.pop %v1565
    %v1567 = vadd.f32 %v1554, 1.0
    %v1568 = vlog2.pop %v1567
    %v1569 = vmul.f32 %v1568, 0.6931472
    %v1570 = vmul.f32 -0.5, %v1554
    %v1571 = vadd.f32 %v1570, 1.0
    %v1572 = vmul.f32 %v1571, %v1554
    %v1573 = vand.u32 2147483647, %v1554
    %vm1574 = vcmp.lt.f32.partialorder %v1573, 0.0004427343
    %v1575 = vsel %vm1574, %v1572, %v1569
    %v1576 = vadd.f32 %v1556, 1.0
    %v1577 = vlog2.pop %v1576
    %v1578 = vmul.f32 %v1577, 0.6931472
    %v1579 = vmul.f32 -0.5, %v1556
    %v1580 = vadd.f32 %v1579, 1.0
    %v1581 = vmul.f32 %v1580, %v1556
    %v1582 = vand.u32 2147483647, %v1556
    %vm1583 = vcmp.lt.f32.partialorder %v1582, 0.0004427343
    %v1584 = vsel %vm1583, %v1581, %v1578
    %v1585 = vadd.f32 %v1558, 1.0
    %v1586 = vlog2.pop %v1585
    %v1587 = vmul.f32 %v1586, 0.6931472
    %v1588 = vmul.f32 -0.5, %v1558
    %v1589 = vadd.f32 %v1588, 1.0
    %v1590 = vmul.f32 %v1589, %v1558
    %v1591 = vand.u32 2147483647, %v1558
    %vm1592 = vcmp.lt.f32.partialorder %v1591, 0.0004427343
    %v1593 = vsel %vm1592, %v1590, %v1587
    %v1594 = vadd.f32 %v1560, 1.0
    %v1595 = vlog2.pop %v1594
    %v1596 = vmul.f32 %v1595, 0.6931472
    %v1597 = vmul.f32 -0.5, %v1560
    %v1598 = vadd.f32 %v1597, 1.0
    %v1599 = vmul.f32 %v1598, %v1560
    %v1600 = vand.u32 2147483647, %v1560
    %vm1601 = vcmp.lt.f32.partialorder %v1600, 0.0004427343
    %v1602 = vsel %vm1601, %v1599, %v1596
    %v1603 = vadd.f32 %v1562, 1.0
    %v1604 = vlog2.pop %v1603
    %v1605 = vmul.f32 %v1604, 0.6931472
    %v1606 = vmul.f32 -0.5, %v1562
    %v1607 = vadd.f32 %v1606, 1.0
    %v1608 = vmul.f32 %v1607, %v1562
    %v1609 = vand.u32 2147483647, %v1562
    %vm1610 = vcmp.lt.f32.partialorder %v1609, 0.0004427343
    %v1611 = vsel %vm1610, %v1608, %v1605
    %v1612 = vadd.f32 %v1564, 1.0
    %v1613 = vlog2.pop %v1612
    %v1614 = vmul.f32 %v1613, 0.6931472
    %v1615 = vmul.f32 -0.5, %v1564
    %v1616 = vadd.f32 %v1615, 1.0
    %v1617 = vmul.f32 %v1616, %v1564
    %v1618 = vand.u32 2147483647, %v1564
    %vm1619 = vcmp.lt.f32.partialorder %v1618, 0.0004427343
    %v1620 = vsel %vm1619, %v1617, %v1614
    %v1621 = vadd.f32 %v1566, 1.0
    %v1622 = vlog2.pop %v1621
    %v1623 = vmul.f32 %v1622, 0.6931472
    %v1624 = vmul.f32 -0.5, %v1566
    %v1625 = vadd.f32 %v1624, 1.0
    %v1626 = vmul.f32 %v1625, %v1566
    %v1627 = vand.u32 2147483647, %v1566
    %vm1628 = vcmp.lt.f32.partialorder %v1627, 0.0004427343
    %v1629 = vsel %vm1628, %v1626, %v1623
    %v1630 = vadd.f32 %v1532, %v1575
    %v1631 = vadd.f32 %v1533, %v1584
    %v1632 = vadd.f32 %v1534, %v1593
    %v1633 = vadd.f32 %v1535, %v1602
    %v1634 = vadd.f32 %v1536, %v1611
    %v1635 = vadd.f32 %v1537, %v1620
    %v1636 = vadd.f32 %v1538, %v1629
    %v1637 = vadd.f32 %v1630, 1e-06
    %v1638 = vadd.f32 %v1631, 1e-06
    %v1639 = vadd.f32 %v1632, 1e-06
    %v1640 = vadd.f32 %v1633, 1e-06
    %v1641 = vadd.f32 %v1634, 1e-06
    %v1642 = vadd.f32 %v1635, 1e-06
    %v1643 = vadd.f32 %v1636, 1e-06
    %v1644 = vld [vmem:[%s4] sm:$0xff]
    %v1645 = vld [vmem:[%s4 + $0x8] sm:$0xff]
    %v1646 = vld [vmem:[%s4 + $0x10] sm:$0xff]
    %v1647 = vld [vmem:[%s4 + $0x18] sm:$0xff]
    %v1648 = vld [vmem:[%s4 + $0x20] sm:$0xff]
    %v1649 = vld [vmem:[%s4 + $0x28] sm:$0xff]
    %v1650 = vld [vmem:[%s4 + $0x30] sm:$0xff]
    %v1651 = vmul.f32 %v1637, %v1644
    %v1652 = vmul.f32 %v1638, %v1645
    %v1653 = vmul.f32 %v1639, %v1646
    %v1654 = vmul.f32 %v1640, %v1647
    %v1655 = vmul.f32 %v1641, %v1648
    %v1656 = vmul.f32 %v1642, %v1649
    %v1657 = vmul.f32 %v1643, %v1650
    %v1658 = vadd.f32 %v1416, %v1651
    %v1659 = vadd.f32 %v1419, %v1652
    %v1660 = vadd.f32 %v1424, %v1653
    %v1661 = vadd.f32 %v1427, %v1654
    %v1662 = vadd.f32 %v1432, %v1655
    %v1663 = vadd.f32 %v1435, %v1656
    %v1664 = vadd.f32 %v1440, %v1657
    %v1665 = vpack.c.bf16 %v1659, %v1658
    %v1666 = vpack.c.bf16 %v1661, %v1660
    %v1667 = vpack.c.bf16 %v1663, %v1662
    %v1668 = vpack.c.bf16 %v1664, %v1664
    %v1669 = vld [vmem:[%s22] sm:$0x3]
    %v1670 = vld [vmem:[%s23] sm:$0x1]
    %v1672 = vlaneseq
    %v1673 = vshrl.u32 %v1672, 7
    %v1674 = vsub.s32 0, %v1673
    %v1675 = vrot.slane %v1670, %v1674
    %v1678 = vsel %vm1113, %v1665, 0
    %v1681 = vsel %vm1113, %v1666, 0
    %v1684 = vsel %vm1113, %v1667, 0
    %v1687 = vsel %vm1113, %v1668, 0
    %v1690 = vsel %vm1174, %v1669, 0
    %1692 = vmatprep.subr.bf16.mxu0 0
    %1693 = vmatpush1.bf16.msra.mxu0 %v1690
    %1694 = vmatprep.subr.bf16.mxu0 0
    %1695 = vmatpush1.bf16.msra.mxu0 0
    %1696 = vmatprep.subr.bf16.mxu0 0
    %1697 = vmatpush1.bf16.msra.mxu0 0
    %1698 = vmatprep.subr.bf16.mxu0 0
    %1699 = vmatpush1.bf16.msra.mxu0 0
    %1700 = vmatprep.subr.bf16.mxu0 0
    %1701 = vmatpush1.bf16.msra.mxu0 0
    %1702 = vmatprep.subr.bf16.mxu0 0
    %1703 = vmatpush1.bf16.msra.mxu0 0
    %1704 = vmatprep.subr.bf16.mxu0 0
    %1705 = vmatpush1.bf16.msra.mxu0 0
    %1706 = vmatprep.subr.bf16.mxu0 0
    %1707 = vmatpush1.bf16.msra.mxu0 0
    %1708 = vmatprep.subr.bf16.mxu0 0
    %1709 = vmatpush1.bf16.msra.mxu0 0
    %1710 = vmatprep.subr.bf16.mxu0 0
    %1711 = vmatpush1.bf16.msra.mxu0 0
    %1712 = vmatprep.subr.bf16.mxu0 0
    %1713 = vmatpush1.bf16.msra.mxu0 0
    %1714 = vmatprep.subr.bf16.mxu0 0
    %1715 = vmatpush1.bf16.msra.mxu0 0
    %1716 = vmatprep.subr.bf16.mxu0 0
    %1717 = vmatpush1.bf16.msra.mxu0 0
    %1718 = vmatprep.subr.bf16.mxu0 0
    %1719 = vmatpush1.bf16.msra.mxu0 0
    %1720 = vmatprep.subr.bf16.mxu0 0
    %1721 = vmatpush1.bf16.msra.mxu0 0
    %1722 = vmatprep.subr.bf16.mxu0 0
    %1723 = vmatpush1.bf16.msra.mxu0 0
    %1724 = vmatprep.mubr.bf16.mxu0 0
    %1725 = vmatmul.mubr.bf16.gmra.mrb[0].mxu0 %v1678
    %v1726 = vpop.f32.mrb[0].mxu0
    %v1727 = vadd.f32 %v1675, %v1726
    %v1728 = vpop.f32.mrb[0].mxu0
    %v1729 = vpop.f32.mrb[0].mxu0
    %v1730 = vadd.f32 %v1675, %v1729
    %v1731 = vpop.f32.mrb[0].mxu0
    %1732 = vmatprep.mubr.bf16.mxu0 0
    %1733 = vmatmul.mubr.bf16.gmra.mrb[0].mxu0 %v1681
    %v1734 = vpop.f32.mrb[0].mxu0
    %v1735 = vadd.f32 %v1675, %v1734
    %v1736 = vpop.f32.mrb[0].mxu0
    %v1737 = vpop.f32.mrb[0].mxu0
    %v1738 = vadd.f32 %v1675, %v1737
    %v1739 = vpop.f32.mrb[0].mxu0
    %1740 = vmatprep.mubr.bf16.mxu0 0
    %1741 = vmatmul.mubr.bf16.gmra.mrb[0].mxu0 %v1684
    %v1742 = vpop.f32.mrb[0].mxu0
    %v1743 = vadd.f32 %v1675, %v1742
    %v1744 = vpop.f32.mrb[0].mxu0
    %v1745 = vpop.f32.mrb[0].mxu0
    %v1746 = vadd.f32 %v1675, %v1745
    %v1747 = vpop.f32.mrb[0].mxu0
    %1748 = vmatprep.mubr.bf16.mxu0 0
    %1749 = vmatmul.mubr.bf16.gmra.mrb[0].mxu0 %v1687
    %v1750 = vpop.f32.mrb[0].mxu0
    %v1751 = vadd.f32 %v1675, %v1750
    %v1752 = vpop.f32.mrb[0].mxu0
    %v1753 = vpop.f32.mrb[0].mxu0
    %v1754 = vpop.f32.mrb[0].mxu0
    %1755 = vdwg.mxu0
    %v1756 = vmax.f32 %v1727, 0.0
    %v1757 = vmax.f32 %v1730, 0.0
    %v1758 = vmax.f32 %v1735, 0.0
    %v1759 = vmax.f32 %v1738, 0.0
    %v1760 = vmax.f32 %v1743, 0.0
    %v1761 = vmax.f32 %v1746, 0.0
    %v1762 = vmax.f32 %v1751, 0.0
    %v1763 = vpack.c.bf16 %v1757, %v1756
    %v1764 = vpack.c.bf16 %v1759, %v1758
    %v1765 = vpack.c.bf16 %v1761, %v1760
    %v1766 = vpack.c.bf16 %v1762, %v1762
    %v1767 = vld [vmem:[%s24] sm:$0xff]
    %v1768 = vld [vmem:[%s24 + $0x8] sm:$0xff]
    %v1769 = vld [vmem:[%s24 + $0x10] sm:$0xff]
    %v1770 = vld [vmem:[%s24 + $0x18] sm:$0xff]
    %v1771 = vld [vmem:[%s24 + $0x20] sm:$0xff]
    %v1772 = vld [vmem:[%s24 + $0x28] sm:$0xff]
    %v1773 = vld [vmem:[%s24 + $0x30] sm:$0xff]
    %v1774 = vld [vmem:[%s24 + $0x38] sm:$0xff]
    %v1775 = vld [vmem:[%s24 + $0x40] sm:$0xff]
    %v1776 = vld [vmem:[%s24 + $0x48] sm:$0xff]
    %v1777 = vld [vmem:[%s24 + $0x50] sm:$0xff]
    %v1778 = vld [vmem:[%s24 + $0x58] sm:$0xff]
    %v1779 = vld [vmem:[%s25] sm:$0x3f]
    %v1781 = vlaneseq
    %v1782 = vshrl.u32 %v1781, 7
    %v1783 = vsub.s32 0, %v1782
    %v1784 = vrot.slane %v1779, %v1783
    %v1785 = vlaneseq
    %v1786 = vshrl.u32 %v1785, 7
    %v1787 = vsub.s32 1, %v1786
    %v1788 = vrot.slane %v1779, %v1787
    %v1789 = vlaneseq
    %v1790 = vshrl.u32 %v1789, 7
    %v1791 = vsub.s32 2, %v1790
    %v1792 = vrot.slane %v1779, %v1791
    %v1793 = vlaneseq
    %v1794 = vshrl.u32 %v1793, 7
    %v1795 = vsub.s32 3, %v1794
    %v1796 = vrot.slane %v1779, %v1795
    %v1797 = vlaneseq
    %v1798 = vshrl.u32 %v1797, 7
    %v1799 = vsub.s32 4, %v1798
    %v1800 = vrot.slane %v1779, %v1799
    %v1801 = vlaneseq
    %v1802 = vshrl.u32 %v1801, 7
    %v1803 = vsub.s32 5, %v1802
    %v1804 = vrot.slane %v1779, %v1803
    %v1823 = vunpack.c.l.b16 %v1767
    %v1824 = vunpack.c.h.b16 %v1767
    %v1825 = vunpack.c.l.b16 %v1768
    %v1826 = vunpack.c.h.b16 %v1768
    %v1827 = vunpack.c.l.b16 %v1769
    %v1828 = vunpack.c.h.b16 %v1769
    %v1829 = vunpack.c.l.b16 %v1770
    %v1830 = vunpack.c.h.b16 %v1770
    %v1831 = vunpack.c.l.b16 %v1771
    %v1832 = vunpack.c.h.b16 %v1771
    %v1833 = vunpack.c.l.b16 %v1772
    %v1834 = vunpack.c.h.b16 %v1772
    %v1835 = vunpack.c.l.b16 %v1773
    %v1836 = vunpack.c.h.b16 %v1773
    %v1837 = vunpack.c.l.b16 %v1774
    %v1838 = vunpack.c.h.b16 %v1774
    %v1839 = vunpack.c.l.b16 %v1775
    %v1840 = vunpack.c.h.b16 %v1775
    %v1841 = vunpack.c.l.b16 %v1776
    %v1842 = vunpack.c.h.b16 %v1776
    %v1843 = vunpack.c.l.b16 %v1777
    %v1844 = vunpack.c.h.b16 %v1777
    %v1845 = vunpack.c.l.b16 %v1778
    %v1846 = vunpack.c.h.b16 %v1778
    %v1847 = vpack.c.b16 %v1829, %v1823
    %v1848 = vpack.c.b16 %v1830, %v1824
    %v1849 = vpack.c.b16 %v1831, %v1825
    %v1850 = vpack.c.b16 %v1832, %v1826
    %v1851 = vpack.c.b16 %v1833, %v1827
    %v1852 = vpack.c.b16 %v1834, %v1828
    %v1853 = vpack.c.b16 %v1841, %v1835
    %v1854 = vpack.c.b16 %v1842, %v1836
    %v1855 = vpack.c.b16 %v1843, %v1837
    %v1856 = vpack.c.b16 %v1844, %v1838
    %v1857 = vpack.c.b16 %v1845, %v1839
    %v1858 = vpack.c.b16 %v1846, %v1840
    %v1872 = vsel %vm795, %v1763, 0
    %v1875 = vsel %vm795, %v1764, 0
    %v1878 = vsel %vm795, %v1765, 0
    %v1881 = vsel %vm795, %v1766, 0
    %1883 = vmatprep.subr.bf16.mxu0 %v1848
    %1884 = vmatpush1.bf16.msra.mxu0 %v1847
    %1885 = vmatprep.subr.bf16.mxu0 %v1854
    %1886 = vmatpush1.bf16.msra.mxu0 %v1853
    %1887 = vmatprep.subr.bf16.mxu0 0
    %1888 = vmatpush1.bf16.msra.mxu0 0
    %1889 = vmatprep.subr.bf16.mxu0 0
    %1890 = vmatpush1.bf16.msra.mxu0 0
    %1891 = vmatprep.subr.bf16.mxu0 0
    %1892 = vmatpush1.bf16.msra.mxu0 0
    %1893 = vmatprep.subr.bf16.mxu0 0
    %1894 = vmatpush1.bf16.msra.mxu0 0
    %1895 = vmatprep.subr.bf16.mxu0 0
    %1896 = vmatpush1.bf16.msra.mxu0 0
    %1897 = vmatprep.subr.bf16.mxu0 0
    %1898 = vmatpush1.bf16.msra.mxu0 0
    %1899 = vmatprep.subr.bf16.mxu0 0
    %1900 = vmatpush1.bf16.msra.mxu0 0
    %1901 = vmatprep.subr.bf16.mxu0 0
    %1902 = vmatpush1.bf16.msra.mxu0 0
    %1903 = vmatprep.subr.bf16.mxu0 0
    %1904 = vmatpush1.bf16.msra.mxu0 0
    %1905 = vmatprep.subr.bf16.mxu0 0
    %1906 = vmatpush1.bf16.msra.mxu0 0
    %1907 = vmatprep.subr.bf16.mxu0 0
    %1908 = vmatpush1.bf16.msra.mxu0 0
    %1909 = vmatprep.subr.bf16.mxu0 0
    %1910 = vmatpush1.bf16.msra.mxu0 0
    %1911 = vmatprep.subr.bf16.mxu0 0
    %1912 = vmatpush1.bf16.msra.mxu0 0
    %1913 = vmatprep.subr.bf16.mxu0 0
    %1914 = vmatpush1.bf16.msra.mxu0 0
    %1915 = vmatprep.mubr.bf16.mxu0 0
    %1916 = vmatmul.mubr.bf16.gmra.mrb[0].mxu0 %v1872
    %v1917 = vpop.f32.mrb[0].mxu0
    %v1918 = vadd.f32 %v1784, %v1917
    %v1919 = vpop.f32.mrb[0].mxu0
    %v1920 = vadd.f32 %v1788, %v1919
    %v1921 = vpop.f32.mrb[0].mxu0
    %v1922 = vadd.f32 %v1784, %v1921
    %v1923 = vpop.f32.mrb[0].mxu0
    %v1924 = vadd.f32 %v1788, %v1923
    %1925 = vmatprep.mubr.bf16.mxu0 0
    %1926 = vmatmul.mubr.bf16.gmra.mrb[0].mxu0 %v1875
    %v1927 = vpop.f32.mrb[0].mxu0
    %v1928 = vadd.f32 %v1784, %v1927
    %v1929 = vpop.f32.mrb[0].mxu0
    %v1930 = vadd.f32 %v1788, %v1929
    %v1931 = vpop.f32.mrb[0].mxu0
    %v1932 = vadd.f32 %v1784, %v1931
    %v1933 = vpop.f32.mrb[0].mxu0
    %v1934 = vadd.f32 %v1788, %v1933
    %1935 = vmatprep.mubr.bf16.mxu0 0
    %1936 = vmatmul.mubr.bf16.gmra.mrb[0].mxu0 %v1878
    %v1937 = vpop.f32.mrb[0].mxu0
    %v1938 = vadd.f32 %v1784, %v1937
    %v1939 = vpop.f32.mrb[0].mxu0
    %v1940 = vadd.f32 %v1788, %v1939
    %v1941 = vpop.f32.mrb[0].mxu0
    %v1942 = vadd.f32 %v1784, %v1941
    %v1943 = vpop.f32.mrb[0].mxu0
    %v1944 = vadd.f32 %v1788, %v1943
    %1945 = vmatprep.mubr.bf16.mxu0 0
    %1946 = vmatmul.mubr.bf16.gmra.mrb[0].mxu0 %v1881
    %v1947 = vpop.f32.mrb[0].mxu0
    %v1948 = vadd.f32 %v1784, %v1947
    %v1949 = vpop.f32.mrb[0].mxu0
    %v1950 = vadd.f32 %v1788, %v1949
    %v1951 = vpop.f32.mrb[0].mxu0
    %v1952 = vpop.f32.mrb[0].mxu0
    %1953 = vdwg.mxu0
    %1954 = vmatprep.subr.bf16.mxu0 %v1850
    %1955 = vmatpush1.bf16.msra.mxu0 %v1849
    %1956 = vmatprep.subr.bf16.mxu0 %v1856
    %1957 = vmatpush1.bf16.msra.mxu0 %v1855
    %1958 = vmatprep.subr.bf16.mxu0 0
    %1959 = vmatpush1.bf16.msra.mxu0 0
    %1960 = vmatprep.subr.bf16.mxu0 0
    %1961 = vmatpush1.bf16.msra.mxu0 0
    %1962 = vmatprep.subr.bf16.mxu0 0
    %1963 = vmatpush1.bf16.msra.mxu0 0
    %1964 = vmatprep.subr.bf16.mxu0 0
    %1965 = vmatpush1.bf16.msra.mxu0 0
    %1966 = vmatprep.subr.bf16.mxu0 0
    %1967 = vmatpush1.bf16.msra.mxu0 0
    %1968 = vmatprep.subr.bf16.mxu0 0
    %1969 = vmatpush1.bf16.msra.mxu0 0
    %1970 = vmatprep.subr.bf16.mxu0 0
    %1971 = vmatpush1.bf16.msra.mxu0 0
    %1972 = vmatprep.subr.bf16.mxu0 0
    %1973 = vmatpush1.bf16.msra.mxu0 0
    %1974 = vmatprep.subr.bf16.mxu0 0
    %1975 = vmatpush1.bf16.msra.mxu0 0
    %1976 = vmatprep.subr.bf16.mxu0 0
    %1977 = vmatpush1.bf16.msra.mxu0 0
    %1978 = vmatprep.subr.bf16.mxu0 0
    %1979 = vmatpush1.bf16.msra.mxu0 0
    %1980 = vmatprep.subr.bf16.mxu0 0
    %1981 = vmatpush1.bf16.msra.mxu0 0
    %1982 = vmatprep.subr.bf16.mxu0 0
    %1983 = vmatpush1.bf16.msra.mxu0 0
    %1984 = vmatprep.subr.bf16.mxu0 0
    %1985 = vmatpush1.bf16.msra.mxu0 0
    %1986 = vmatprep.mubr.bf16.mxu0 0
    %1987 = vmatmul.mubr.bf16.gmra.mrb[0].mxu0 %v1872
    %v1988 = vpop.f32.mrb[0].mxu0
    %v1989 = vadd.f32 %v1792, %v1988
    %v1990 = vpop.f32.mrb[0].mxu0
    %v1991 = vadd.f32 %v1796, %v1990
    %v1992 = vpop.f32.mrb[0].mxu0
    %v1993 = vadd.f32 %v1792, %v1992
    %v1994 = vpop.f32.mrb[0].mxu0
    %v1995 = vadd.f32 %v1796, %v1994
    %1996 = vmatprep.mubr.bf16.mxu0 0
    %1997 = vmatmul.mubr.bf16.gmra.mrb[0].mxu0 %v1875
    %v1998 = vpop.f32.mrb[0].mxu0
    %v1999 = vadd.f32 %v1792, %v1998
    %v2000 = vpop.f32.mrb[0].mxu0
    %v2001 = vadd.f32 %v1796, %v2000
    %v2002 = vpop.f32.mrb[0].mxu0
    %v2003 = vadd.f32 %v1792, %v2002
    %v2004 = vpop.f32.mrb[0].mxu0
    %v2005 = vadd.f32 %v1796, %v2004
    %2006 = vmatprep.mubr.bf16.mxu0 0
    %2007 = vmatmul.mubr.bf16.gmra.mrb[0].mxu0 %v1878
    %v2008 = vpop.f32.mrb[0].mxu0
    %v2009 = vadd.f32 %v1792, %v2008
    %v2010 = vpop.f32.mrb[0].mxu0
    %v2011 = vadd.f32 %v1796, %v2010
    %v2012 = vpop.f32.mrb[0].mxu0
    %v2013 = vadd.f32 %v1792, %v2012
    %v2014 = vpop.f32.mrb[0].mxu0
    %v2015 = vadd.f32 %v1796, %v2014
    %2016 = vmatprep.mubr.bf16.mxu0 0
    %2017 = vmatmul.mubr.bf16.gmra.mrb[0].mxu0 %v1881
    %v2018 = vpop.f32.mrb[0].mxu0
    %v2019 = vadd.f32 %v1792, %v2018
    %v2020 = vpop.f32.mrb[0].mxu0
    %v2021 = vadd.f32 %v1796, %v2020
    %v2022 = vpop.f32.mrb[0].mxu0
    %v2023 = vpop.f32.mrb[0].mxu0
    %2024 = vdwg.mxu0
    %2025 = vmatprep.subr.bf16.mxu0 %v1852
    %2026 = vmatpush1.bf16.msra.mxu0 %v1851
    %2027 = vmatprep.subr.bf16.mxu0 %v1858
    %2028 = vmatpush1.bf16.msra.mxu0 %v1857
    %2029 = vmatprep.subr.bf16.mxu0 0
    %2030 = vmatpush1.bf16.msra.mxu0 0
    %2031 = vmatprep.subr.bf16.mxu0 0
    %2032 = vmatpush1.bf16.msra.mxu0 0
    %2033 = vmatprep.subr.bf16.mxu0 0
    %2034 = vmatpush1.bf16.msra.mxu0 0
    %2035 = vmatprep.subr.bf16.mxu0 0
    %2036 = vmatpush1.bf16.msra.mxu0 0
    %2037 = vmatprep.subr.bf16.mxu0 0
    %2038 = vmatpush1.bf16.msra.mxu0 0
    %2039 = vmatprep.subr.bf16.mxu0 0
    %2040 = vmatpush1.bf16.msra.mxu0 0
    %2041 = vmatprep.subr.bf16.mxu0 0
    %2042 = vmatpush1.bf16.msra.mxu0 0
    %2043 = vmatprep.subr.bf16.mxu0 0
    %2044 = vmatpush1.bf16.msra.mxu0 0
    %2045 = vmatprep.subr.bf16.mxu0 0
    %2046 = vmatpush1.bf16.msra.mxu0 0
    %2047 = vmatprep.subr.bf16.mxu0 0
    %2048 = vmatpush1.bf16.msra.mxu0 0
    %2049 = vmatprep.subr.bf16.mxu0 0
    %2050 = vmatpush1.bf16.msra.mxu0 0
    %2051 = vmatprep.subr.bf16.mxu0 0
    %2052 = vmatpush1.bf16.msra.mxu0 0
    %2053 = vmatprep.subr.bf16.mxu0 0
    %2054 = vmatpush1.bf16.msra.mxu0 0
    %2055 = vmatprep.subr.bf16.mxu0 0
    %2056 = vmatpush1.bf16.msra.mxu0 0
    %2057 = vmatprep.mubr.bf16.mxu0 0
    %2058 = vmatmul.mubr.bf16.gmra.mrb[0].mxu0 %v1872
    %v2059 = vpop.f32.mrb[0].mxu0
    %v2060 = vadd.f32 %v1800, %v2059
    %v2061 = vpop.f32.mrb[0].mxu0
    %v2062 = vadd.f32 %v1804, %v2061
    %v2063 = vpop.f32.mrb[0].mxu0
    %v2064 = vadd.f32 %v1800, %v2063
    %v2065 = vpop.f32.mrb[0].mxu0
    %v2066 = vadd.f32 %v1804, %v2065
    %2067 = vmatprep.mubr.bf16.mxu0 0
    %2068 = vmatmul.mubr.bf16.gmra.mrb[0].mxu0 %v1875
    %v2069 = vpop.f32.mrb[0].mxu0
    %v2070 = vadd.f32 %v1800, %v2069
    %v2071 = vpop.f32.mrb[0].mxu0
    %v2072 = vadd.f32 %v1804, %v2071
    %v2073 = vpop.f32.mrb[0].mxu0
    %v2074 = vadd.f32 %v1800, %v2073
    %v2075 = vpop.f32.mrb[0].mxu0
    %v2076 = vadd.f32 %v1804, %v2075
    %2077 = vmatprep.mubr.bf16.mxu0 0
    %2078 = vmatmul.mubr.bf16.gmra.mrb[0].mxu0 %v1878
    %v2079 = vpop.f32.mrb[0].mxu0
    %v2080 = vadd.f32 %v1800, %v2079
    %v2081 = vpop.f32.mrb[0].mxu0
    %v2082 = vadd.f32 %v1804, %v2081
    %v2083 = vpop.f32.mrb[0].mxu0
    %v2084 = vadd.f32 %v1800, %v2083
    %v2085 = vpop.f32.mrb[0].mxu0
    %v2086 = vadd.f32 %v1804, %v2085
    %2087 = vmatprep.mubr.bf16.mxu0 0
    %2088 = vmatmul.mubr.bf16.gmra.mrb[0].mxu0 %v1881
    %v2089 = vpop.f32.mrb[0].mxu0
    %v2090 = vadd.f32 %v1800, %v2089
    %v2091 = vpop.f32.mrb[0].mxu0
    %v2092 = vadd.f32 %v1804, %v2091
    %v2093 = vpop.f32.mrb[0].mxu0
    %v2094 = vpop.f32.mrb[0].mxu0
    %2095 = vdwg.mxu0
    %v2096 = vld [vmem:[%s1 + $0x30] sm:$0xff]
    %v2097 = vld [vmem:[%s1 + $0x38] sm:$0xff]
    %v2098 = vld [vmem:[%s1 + $0x40] sm:$0xff]
    %v2099 = vld [vmem:[%s1 + $0x48] sm:$0xff]
    %v2100 = vld [vmem:[%s1 + $0x50] sm:$0xff]
    %v2101 = vld [vmem:[%s1 + $0x58] sm:$0xff]
    %v2102 = vld [vmem:[%s1 + $0x60] sm:$0xff]
    %v2103 = vld [vmem:[%s1 + $0x68] sm:$0xff]
    %v2104 = vld [vmem:[%s1 + $0x70] sm:$0xff]
    %v2105 = vld [vmem:[%s1 + $0x78] sm:$0xff]
    %v2106 = vld [vmem:[%s1 + $0x80] sm:$0xff]
    %v2107 = vld [vmem:[%s1 + $0x88] sm:$0xff]
    %v2108 = vld [vmem:[%s1 + $0x90] sm:$0xff]
    %v2109 = vld [vmem:[%s1 + $0x98] sm:$0xff]
    %v2110 = vld [vmem:[%s1 + $0xa0] sm:$0xff]
    %v2111 = vld [vmem:[%s1 + $0xa8] sm:$0xff]
    %v2112 = vld [vmem:[%s1 + $0xb0] sm:$0xff]
    %v2113 = vld [vmem:[%s1 + $0xb8] sm:$0xff]
    %v2114 = vld [vmem:[%s1 + $0xc0] sm:$0xff]
    %v2115 = vld [vmem:[%s1 + $0xc8] sm:$0xff]
    %v2116 = vld [vmem:[%s1 + $0xd0] sm:$0xff]
    %v2117 = vld [vmem:[%s1 + $0xd8] sm:$0xff]
    %v2118 = vld [vmem:[%s1 + $0xe0] sm:$0xff]
    %v2119 = vld [vmem:[%s1 + $0xe8] sm:$0xff]
    %v2120 = vld [vmem:[%s1 + $0xf0] sm:$0xff]
    %v2121 = vld [vmem:[%s1 + $0xf8] sm:$0xff]
    %v2122 = vld [vmem:[%s1 + $0x100] sm:$0xff]
    %v2123 = vld [vmem:[%s1 + $0x108] sm:$0xff]
    %v2124 = vld [vmem:[%s1 + $0x110] sm:$0xff]
    %v2125 = vld [vmem:[%s1 + $0x118] sm:$0xff]
    %v2126 = vld [vmem:[%s1 + $0x120] sm:$0xff]
    %v2127 = vld [vmem:[%s1 + $0x128] sm:$0xff]
    %v2128 = vld [vmem:[%s1 + $0x130] sm:$0xff]
    %v2129 = vld [vmem:[%s1 + $0x138] sm:$0xff]
    %v2130 = vld [vmem:[%s1 + $0x140] sm:$0xff]
    %v2131 = vld [vmem:[%s1 + $0x148] sm:$0xff]
    %v2132 = vld [vmem:[%s1 + $0x150] sm:$0xff]
    %v2133 = vld [vmem:[%s1 + $0x158] sm:$0xff]
    %v2134 = vld [vmem:[%s1 + $0x160] sm:$0xff]
    %v2135 = vld [vmem:[%s1 + $0x168] sm:$0xff]
    %v2136 = vld [vmem:[%s1 + $0x170] sm:$0xff]
    %v2137 = vld [vmem:[%s1 + $0x178] sm:$0xff]
    %v2138 = vld [vmem:[%s5 + $0x8] sm:$0xff]
    %v2139 = vld [vmem:[%s5 + $0x10] sm:$0xff]
    %v2140 = vld [vmem:[%s5 + $0x18] sm:$0xff]
    %v2141 = vld [vmem:[%s5 + $0x20] sm:$0xff]
    %v2142 = vld [vmem:[%s5 + $0x28] sm:$0xff]
    %v2143 = vld [vmem:[%s5 + $0x30] sm:$0xff]
    %v2144 = vld [vmem:[%s5 + $0x38] sm:$0xff]
    %v2145 = vsub.f32 %v2096, %v1918
    %v2146 = vsub.f32 %v2097, %v1920
    %v2147 = vsub.f32 %v2098, %v1989
    %v2148 = vsub.f32 %v2099, %v1991
    %v2149 = vsub.f32 %v2100, %v2060
    %v2150 = vsub.f32 %v2101, %v2062
    %v2151 = vsub.f32 %v2102, %v1922
    %v2152 = vsub.f32 %v2103, %v1924
    %v2153 = vsub.f32 %v2104, %v1993
    %v2154 = vsub.f32 %v2105, %v1995
    %v2155 = vsub.f32 %v2106, %v2064
    %v2156 = vsub.f32 %v2107, %v2066
    %v2157 = vsub.f32 %v2108, %v1928
    %v2158 = vsub.f32 %v2109, %v1930
    %v2159 = vsub.f32 %v2110, %v1999
    %v2160 = vsub.f32 %v2111, %v2001
    %v2161 = vsub.f32 %v2112, %v2070
    %v2162 = vsub.f32 %v2113, %v2072
    %v2163 = vsub.f32 %v2114, %v1932
    %v2164 = vsub.f32 %v2115, %v1934
    %v2165 = vsub.f32 %v2116, %v2003
    %v2166 = vsub.f32 %v2117, %v2005
    %v2167 = vsub.f32 %v2118, %v2074
    %v2168 = vsub.f32 %v2119, %v2076
    %v2169 = vsub.f32 %v2120, %v1938
    %v2170 = vsub.f32 %v2121, %v1940
    %v2171 = vsub.f32 %v2122, %v2009
    %v2172 = vsub.f32 %v2123, %v2011
    %v2173 = vsub.f32 %v2124, %v2080
    %v2174 = vsub.f32 %v2125, %v2082
    %v2175 = vsub.f32 %v2126, %v1942
    %v2176 = vsub.f32 %v2127, %v1944
    %v2177 = vsub.f32 %v2128, %v2013
    %v2178 = vsub.f32 %v2129, %v2015
    %v2179 = vsub.f32 %v2130, %v2084
    %v2180 = vsub.f32 %v2131, %v2086
    %v2181 = vsub.f32 %v2132, %v1948
    %v2182 = vsub.f32 %v2133, %v1950
    %v2183 = vsub.f32 %v2134, %v2019
    %v2184 = vsub.f32 %v2135, %v2021
    %v2185 = vsub.f32 %v2136, %v2090
    %v2186 = vsub.f32 %v2137, %v2092
    %v2187 = vmul.f32 %v2145, %v2145
    %v2188 = vmul.f32 %v2146, %v2146
    %v2189 = vmul.f32 %v2147, %v2147
    %v2190 = vmul.f32 %v2148, %v2148
    %v2191 = vmul.f32 %v2149, %v2149
    %v2192 = vmul.f32 %v2150, %v2150
    %v2193 = vmul.f32 %v2151, %v2151
    %v2194 = vmul.f32 %v2152, %v2152
    %v2195 = vmul.f32 %v2153, %v2153
    %v2196 = vmul.f32 %v2154, %v2154
    %v2197 = vmul.f32 %v2155, %v2155
    %v2198 = vmul.f32 %v2156, %v2156
    %v2199 = vmul.f32 %v2157, %v2157
    %v2200 = vmul.f32 %v2158, %v2158
    %v2201 = vmul.f32 %v2159, %v2159
    %v2202 = vmul.f32 %v2160, %v2160
    %v2203 = vmul.f32 %v2161, %v2161
    %v2204 = vmul.f32 %v2162, %v2162
    %v2205 = vmul.f32 %v2163, %v2163
    %v2206 = vmul.f32 %v2164, %v2164
    %v2207 = vmul.f32 %v2165, %v2165
    %v2208 = vmul.f32 %v2166, %v2166
    %v2209 = vmul.f32 %v2167, %v2167
    %v2210 = vmul.f32 %v2168, %v2168
    %v2211 = vmul.f32 %v2169, %v2169
    %v2212 = vmul.f32 %v2170, %v2170
    %v2213 = vmul.f32 %v2171, %v2171
    %v2214 = vmul.f32 %v2172, %v2172
    %v2215 = vmul.f32 %v2173, %v2173
    %v2216 = vmul.f32 %v2174, %v2174
    %v2217 = vmul.f32 %v2175, %v2175
    %v2218 = vmul.f32 %v2176, %v2176
    %v2219 = vmul.f32 %v2177, %v2177
    %v2220 = vmul.f32 %v2178, %v2178
    %v2221 = vmul.f32 %v2179, %v2179
    %v2222 = vmul.f32 %v2180, %v2180
    %v2223 = vmul.f32 %v2181, %v2181
    %v2224 = vmul.f32 %v2182, %v2182
    %v2225 = vmul.f32 %v2183, %v2183
    %v2226 = vmul.f32 %v2184, %v2184
    %v2227 = vmul.f32 %v2185, %v2185
    %v2228 = vmul.f32 %v2186, %v2186
    %v2229 = vadd.f32 %v2187, 1.837877
    %v2230 = vadd.f32 %v2188, 1.837877
    %v2231 = vadd.f32 %v2189, 1.837877
    %v2232 = vadd.f32 %v2190, 1.837877
    %v2233 = vadd.f32 %v2191, 1.837877
    %v2234 = vadd.f32 %v2192, 1.837877
    %v2235 = vadd.f32 %v2193, 1.837877
    %v2236 = vadd.f32 %v2194, 1.837877
    %v2237 = vadd.f32 %v2195, 1.837877
    %v2238 = vadd.f32 %v2196, 1.837877
    %v2239 = vadd.f32 %v2197, 1.837877
    %v2240 = vadd.f32 %v2198, 1.837877
    %v2241 = vadd.f32 %v2199, 1.837877
    %v2242 = vadd.f32 %v2200, 1.837877
    %v2243 = vadd.f32 %v2201, 1.837877
    %v2244 = vadd.f32 %v2202, 1.837877
    %v2245 = vadd.f32 %v2203, 1.837877
    %v2246 = vadd.f32 %v2204, 1.837877
    %v2247 = vadd.f32 %v2205, 1.837877
    %v2248 = vadd.f32 %v2206, 1.837877
    %v2249 = vadd.f32 %v2207, 1.837877
    %v2250 = vadd.f32 %v2208, 1.837877
    %v2251 = vadd.f32 %v2209, 1.837877
    %v2252 = vadd.f32 %v2210, 1.837877
    %v2253 = vadd.f32 %v2211, 1.837877
    %v2254 = vadd.f32 %v2212, 1.837877
    %v2255 = vadd.f32 %v2213, 1.837877
    %v2256 = vadd.f32 %v2214, 1.837877
    %v2257 = vadd.f32 %v2215, 1.837877
    %v2258 = vadd.f32 %v2216, 1.837877
    %v2259 = vadd.f32 %v2217, 1.837877
    %v2260 = vadd.f32 %v2218, 1.837877
    %v2261 = vadd.f32 %v2219, 1.837877
    %v2262 = vadd.f32 %v2220, 1.837877
    %v2263 = vadd.f32 %v2221, 1.837877
    %v2264 = vadd.f32 %v2222, 1.837877
    %v2265 = vadd.f32 %v2223, 1.837877
    %v2266 = vadd.f32 %v2224, 1.837877
    %v2267 = vadd.f32 %v2225, 1.837877
    %v2268 = vadd.f32 %v2226, 1.837877
    %v2269 = vadd.f32 %v2227, 1.837877
    %v2270 = vadd.f32 %v2228, 1.837877
    %v2271 = vmul.f32 %v2229, -0.5
    %v2272 = vmul.f32 %v2230, -0.5
    %v2273 = vmul.f32 %v2231, -0.5
    %v2274 = vmul.f32 %v2232, -0.5
    %v2275 = vmul.f32 %v2233, -0.5
    %v2276 = vmul.f32 %v2234, -0.5
    %v2277 = vmul.f32 %v2235, -0.5
    %v2278 = vmul.f32 %v2236, -0.5
    %v2279 = vmul.f32 %v2237, -0.5
    %v2280 = vmul.f32 %v2238, -0.5
    %v2281 = vmul.f32 %v2239, -0.5
    %v2282 = vmul.f32 %v2240, -0.5
    %v2283 = vmul.f32 %v2241, -0.5
    %v2284 = vmul.f32 %v2242, -0.5
    %v2285 = vmul.f32 %v2243, -0.5
    %v2286 = vmul.f32 %v2244, -0.5
    %v2287 = vmul.f32 %v2245, -0.5
    %v2288 = vmul.f32 %v2246, -0.5
    %v2289 = vmul.f32 %v2247, -0.5
    %v2290 = vmul.f32 %v2248, -0.5
    %v2291 = vmul.f32 %v2249, -0.5
    %v2292 = vmul.f32 %v2250, -0.5
    %v2293 = vmul.f32 %v2251, -0.5
    %v2294 = vmul.f32 %v2252, -0.5
    %v2295 = vmul.f32 %v2253, -0.5
    %v2296 = vmul.f32 %v2254, -0.5
    %v2297 = vmul.f32 %v2255, -0.5
    %v2298 = vmul.f32 %v2256, -0.5
    %v2299 = vmul.f32 %v2257, -0.5
    %v2300 = vmul.f32 %v2258, -0.5
    %v2301 = vmul.f32 %v2259, -0.5
    %v2302 = vmul.f32 %v2260, -0.5
    %v2303 = vmul.f32 %v2261, -0.5
    %v2304 = vmul.f32 %v2262, -0.5
    %v2305 = vmul.f32 %v2263, -0.5
    %v2306 = vmul.f32 %v2264, -0.5
    %v2307 = vmul.f32 %v2265, -0.5
    %v2308 = vmul.f32 %v2266, -0.5
    %v2309 = vmul.f32 %v2267, -0.5
    %v2310 = vmul.f32 %v2268, -0.5
    %v2311 = vmul.f32 %v2269, -0.5
    %v2312 = vmul.f32 %v2270, -0.5
    %2314 = vset.pattern.permute.xlu0 0
    %2315 = vperm.xlu0 %2314, %v2138
    %v2316 = vpop.permute.xlu0 %2315
    %2319 = vset.pattern.permute.xlu0 0
    %2320 = vperm.xlu0 %2319, %v2139
    %v2321 = vpop.permute.xlu0 %2320
    %2324 = vset.pattern.permute.xlu0 0
    %2325 = vperm.xlu0 %2324, %v2140
    %v2326 = vpop.permute.xlu0 %2325
    %2329 = vset.pattern.permute.xlu0 0
    %2330 = vperm.xlu0 %2329, %v2141
    %v2331 = vpop.permute.xlu0 %2330
    %2334 = vset.pattern.permute.xlu0 0
    %2335 = vperm.xlu0 %2334, %v2142
    %v2336 = vpop.permute.xlu0 %2335
    %2339 = vset.pattern.permute.xlu0 0
    %2340 = vperm.xlu0 %2339, %v2143
    %v2341 = vpop.permute.xlu0 %2340
    %2344 = vset.pattern.permute.xlu0 0
    %2345 = vperm.xlu0 %2344, %v2144
    %v2346 = vpop.permute.xlu0 %2345
    %v2348 = vmul.f32 %v2271, %v2316
    %v2349 = vmul.f32 %v2272, %v2316
    %v2350 = vmul.f32 %v2273, %v2316
    %v2351 = vmul.f32 %v2274, %v2316
    %v2352 = vmul.f32 %v2275, %v2316
    %v2353 = vmul.f32 %v2276, %v2316
    %v2354 = vmul.f32 %v2277, %v2321
    %v2355 = vmul.f32 %v2278, %v2321
    %v2356 = vmul.f32 %v2279, %v2321
    %v2357 = vmul.f32 %v2280, %v2321
    %v2358 = vmul.f32 %v2281, %v2321
    %v2359 = vmul.f32 %v2282, %v2321
    %v2360 = vmul.f32 %v2283, %v2326
    %v2361 = vmul.f32 %v2284, %v2326
    %v2362 = vmul.f32 %v2285, %v2326
    %v2363 = vmul.f32 %v2286, %v2326
    %v2364 = vmul.f32 %v2287, %v2326
    %v2365 = vmul.f32 %v2288, %v2326
    %v2366 = vmul.f32 %v2289, %v2331
    %v2367 = vmul.f32 %v2290, %v2331
    %v2368 = vmul.f32 %v2291, %v2331
    %v2369 = vmul.f32 %v2292, %v2331
    %v2370 = vmul.f32 %v2293, %v2331
    %v2371 = vmul.f32 %v2294, %v2331
    %v2372 = vmul.f32 %v2295, %v2336
    %v2373 = vmul.f32 %v2296, %v2336
    %v2374 = vmul.f32 %v2297, %v2336
    %v2375 = vmul.f32 %v2298, %v2336
    %v2376 = vmul.f32 %v2299, %v2336
    %v2377 = vmul.f32 %v2300, %v2336
    %v2378 = vmul.f32 %v2301, %v2341
    %v2379 = vmul.f32 %v2302, %v2341
    %v2380 = vmul.f32 %v2303, %v2341
    %v2381 = vmul.f32 %v2304, %v2341
    %v2382 = vmul.f32 %v2305, %v2341
    %v2383 = vmul.f32 %v2306, %v2341
    %v2384 = vmul.f32 %v2307, %v2346
    %v2385 = vmul.f32 %v2308, %v2346
    %v2386 = vmul.f32 %v2309, %v2346
    %v2387 = vmul.f32 %v2310, %v2346
    %v2388 = vmul.f32 %v2311, %v2346
    %v2389 = vmul.f32 %v2312, %v2346
    %v2390 = vadd.f32 %v2348, %v2349
    %v2391 = vadd.f32 %v2390, %v2350
    %v2392 = vadd.f32 %v2391, %v2351
    %v2393 = vadd.f32 %v2392, %v2352
    %v2394 = vadd.f32 %v2393, %v2353
    %2395 = vadd.xlane.f32.xlu0 %v2394
    %v2396 = vpop.xlane.xlu0 %2395
    %v2397 = vadd.f32 %v2354, %v2355
    %v2398 = vadd.f32 %v2397, %v2356
    %v2399 = vadd.f32 %v2398, %v2357
    %v2400 = vadd.f32 %v2399, %v2358
    %v2401 = vadd.f32 %v2400, %v2359
    %2402 = vadd.xlane.f32.xlu0 %v2401
    %v2403 = vpop.xlane.xlu0 %2402
    %v2404 = vadd.f32 %v2360, %v2361
    %v2405 = vadd.f32 %v2404, %v2362
    %v2406 = vadd.f32 %v2405, %v2363
    %v2407 = vadd.f32 %v2406, %v2364
    %v2408 = vadd.f32 %v2407, %v2365
    %2409 = vadd.xlane.f32.xlu0 %v2408
    %v2410 = vpop.xlane.xlu0 %2409
    %v2411 = vadd.f32 %v2366, %v2367
    %v2412 = vadd.f32 %v2411, %v2368
    %v2413 = vadd.f32 %v2412, %v2369
    %v2414 = vadd.f32 %v2413, %v2370
    %v2415 = vadd.f32 %v2414, %v2371
    %2416 = vadd.xlane.f32.xlu0 %v2415
    %v2417 = vpop.xlane.xlu0 %2416
    %v2418 = vadd.f32 %v2372, %v2373
    %v2419 = vadd.f32 %v2418, %v2374
    %v2420 = vadd.f32 %v2419, %v2375
    %v2421 = vadd.f32 %v2420, %v2376
    %v2422 = vadd.f32 %v2421, %v2377
    %2423 = vadd.xlane.f32.xlu0 %v2422
    %v2424 = vpop.xlane.xlu0 %2423
    %v2425 = vadd.f32 %v2378, %v2379
    %v2426 = vadd.f32 %v2425, %v2380
    %v2427 = vadd.f32 %v2426, %v2381
    %v2428 = vadd.f32 %v2427, %v2382
    %v2429 = vadd.f32 %v2428, %v2383
    %2430 = vadd.xlane.f32.xlu0 %v2429
    %v2431 = vpop.xlane.xlu0 %2430
    %v2432 = vadd.f32 %v2384, %v2385
    %v2433 = vadd.f32 %v2432, %v2386
    %v2434 = vadd.f32 %v2433, %v2387
    %v2435 = vadd.f32 %v2434, %v2388
    %v2436 = vadd.f32 %v2435, %v2389
    %2437 = vadd.xlane.f32.xlu0 %v2436
    %v2438 = vpop.xlane.xlu0 %2437
    %v2439 = vadd.f32 %v2396, %v2403
    %v2440 = vadd.f32 %v2439, %v2410
    %v2441 = vadd.f32 %v2440, %v2417
    %v2442 = vadd.f32 %v2441, %v2424
    %v2443 = vadd.f32 %v2442, %v2431
    %v2444 = vadd.f32 %v2443, %v2438
    %v2445 = vrot.slane %v2444, 4
    %v2446 = vadd.f32 %v2444, %v2445
    %v2447 = vrot.slane %v2446, 2
    %v2448 = vadd.f32 %v2446, %v2447
    %v2449 = vrot.slane %v2448, 1
    %v2450 = vadd.f32 %v2448, %v2449
    %v2451 = vmul.f32 %v2450, 0.5
    %v2452 = vld [vmem:[%s12] sm:$0x1]
    %v2453 = vld [vmem:[%s13] sm:$0x1]
    %v2454 = vld [vmem:[%s14] sm:$0x1]
    %v2455 = vld [vmem:[%s5] sm:$0xff]
    %s2456 = sld [smem:[#allocation5 + $0x1]]
    %v2457 = vld [vmem:[#allocation2] sm:$0xff]
    %v2458 = vld [vmem:[%s2] sm:$0xff]
    %v2459 = vld [vmem:[#allocation3 + $0x8] sm:$0xff]
    %v2460 = vld [vmem:[#allocation4 + $0x8] sm:$0xff]
    %v2462 = vlaneseq
    %v2463 = vshrl.u32 %v2462, 7
    %v2464 = vsub.s32 0, %v2463
    %v2465 = vrot.slane %v2452, %v2464
    %v2467 = vmul.f32 %v2465, %v2457
    %v2469 = vlaneseq
    %v2470 = vshrl.u32 %v2469, 7
    %v2471 = vsub.s32 0, %v2470
    %v2472 = vrot.slane %v2453, %v2471
    %v2474 = vmul.f32 %v2472, 0.0
    %v2475 = vadd.f32 %v2467, %v2474
    %v2477 = vlaneseq
    %v2478 = vshrl.u32 %v2477, 7
    %v2479 = vsub.s32 0, %v2478
    %v2480 = vrot.slane %v2454, %v2479
    %v2482 = vmul.f32 %v2480, %v2458
    %v2483 = vadd.f32 %v2475, %v2482
    %v2484 = vstv %s2456
    %v2485 = vmul.f32 %v2484, %v2483
    %v2486 = vadd.f32 %v2485, 0.0
    %v2487 = vmul.f32 %v2484, %v2486
    %v2488 = vadd.f32 %v2457, %v2487
    %v2489 = vlog2.pop %v2460
    %v2490 = vmul.f32 %v2489, 0.6931472
    %v2491 = vsub.f32 0.0, %v2490
    %v2492 = vmul.f32 %v2460, %v2460
    %v2493 = vsub.f32 %v2459, %v2488
    %v2494 = vmul.f32 %v2493, %v2493
    %v2495 = vadd.f32 %v2492, %v2494
    %v2496 = vmul.f32 %v2495, 0.5
    %v2497 = vadd.f32 %v2491, %v2496
    %v2498 = vsub.f32 %v2497, 0.5
    %2500 = vset.pattern.permute.xlu0 0
    %2501 = vperm.xlu0 %2500, %v2455
    %v2502 = vpop.permute.xlu0 %2501
    %v2504 = vmul.f32 %v2498, %v2502
    %v2505 = vsel %vm1113, %v2504, 0.0
    %2506 = vadd.xlane.f32.xlu0 %v2505
    %v2507 = vpop.xlane.xlu0 %2506
    %v2508 = vrot.slane %v2507, 4
    %v2509 = vadd.f32 %v2507, %v2508
    %v2510 = vrot.slane %v2509, 2
    %v2511 = vadd.f32 %v2509, %v2510
    %v2512 = vrot.slane %v2511, 1
    %v2513 = vadd.f32 %v2511, %v2512
    %v2514 = vmul.f32 %v2513, 0.5
    %v2515 = vadd.f32 %v2514, 0.0
    %s2516 = sld [smem:[#allocation5 + $0x2]]
    %v2517 = vld [vmem:[#allocation2 + $0x8] sm:$0xff]
    %v2518 = vld [vmem:[%s2 + $0x8] sm:$0xff]
    %v2519 = vld [vmem:[#allocation3 + $0x10] sm:$0xff]
    %v2520 = vld [vmem:[#allocation4 + $0x10] sm:$0xff]
    %v2521 = vmul.f32 %v2465, %v2517
    %v2522 = vmul.f32 %v2472, %v2486
    %v2523 = vadd.f32 %v2521, %v2522
    %v2524 = vmul.f32 %v2480, %v2518
    %v2525 = vadd.f32 %v2523, %v2524
    %v2526 = vstv %s2516
    %v2527 = vmul.f32 %v2526, %v2525
    %v2528 = vadd.f32 %v2486, %v2527
    %v2529 = vmul.f32 %v2526, %v2528
    %v2530 = vadd.f32 %v2517, %v2529
    %v2531 = vlog2.pop %v2520
    %v2532 = vmul.f32 %v2531, 0.6931472
    %v2533 = vsub.f32 0.0, %v2532
    %v2534 = vmul.f32 %v2520, %v2520
    %v2535 = vsub.f32 %v2519, %v2530
    %v2536 = vmul.f32 %v2535, %v2535
    %v2537 = vadd.f32 %v2534, %v2536
    %v2538 = vmul.f32 %v2537, 0.5
    %v2539 = vadd.f32 %v2533, %v2538
    %v2540 = vsub.f32 %v2539, 0.5
    %v2541 = vmul.f32 %v2540, %v2502
    %v2542 = vsel %vm1113, %v2541, 0.0
    %2543 = vadd.xlane.f32.xlu0 %v2542
    %v2544 = vpop.xlane.xlu0 %2543
    %v2545 = vrot.slane %v2544, 4
    %v2546 = vadd.f32 %v2544, %v2545
    %v2547 = vrot.slane %v2546, 2
    %v2548 = vadd.f32 %v2546, %v2547
    %v2549 = vrot.slane %v2548, 1
    %v2550 = vadd.f32 %v2548, %v2549
    %v2551 = vmul.f32 %v2550, 0.5
    %v2552 = vadd.f32 %v2515, %v2551
    %s2553 = sld [smem:[#allocation5 + $0x3]]
    %v2554 = vld [vmem:[#allocation2 + $0x10] sm:$0xff]
    %v2555 = vld [vmem:[%s2 + $0x10] sm:$0xff]
    %v2556 = vld [vmem:[#allocation3 + $0x18] sm:$0xff]
    %v2557 = vld [vmem:[#allocation4 + $0x18] sm:$0xff]
    %v2558 = vmul.f32 %v2465, %v2554
    %v2559 = vmul.f32 %v2472, %v2528
    %v2560 = vadd.f32 %v2558, %v2559
    %v2561 = vmul.f32 %v2480, %v2555
    %v2562 = vadd.f32 %v2560, %v2561
    %v2563 = vstv %s2553
    %v2564 = vmul.f32 %v2563, %v2562
    %v2565 = vadd.f32 %v2528, %v2564
    %v2566 = vmul.f32 %v2563, %v2565
    %v2567 = vadd.f32 %v2554, %v2566
    %v2568 = vlog2.pop %v2557
    %v2569 = vmul.f32 %v2568, 0.6931472
    %v2570 = vsub.f32 0.0, %v2569
    %v2571 = vmul.f32 %v2557, %v2557
    %v2572 = vsub.f32 %v2556, %v2567
    %v2573 = vmul.f32 %v2572, %v2572
    %v2574 = vadd.f32 %v2571, %v2573
    %v2575 = vmul.f32 %v2574, 0.5
    %v2576 = vadd.f32 %v2570, %v2575
    %v2577 = vsub.f32 %v2576, 0.5
    %v2578 = vmul.f32 %v2577, %v2502
    %v2579 = vsel %vm1113, %v2578, 0.0
    %2580 = vadd.xlane.f32.xlu0 %v2579
    %v2581 = vpop.xlane.xlu0 %2580
    %v2582 = vrot.slane %v2581, 4
    %v2583 = vadd.f32 %v2581, %v2582
    %v2584 = vrot.slane %v2583, 2
    %v2585 = vadd.f32 %v2583, %v2584
    %v2586 = vrot.slane %v2585, 1
    %v2587 = vadd.f32 %v2585, %v2586
    %v2588 = vmul.f32 %v2587, 0.5
    %v2589 = vadd.f32 %v2552, %v2588
    %s2590 = sld [smem:[#allocation5 + $0x4]]
    %v2591 = vld [vmem:[#allocation2 + $0x18] sm:$0xff]
    %v2592 = vld [vmem:[%s2 + $0x18] sm:$0xff]
    %v2593 = vld [vmem:[#allocation3 + $0x20] sm:$0xff]
    %v2594 = vld [vmem:[#allocation4 + $0x20] sm:$0xff]
    %v2595 = vmul.f32 %v2465, %v2591
    %v2596 = vmul.f32 %v2472, %v2565
    %v2597 = vadd.f32 %v2595, %v2596
    %v2598 = vmul.f32 %v2480, %v2592
    %v2599 = vadd.f32 %v2597, %v2598
    %v2600 = vstv %s2590
    %v2601 = vmul.f32 %v2600, %v2599
    %v2602 = vadd.f32 %v2565, %v2601
    %v2603 = vmul.f32 %v2600, %v2602
    %v2604 = vadd.f32 %v2591, %v2603
    %v2605 = vlog2.pop %v2594
    %v2606 = vmul.f32 %v2605, 0.6931472
    %v2607 = vsub.f32 0.0, %v2606
    %v2608 = vmul.f32 %v2594, %v2594
    %v2609 = vsub.f32 %v2593, %v2604
    %v2610 = vmul.f32 %v2609, %v2609
    %v2611 = vadd.f32 %v2608, %v2610
    %v2612 = vmul.f32 %v2611, 0.5
    %v2613 = vadd.f32 %v2607, %v2612
    %v2614 = vsub.f32 %v2613, 0.5
    %v2615 = vmul.f32 %v2614, %v2502
    %v2616 = vsel %vm1113, %v2615, 0.0
    %2617 = vadd.xlane.f32.xlu0 %v2616
    %v2618 = vpop.xlane.xlu0 %2617
    %v2619 = vrot.slane %v2618, 4
    %v2620 = vadd.f32 %v2618, %v2619
    %v2621 = vrot.slane %v2620, 2
    %v2622 = vadd.f32 %v2620, %v2621
    %v2623 = vrot.slane %v2622, 1
    %v2624 = vadd.f32 %v2622, %v2623
    %v2625 = vmul.f32 %v2624, 0.5
    %v2626 = vadd.f32 %v2589, %v2625
    %s2627 = sld [smem:[#allocation5 + $0x5]]
    %v2628 = vld [vmem:[#allocation2 + $0x20] sm:$0xff]
    %v2629 = vld [vmem:[%s2 + $0x20] sm:$0xff]
    %v2630 = vld [vmem:[#allocation3 + $0x28] sm:$0xff]
    %v2631 = vld [vmem:[#allocation4 + $0x28] sm:$0xff]
    %v2632 = vmul.f32 %v2465, %v2628
    %v2633 = vmul.f32 %v2472, %v2602
    %v2634 = vadd.f32 %v2632, %v2633
    %v2635 = vmul.f32 %v2480, %v2629
    %v2636 = vadd.f32 %v2634, %v2635
    %v2637 = vstv %s2627
    %v2638 = vmul.f32 %v2637, %v2636
    %v2639 = vadd.f32 %v2602, %v2638
    %v2640 = vmul.f32 %v2637, %v2639
    %v2641 = vadd.f32 %v2628, %v2640
    %v2642 = vlog2.pop %v2631
    %v2643 = vmul.f32 %v2642, 0.6931472
    %v2644 = vsub.f32 0.0, %v2643
    %v2645 = vmul.f32 %v2631, %v2631
    %v2646 = vsub.f32 %v2630, %v2641
    %v2647 = vmul.f32 %v2646, %v2646
    %v2648 = vadd.f32 %v2645, %v2647
    %v2649 = vmul.f32 %v2648, 0.5
    %v2650 = vadd.f32 %v2644, %v2649
    %v2651 = vsub.f32 %v2650, 0.5
    %v2652 = vmul.f32 %v2651, %v2502
    %v2653 = vsel %vm1113, %v2652, 0.0
    %2654 = vadd.xlane.f32.xlu0 %v2653
    %v2655 = vpop.xlane.xlu0 %2654
    %v2656 = vrot.slane %v2655, 4
    %v2657 = vadd.f32 %v2655, %v2656
    %v2658 = vrot.slane %v2657, 2
    %v2659 = vadd.f32 %v2657, %v2658
    %v2660 = vrot.slane %v2659, 1
    %v2661 = vadd.f32 %v2659, %v2660
    %v2662 = vmul.f32 %v2661, 0.5
    %v2663 = vadd.f32 %v2626, %v2662
    %s2664 = sld [smem:[#allocation5 + $0x6]]
    %v2665 = vld [vmem:[#allocation2 + $0x28] sm:$0xff]
    %v2666 = vld [vmem:[%s2 + $0x28] sm:$0xff]
    %v2667 = vld [vmem:[#allocation3 + $0x30] sm:$0xff]
    %v2668 = vld [vmem:[#allocation4 + $0x30] sm:$0xff]
    %v2669 = vmul.f32 %v2465, %v2665
    %v2670 = vmul.f32 %v2472, %v2639
    %v2671 = vadd.f32 %v2669, %v2670
    %v2672 = vmul.f32 %v2480, %v2666
    %v2673 = vadd.f32 %v2671, %v2672
    %v2674 = vstv %s2664
    %v2675 = vmul.f32 %v2674, %v2673
    %v2676 = vadd.f32 %v2639, %v2675
    %v2677 = vmul.f32 %v2674, %v2676
    %v2678 = vadd.f32 %v2665, %v2677
    %v2679 = vlog2.pop %v2668
    %v2680 = vmul.f32 %v2679, 0.6931472
    %v2681 = vsub.f32 0.0, %v2680
    %v2682 = vmul.f32 %v2668, %v2668
    %v2683 = vsub.f32 %v2667, %v2678
    %v2684 = vmul.f32 %v2683, %v2683
    %v2685 = vadd.f32 %v2682, %v2684
    %v2686 = vmul.f32 %v2685, 0.5
    %v2687 = vadd.f32 %v2681, %v2686
    %v2688 = vsub.f32 %v2687, 0.5
    %v2689 = vmul.f32 %v2688, %v2502
    %v2690 = vsel %vm1113, %v2689, 0.0
    %2691 = vadd.xlane.f32.xlu0 %v2690
    %v2692 = vpop.xlane.xlu0 %2691
    %v2693 = vrot.slane %v2692, 4
    %v2694 = vadd.f32 %v2692, %v2693
    %v2695 = vrot.slane %v2694, 2
    %v2696 = vadd.f32 %v2694, %v2695
    %v2697 = vrot.slane %v2696, 1
    %v2698 = vadd.f32 %v2696, %v2697
    %v2699 = vmul.f32 %v2698, 0.5
    %v2700 = vadd.f32 %v2663, %v2699
    %s2701 = sld [smem:[#allocation5 + $0x7]]
    %v2702 = vld [vmem:[#allocation3 + $0x38] sm:$0xff]
    %v2703 = vld [vmem:[#allocation4 + $0x38] sm:$0xff]
    %v2704 = vmul.f32 %v2465, %v1144
    %v2705 = vmul.f32 %v2472, %v2676
    %v2706 = vadd.f32 %v2704, %v2705
    %v2707 = vmul.f32 %v2480, %v1151
    %v2708 = vadd.f32 %v2706, %v2707
    %v2709 = vstv %s2701
    %v2710 = vmul.f32 %v2709, %v2708
    %v2711 = vadd.f32 %v2676, %v2710
    %v2712 = vmul.f32 %v2709, %v2711
    %v2713 = vadd.f32 %v1144, %v2712
    %v2714 = vlog2.pop %v2703
    %v2715 = vmul.f32 %v2714, 0.6931472
    %v2716 = vsub.f32 0.0, %v2715
    %v2717 = vmul.f32 %v2703, %v2703
    %v2718 = vsub.f32 %v2702, %v2713
    %v2719 = vmul.f32 %v2718, %v2718
    %v2720 = vadd.f32 %v2717, %v2719
    %v2721 = vmul.f32 %v2720, 0.5
    %v2722 = vadd.f32 %v2716, %v2721
    %v2723 = vsub.f32 %v2722, 0.5
    %v2724 = vmul.f32 %v2723, %v2502
    %v2725 = vsel %vm1113, %v2724, 0.0
    %2726 = vadd.xlane.f32.xlu0 %v2725
    %v2727 = vpop.xlane.xlu0 %2726
    %v2728 = vrot.slane %v2727, 4
    %v2729 = vadd.f32 %v2727, %v2728
    %v2730 = vrot.slane %v2729, 2
    %v2731 = vadd.f32 %v2729, %v2730
    %v2732 = vrot.slane %v2731, 1
    %v2733 = vadd.f32 %v2731, %v2732
    %v2734 = vmul.f32 %v2733, 0.5
    %v2735 = vadd.f32 %v2700, %v2734
    %v2736 = vmul.f32 %v2451, 0.125
    %v2737 = vmul.f32 %v2735, 0.125
    %vm2738 = vcmask 0
    %2739 = vst.msk [vmem:[#allocation9] sm:$0x1] %vm2738, %v2736
    %2740 = vst.msk [vmem:[#allocation11] sm:$0x1] %vm2738, %v2737
    %v2741 = vsub.f32 %v2736, %v2737
    %2742 = vst.msk [vmem:[#allocation8] sm:$0x1] %vm2738, %v2741
    // Predicated region
    $region110: #{newtonian_vae_derivation_forward.3} parent=1 // pred_check
      _
    $region111: #{newtonian_vae_derivation_forward.3} parent=1 // pred_check_branch
      %2744 = sbr.rel (0) target = $region113
    $region112: #{newtonian_vae_derivation_forward.3} parent=1 // pred_region
      %s2746 = ssub.s32 16, 16
      %2747 = vsyncadd [#allocation6], %s2746
      %s2749 = sshll.u32 [#allocation8], 4
      %s2750 = int_to_ptr.vmem [resolvable:$true] %s2749
      %2752 = dma.vmem_to_hbm [thread:$0]  %s2750, 16, %s26, [#allocation6]
    $region113: #{newtonian_vae_derivation_forward.3} parent=1 // pred_fallthru
      _
    // Predicated region
    $region114: #{newtonian_vae_derivation_forward.3} parent=1 // pred_check
      _
    $region115: #{newtonian_vae_derivation_forward.3} parent=1 // pred_check_branch
      %2754 = sbr.rel (0) target = $region117
    $region116: #{newtonian_vae_derivation_forward.3} parent=1 // pred_region
      %s2756 = ssub.s32 16, 16
      %2757 = vsyncadd [#allocation10], %s2756
      %s2759 = sshll.u32 [#allocation9], 4
      %s2760 = int_to_ptr.vmem [resolvable:$true] %s2759
      %2762 = dma.vmem_to_hbm [thread:$0]  %s2760, 16, %s27, [#allocation10]
    $region117: #{newtonian_vae_derivation_forward.3} parent=1 // pred_fallthru
      _
    // Predicated region
    $region118: #{newtonian_vae_derivation_forward.3} parent=1 // pred_check
      _
    $region119: #{newtonian_vae_derivation_forward.3} parent=1 // pred_check_branch
      %2764 = sbr.rel (0) target = $region121
    $region120: #{newtonian_vae_derivation_forward.3} parent=1 // pred_region
      %s2766 = ssub.s32 16, 16
      %2767 = vsyncadd [#allocation10], %s2766
      %s2769 = sshll.u32 [#allocation11], 4
      %s2770 = int_to_ptr.vmem [resolvable:$true] %s2769
      %2772 = dma.vmem_to_hbm [thread:$0]  %s2770, 16, %s28, [#allocation10]
    $region121: #{newtonian_vae_derivation_forward.3} parent=1 // pred_fallthru
      _
    // Predicated region
    $region122: #{newtonian_vae_derivation_forward.3} parent=1 // pred_check
      _
    $region123: #{newtonian_vae_derivation_forward.3} parent=1 // pred_check_branch
      %2774 = sbr.rel (0) target = $region125
    $region124: #{newtonian_vae_derivation_forward.3} parent=1 // pred_region
      %2775 = dma.done [#allocation6], 16
    $region125: #{newtonian_vae_derivation_forward.3} parent=1 // pred_fallthru
      _
    // Predicated region
    $region126: #{newtonian_vae_derivation_forward.3} parent=1 // pred_check
      _
    $region127: #{newtonian_vae_derivation_forward.3} parent=1 // pred_check_branch
      %2777 = sbr.rel (0) target = $region129
    $region128: #{newtonian_vae_derivation_forward.3} parent=1 // pred_region
      %2778 = dma.done [#allocation10], 16
    $region129: #{newtonian_vae_derivation_forward.3} parent=1 // pred_fallthru
      _
    // Predicated region
    $region130: #{newtonian_vae_derivation_forward.3} parent=1 // pred_check
      _
    $region131: #{newtonian_vae_derivation_forward.3} parent=1 // pred_check_branch
      %2780 = sbr.rel (0) target = $region133
    $region132: #{newtonian_vae_derivation_forward.3} parent=1 // pred_region
      %2781 = dma.done [#allocation10], 16
    $region133: #{newtonian_vae_derivation_forward.3} parent=1 // pred_fallthru
      _
    %2782 = vsyncpa [#allocation6], 1
    %2783 = vsyncpa [#allocation10], 1
    %2784 = vsyncpa [#allocation7], 1

</llo_original>
